<compile_context>
chip_gen: v6e
topology: v6e:2x2x1
jax: 0.10.0
libtpu: 0.0.40
codegen_flags: <defaults>
</compile_context>

<pallas_src>
import functools

import numpy as np
import jax
import jax.numpy as jnp
from jax.experimental import pallas as pl
from jax.experimental.pallas import tpu as pltpu

KH = KW = 5  # nn.Conv2d(kernel_size=5)

_ACTS = {
    "relu": lambda v: jnp.maximum(v, 0.0),
    "sigmoid": jax.nn.sigmoid,
    "tanh": jnp.tanh,
}


def _full_band_weights(w_hwio, h_in, w_in):
    """Fold a VALID stride-1 conv into one banded matrix (im2col over H and W).

    Returns W of shape (H*W*IC, OH*OW*OC) with
        W[((oh+kh)*W + (ow+kw))*IC + c, (oh*OW + ow)*OC + oc] = w[kh, kw, c, oc]
    so that, on the flattened NHWC image x_flat[n, (h*W+w)*IC + c]:
        y_flat[n, (oh*OW+ow)*OC + oc] = x_flat[n, :] @ W
    The flat output order equals the next conv's flat input order, so conv1's
    output feeds conv2 with zero relayout.
    """
    kh_sz, kw_sz, ic, oc = w_hwio.shape
    oh, ow = h_in - kh_sz + 1, w_in - kw_sz + 1
    band = np.zeros((h_in * w_in * ic, oh * ow * oc), np.float32)
    w_np = np.asarray(w_hwio, np.float32)
    for kh in range(kh_sz):
        for kw in range(kw_sz):
            for r in range(oh):
                for s in range(ow):
                    row = ((r + kh) * w_in + (s + kw)) * ic
                    col = (r * ow + s) * oc
                    band[row:row + ic, col:col + oc] = w_np[kh, kw]
    return jnp.asarray(band, jnp.bfloat16)


def _pick_batch_tile(n, cap=256):
    """Images per grid step.

    Block shape (bt, K) needs bt % 8 == 0 or bt == n (full dim).  Prefer large
    multiple-of-8 divisor tiles (<= cap) to amortize the ~0.35us per-step grid
    overhead, and prefer >= 2 grid steps so v7x megacore can shard the batch
    axis; otherwise run the whole batch in one step (always a valid block).
    """
    cands = [bt for bt in range(8, min(n, cap) + 1, 8) if n % bt == 0]
    multi = [bt for bt in cands if n // bt >= 2]
    if multi:
        return max(multi)
    if cands:
        return max(cands)
    return n


def _encoder_kernel(x_ref, wb1_ref, b1_ref, wb2_ref, b2_ref, o_ref, *, act):
    """Fused conv1+act+conv2+act for one batch tile (batch folded into M).

    x_ref  : (B_tile, H*W*C_in)        bf16   flattened NHWC images
    wb1_ref: (H*W*C_in, OH1*OW1*6)     bf16   banded conv1 weights
    b1_ref : (1, OH1*OW1*6)            f32    conv1 bias tiled over positions
    wb2_ref: (OH1*OW1*6, OH2*OW2*16)   bf16   banded conv2 weights
    b2_ref : (1, OH2*OW2*16)           f32    conv2 bias tiled over positions
    o_ref  : (B_tile, OH2*OW2*16)      bf16   lane-dense output
    """
    # conv1: one MXU matmul, M = batch tile, f32 accumulation.
    h1 = jnp.dot(x_ref[...], wb1_ref[...], preferred_element_type=jnp.float32)
    h1 = act(h1 + b1_ref[...]).astype(jnp.bfloat16)       # stays on-chip, never HBM
    # conv2: one MXU matmul on the on-chip activation.
    h2 = jnp.dot(h1, wb2_ref[...], preferred_element_type=jnp.float32)
    o_ref[...] = act(h2 + b2_ref[...]).astype(o_ref.dtype)


def _encoder_forward(x_nchw, wb1, b1t, wb2, b2t, act_name, h, w, c_in):
    n = x_nchw.shape[0]
    oh1, ow1 = h - KH + 1, w - KW + 1
    oh2, ow2 = oh1 - KH + 1, ow1 - KW + 1
    k1 = h * w * c_in
    n1 = oh1 * ow1 * 6
    n2 = oh2 * ow2 * 16

    # NCHW -> flattened NHWC, bf16 for the MXU (one fused XLA layout op).
    x = jnp.transpose(x_nchw, (0, 2, 3, 1)).reshape(n, k1).astype(jnp.bfloat16)

    bt = _pick_batch_tile(n)
    kernel = functools.partial(_encoder_kernel, act=_ACTS[act_name])
    out = pl.pallas_call(
        kernel,
        out_shape=jax.ShapeDtypeStruct((n, n2), jnp.bfloat16),
        grid_spec=pltpu.PrefetchScalarGridSpec(
            num_scalar_prefetch=0,
            grid=(n // bt,),
            in_specs=[
                pl.BlockSpec((bt, k1), lambda i: (i, 0)),
                # Grid-invariant weight/bias blocks (constant index_map): the
                # pipeline keeps the same block resident instead of re-DMA'ing.
                pl.BlockSpec((k1, n1), lambda i: (0, 0)),
                pl.BlockSpec((1, n1), lambda i: (0, 0)),
                pl.BlockSpec((n1, n2), lambda i: (0, 0)),
                pl.BlockSpec((1, n2), lambda i: (0, 0)),
            ],
            out_specs=pl.BlockSpec((bt, n2), lambda i: (i, 0)),
        ),
        compiler_params=pltpu.CompilerParams(
            dimension_semantics=("parallel",)),
    )(x, wb1, b1t, wb2, b2t)

    # Flat lane-dense (N, OH2*OW2*16) -> NCHW f32 to match the PyTorch module.
    return jnp.transpose(out.reshape(n, oh2, ow2, 16),
                         (0, 3, 1, 2)).astype(jnp.float32)


class EncoderPallas:
    """Pallas port of pythor Encoder: Conv2d(C,6,5)->act->Conv2d(6,16,5)->act."""

    def __init__(self, input_shape, key, activation="relu"):
        c_in, h, w = input_shape
        self.input_shape = input_shape
        self.activation = activation
        oh1, ow1 = h - KH + 1, w - KW + 1
        oh2, ow2 = oh1 - KH + 1, ow1 - KW + 1

        k1, k2, k3, k4 = jax.random.split(key, 4)
        # Deterministic init mimicking PyTorch's kaiming-uniform bound 1/sqrt(fan_in).
        fan1 = c_in * KH * KW
        fan2 = 6 * KH * KW
        b1lim = 1.0 / float(np.sqrt(fan1))
        b2lim = 1.0 / float(np.sqrt(fan2))
        w1_oihw = jax.random.uniform(k1, (6, c_in, KH, KW), jnp.float32, -b1lim, b1lim)
        w2_oihw = jax.random.uniform(k2, (16, 6, KH, KW), jnp.float32, -b2lim, b2lim)
        self.w1_hwio = jnp.transpose(w1_oihw, (2, 3, 1, 0))
        self.w2_hwio = jnp.transpose(w2_oihw, (2, 3, 1, 0))
        self.b1 = jax.random.uniform(k3, (6,), jnp.float32, -b1lim, b1lim)
        self.b2 = jax.random.uniform(k4, (16,), jnp.float32, -b2lim, b2lim)

        # Im2col-folded ("dual banded") bf16 weights: one matmul per conv.
        self.wb1 = _full_band_weights(self.w1_hwio, h, w)        # (H*W*C,    OH1*OW1*6)
        self.wb2 = _full_band_weights(self.w2_hwio, oh1, ow1)    # (OH1*OW1*6, OH2*OW2*16)
        # Biases tiled to the flat (pos, channel) output layout, kept in f32.
        self.b1t = jnp.tile(self.b1, oh1 * ow1).reshape(1, -1).astype(jnp.float32)
        self.b2t = jnp.tile(self.b2, oh2 * ow2).reshape(1, -1).astype(jnp.float32)

    def __call__(self, x_nchw):
        c_in, h, w = self.input_shape
        assert x_nchw.shape[1:] == (c_in, h, w), x_nchw.shape
        return _encoder_forward(x_nchw.astype(jnp.float32), self.wb1, self.b1t,
                                self.wb2, self.b2t, self.activation, h, w, c_in)

    def feature_size(self):
        _, h, w = self.input_shape
        return 16 * (h - 2 * (KH - 1)) * (w - 2 * (KW - 1))


if __name__ == "__main__":
    key = jax.random.PRNGKey(0)
    kx, kp = jax.random.split(key)

    input_shape = (3, 16, 16)          # (C, H, W) like the PyTorch module
    batch = 2
    x = jax.random.normal(kx, (batch,) + input_shape, dtype=jnp.float32)

    enc = EncoderPallas(input_shape, kp)
    out = jax.block_until_ready(enc(x))

    # Sanity: Conv2d(k=5) twice with no padding -> spatial shrinks by 8.
    assert out.shape == (batch, 16, input_shape[1] - 8, input_shape[2] - 8), out.shape
    assert enc.feature_size() == 16 * 8 * 8

    # Cross-check against a plain-JAX reference mirroring the kernel's numerics
    # (bf16 matmul inputs, f32 accumulation, f32 bias + ReLU, bf16 output).
    def ref_layer(x_nchw, w_hwio, b):
        w_oihw = jnp.transpose(w_hwio, (3, 2, 0, 1))
        y = jax.lax.conv_general_dilated(
            x_nchw.astype(jnp.bfloat16), w_oihw.astype(jnp.bfloat16),
            window_strides=(1, 1), padding="VALID",
            dimension_numbers=("NCHW", "OIHW", "NCHW"),
            preferred_element_type=jnp.float32)
        return jnp.maximum(y + b.reshape(1, -1, 1, 1), 0.0)

    ref = ref_layer(ref_layer(x, enc.w1_hwio, enc.b1), enc.w2_hwio, enc.b2)
    ref = ref.astype(jnp.bfloat16).astype(jnp.float32)   # kernel output is bf16
    max_err = float(jnp.max(jnp.abs(out - ref)))
    assert jnp.allclose(out, ref, atol=2e-2, rtol=2e-2), max_err

    print("KERNEL_OK")
</pallas_src>

<mosaic_0001>
module attributes {stable_mosaic.version = 11 : i64} {
  func.func @_encoder_kernel(%arg0: i32, %arg1: memref<2x768xbf16, #tpu.memory_space<vmem>>, %arg2: memref<768x864xbf16, #tpu.memory_space<vmem>>, %arg3: memref<1x864xf32, #tpu.memory_space<vmem>>, %arg4: memref<864x1024xbf16, #tpu.memory_space<vmem>>, %arg5: memref<1x1024xf32, #tpu.memory_space<vmem>>, %arg6: memref<2x1024xbf16, #tpu.memory_space<vmem>>) attributes {dimension_semantics = [#tpu.dimension_semantics<parallel>], iteration_bounds = array<i64: 1>, scalar_prefetch = 0 : i64, scratch_operands = 0 : i64, tpu.core_type = #tpu.core_type<tc>, window_params = [{transform_indices = @transform_0, window_bounds = array<i64: 2, 768>}, {pipeline_mode = #tpu.pipeline_mode<synchronous>, transform_indices = @transform_1, window_bounds = array<i64: 768, 864>}, {pipeline_mode = #tpu.pipeline_mode<synchronous>, transform_indices = @transform_2, window_bounds = array<i64: 1, 864>}, {pipeline_mode = #tpu.pipeline_mode<synchronous>, transform_indices = @transform_3, window_bounds = array<i64: 864, 1024>}, {pipeline_mode = #tpu.pipeline_mode<synchronous>, transform_indices = @transform_4, window_bounds = array<i64: 1, 1024>}, {transform_indices = @transform_5, window_bounds = array<i64: 2, 1024>}]} {
    %c0 = arith.constant 0 : index
    %c0_0 = arith.constant 0 : index
    %0 = vector.load %arg1[%c0, %c0_0] : memref<2x768xbf16, #tpu.memory_space<vmem>>, vector<2x768xbf16>
    %c0_1 = arith.constant 0 : index
    %c0_2 = arith.constant 0 : index
    %1 = vector.load %arg2[%c0_1, %c0_2] : memref<768x864xbf16, #tpu.memory_space<vmem>>, vector<768x864xbf16>
    %cst = arith.constant dense<0.000000e+00> : vector<2x864xf32>
    %2 = tpu.matmul %0, %1, %cst {dimension_numbers = #tpu.dot_dimension_numbers<[1], [0], [0], [1], [0, 0, 1, 1], [], []>} : vector<2x768xbf16>, vector<768x864xbf16>, vector<2x864xf32> -> vector<2x864xf32>
    %c0_3 = arith.constant 0 : index
    %c0_4 = arith.constant 0 : index
    %3 = vector.load %arg3[%c0_3, %c0_4] : memref<1x864xf32, #tpu.memory_space<vmem>>, vector<1x864xf32>
    %4 = vector.broadcast %3 : vector<1x864xf32> to vector<2x864xf32>
    %5 = arith.addf %2, %4 : vector<2x864xf32>
    %cst_5 = arith.constant 0.000000e+00 : f32
    %6 = vector.broadcast %cst_5 : f32 to vector<2x864xf32>
    %7 = arith.maximumf %5, %6 : vector<2x864xf32>
    %8 = arith.truncf %7 : vector<2x864xf32> to vector<2x864xbf16>
    %c0_6 = arith.constant 0 : index
    %c0_7 = arith.constant 0 : index
    %9 = vector.load %arg4[%c0_6, %c0_7] : memref<864x1024xbf16, #tpu.memory_space<vmem>>, vector<864x1024xbf16>
    %cst_8 = arith.constant dense<0.000000e+00> : vector<2x1024xf32>
    %10 = tpu.matmul %8, %9, %cst_8 {dimension_numbers = #tpu.dot_dimension_numbers<[1], [0], [0], [1], [0, 0, 1, 1], [], []>} : vector<2x864xbf16>, vector<864x1024xbf16>, vector<2x1024xf32> -> vector<2x1024xf32>
    %c0_9 = arith.constant 0 : index
    %c0_10 = arith.constant 0 : index
    %11 = vector.load %arg5[%c0_9, %c0_10] : memref<1x1024xf32, #tpu.memory_space<vmem>>, vector<1x1024xf32>
    %12 = vector.broadcast %11 : vector<1x1024xf32> to vector<2x1024xf32>
    %13 = arith.addf %10, %12 : vector<2x1024xf32>
    %cst_11 = arith.constant 0.000000e+00 : f32
    %14 = vector.broadcast %cst_11 : f32 to vector<2x1024xf32>
    %15 = arith.maximumf %13, %14 : vector<2x1024xf32>
    %16 = arith.truncf %15 : vector<2x1024xf32> to vector<2x1024xbf16>
    %c0_12 = arith.constant 0 : index
    %c0_13 = arith.constant 0 : index
    %17 = vector.load %arg6[%c0_12, %c0_13] : memref<2x1024xbf16, #tpu.memory_space<vmem>>, vector<2x1024xbf16>
    tpu.vector_store %arg6[%c0_12, %c0_13], %16 {strides = array<i32>} : memref<2x1024xbf16, #tpu.memory_space<vmem>>, vector<2x1024xbf16>,
    return
  }
  func.func @transform_0(%arg0: i32) -> (i32, i32) {
    %c0_i32 = arith.constant 0 : i32
    %c0_i32_0 = arith.constant 0 : i32
    return %arg0, %c0_i32 : i32, i32
  }
  func.func @transform_1(%arg0: i32) -> (i32, i32) {
    %c0_i32 = arith.constant 0 : i32
    %c0_i32_0 = arith.constant 0 : i32
    %c0_i32_1 = arith.constant 0 : i32
    return %c0_i32, %c0_i32_0 : i32, i32
  }
  func.func @transform_2(%arg0: i32) -> (i32, i32) {
    %c0_i32 = arith.constant 0 : i32
    %c0_i32_0 = arith.constant 0 : i32
    %c0_i32_1 = arith.constant 0 : i32
    return %c0_i32, %c0_i32_0 : i32, i32
  }
  func.func @transform_3(%arg0: i32) -> (i32, i32) {
    %c0_i32 = arith.constant 0 : i32
    %c0_i32_0 = arith.constant 0 : i32
    %c0_i32_1 = arith.constant 0 : i32
    return %c0_i32, %c0_i32_0 : i32, i32
  }
  func.func @transform_4(%arg0: i32) -> (i32, i32) {
    %c0_i32 = arith.constant 0 : i32
    %c0_i32_0 = arith.constant 0 : i32
    %c0_i32_1 = arith.constant 0 : i32
    return %c0_i32, %c0_i32_0 : i32, i32
  }
  func.func @transform_5(%arg0: i32) -> (i32, i32) {
    %c0_i32 = arith.constant 0 : i32
    %c0_i32_0 = arith.constant 0 : i32
    return %arg0, %c0_i32 : i32, i32
  }
}

</mosaic_0001>

<llo_original>
// kernel: tpu_custom_call.1
$region0: #{tpu_custom_call.1}
  #allocation0 [shape = 'u32[]', space=smem, size = 0x4, offset = 0x4, fixed_abs, tag = 'smem constant byte address 0x4 - core index']
  #allocation1 [shape = 'u32[144,128]{1,0:T(1,128)}', space=vmem, size = 0x12000, scoped, tag = 'internal scratch']
  %s0 = inlined_call_operand.vmem [shape: bf16[2,768], index: 0, kind: input, shape index: {}]
  %s1 = inlined_call_operand.vmem [shape: bf16[768,864], index: 1, kind: input, shape index: {}]
  %s2 = inlined_call_operand.vmem [shape: f32[1,864], index: 2, kind: input, shape index: {}]
  %s3 = inlined_call_operand.vmem [shape: bf16[864,1024], index: 3, kind: input, shape index: {}]
  %s4 = inlined_call_operand.vmem [shape: f32[1,1024], index: 4, kind: input, shape index: {}]
  %s5 = inlined_call_operand.hbm [shape: bf16[2,1024], index: 5, kind: output, shape index: {}]
  %s6 = sld [smem:[#allocation0]]
  $region30: #{tpu_custom_call.1} parent=0
    _
  %s8 = ssub.s32 1, %s6
  %s9 = scalar_select 0, %s8, %s6
  $region1: #{tpu_custom_call.1} parent=0
    #allocation2 [shape = 'u8[4096]{0}', space=vmem, size = 0x1000, scoped, tag = 'output window, operand 0, single buffered']
    #allocation3 [shape = 's32[1]{0}', space=sflag, size = 0x4, scoped, tag = 'scoped memory for tpu_custom_call.1']
    %10 = vsyncpa [#allocation3], 0
    // Predicated region
    $region2: #{tpu_custom_call.1} parent=1 // pred_check
      _
    $region3: #{tpu_custom_call.1} parent=1 // pred_check_branch
      %12 = sbr.rel (0) target = $region5
    $region4: #{tpu_custom_call.1} parent=1 // pred_region
      _
    $region5: #{tpu_custom_call.1} parent=1 // pred_fallthru
      _
    // Predicated region
    $region6: #{tpu_custom_call.1} parent=1 // pred_check
      _
    $region7: #{tpu_custom_call.1} parent=1 // pred_check_branch
      %14 = sbr.rel (0) target = $region9
    $region8: #{tpu_custom_call.1} parent=1 // pred_region
      _
    $region9: #{tpu_custom_call.1} parent=1 // pred_fallthru
      _
    // Predicated region
    $region10: #{tpu_custom_call.1} parent=1 // pred_check
      _
    $region11: #{tpu_custom_call.1} parent=1 // pred_check_branch
      %16 = sbr.rel (0) target = $region13
    $region12: #{tpu_custom_call.1} parent=1 // pred_region
      _
    $region13: #{tpu_custom_call.1} parent=1 // pred_fallthru
      _
    // Predicated region
    $region14: #{tpu_custom_call.1} parent=1 // pred_check
      _
    $region15: #{tpu_custom_call.1} parent=1 // pred_check_branch
      %18 = sbr.rel (0) target = $region17
    $region16: #{tpu_custom_call.1} parent=1 // pred_region
      _
    $region17: #{tpu_custom_call.1} parent=1 // pred_fallthru
      _
    // Predicated region
    $region18: #{tpu_custom_call.1} parent=1 // pred_check
      _
    $region19: #{tpu_custom_call.1} parent=1 // pred_check_branch
      %20 = sbr.rel (0) target = $region21
    $region20: #{tpu_custom_call.1} parent=1 // pred_region
      _
    $region21: #{tpu_custom_call.1} parent=1 // pred_fallthru
      _
    %v22 = vld [vmem:[%s0] sm:$0x3f]
    %v23 = vld [vmem:[%s1] sm:$0xff]
    %v24 = vld [vmem:[%s1 + $0x8] sm:$0xff]
    %v25 = vld [vmem:[%s1 + $0x10] sm:$0xff]
    %v26 = vld [vmem:[%s1 + $0x18] sm:$0xf]
    %v27 = vld [vmem:[%s1 + $0x1c] sm:$0xff]
    %v28 = vld [vmem:[%s1 + $0x24] sm:$0xff]
    %v29 = vld [vmem:[%s1 + $0x2c] sm:$0xff]
    %v30 = vld [vmem:[%s1 + $0x34] sm:$0xf]
    %v31 = vld [vmem:[%s1 + $0x38] sm:$0xff]
    %v32 = vld [vmem:[%s1 + $0x40] sm:$0xff]
    %v33 = vld [vmem:[%s1 + $0x48] sm:$0xff]
    %v34 = vld [vmem:[%s1 + $0x50] sm:$0xf]
    %v35 = vld [vmem:[%s1 + $0x54] sm:$0xff]
    %v36 = vld [vmem:[%s1 + $0x5c] sm:$0xff]
    %v37 = vld [vmem:[%s1 + $0x64] sm:$0xff]
    %v38 = vld [vmem:[%s1 + $0x6c] sm:$0xf]
    %v39 = vld [vmem:[%s1 + $0x70] sm:$0xff]
    %v40 = vld [vmem:[%s1 + $0x78] sm:$0xff]
    %v41 = vld [vmem:[%s1 + $0x80] sm:$0xff]
    %v42 = vld [vmem:[%s1 + $0x88] sm:$0xf]
    %v43 = vld [vmem:[%s1 + $0x8c] sm:$0xff]
    %v44 = vld [vmem:[%s1 + $0x94] sm:$0xff]
    %v45 = vld [vmem:[%s1 + $0x9c] sm:$0xff]
    %v46 = vld [vmem:[%s1 + $0xa4] sm:$0xf]
    %v47 = vld [vmem:[%s1 + $0xa8] sm:$0xff]
    %v48 = vld [vmem:[%s1 + $0xb0] sm:$0xff]
    %v49 = vld [vmem:[%s1 + $0xb8] sm:$0xff]
    %v50 = vld [vmem:[%s1 + $0xc0] sm:$0xf]
    %v51 = vld [vmem:[%s1 + $0xc4] sm:$0xff]
    %v52 = vld [vmem:[%s1 + $0xcc] sm:$0xff]
    %v53 = vld [vmem:[%s1 + $0xd4] sm:$0xff]
    %v54 = vld [vmem:[%s1 + $0xdc] sm:$0xf]
    %v55 = vld [vmem:[%s1 + $0xe0] sm:$0xff]
    %v56 = vld [vmem:[%s1 + $0xe8] sm:$0xff]
    %v57 = vld [vmem:[%s1 + $0xf0] sm:$0xff]
    %v58 = vld [vmem:[%s1 + $0xf8] sm:$0xf]
    %v59 = vld [vmem:[%s1 + $0xfc] sm:$0xff]
    %v60 = vld [vmem:[%s1 + $0x104] sm:$0xff]
    %v61 = vld [vmem:[%s1 + $0x10c] sm:$0xff]
    %v62 = vld [vmem:[%s1 + $0x114] sm:$0xf]
    %v63 = vld [vmem:[%s1 + $0x118] sm:$0xff]
    %v64 = vld [vmem:[%s1 + $0x120] sm:$0xff]
    %v65 = vld [vmem:[%s1 + $0x128] sm:$0xff]
    %v66 = vld [vmem:[%s1 + $0x130] sm:$0xf]
    %v67 = vld [vmem:[%s1 + $0x134] sm:$0xff]
    %v68 = vld [vmem:[%s1 + $0x13c] sm:$0xff]
    %v69 = vld [vmem:[%s1 + $0x144] sm:$0xff]
    %v70 = vld [vmem:[%s1 + $0x14c] sm:$0xf]
    %v71 = vld [vmem:[%s1 + $0x150] sm:$0xff]
    %v72 = vld [vmem:[%s1 + $0x158] sm:$0xff]
    %v73 = vld [vmem:[%s1 + $0x160] sm:$0xff]
    %v74 = vld [vmem:[%s1 + $0x168] sm:$0xf]
    %v75 = vld [vmem:[%s1 + $0x16c] sm:$0xff]
    %v76 = vld [vmem:[%s1 + $0x174] sm:$0xff]
    %v77 = vld [vmem:[%s1 + $0x17c] sm:$0xff]
    %v78 = vld [vmem:[%s1 + $0x184] sm:$0xf]
    %v79 = vld [vmem:[%s1 + $0x188] sm:$0xff]
    %v80 = vld [vmem:[%s1 + $0x190] sm:$0xff]
    %v81 = vld [vmem:[%s1 + $0x198] sm:$0xff]
    %v82 = vld [vmem:[%s1 + $0x1a0] sm:$0xf]
    %v83 = vld [vmem:[%s1 + $0x1a4] sm:$0xff]
    %v84 = vld [vmem:[%s1 + $0x1ac] sm:$0xff]
    %v85 = vld [vmem:[%s1 + $0x1b4] sm:$0xff]
    %v86 = vld [vmem:[%s1 + $0x1bc] sm:$0xf]
    %v87 = vld [vmem:[%s1 + $0x1c0] sm:$0xff]
    %v88 = vld [vmem:[%s1 + $0x1c8] sm:$0xff]
    %v89 = vld [vmem:[%s1 + $0x1d0] sm:$0xff]
    %v90 = vld [vmem:[%s1 + $0x1d8] sm:$0xf]
    %v91 = vld [vmem:[%s1 + $0x1dc] sm:$0xff]
    %v92 = vld [vmem:[%s1 + $0x1e4] sm:$0xff]
    %v93 = vld [vmem:[%s1 + $0x1ec] sm:$0xff]
    %v94 = vld [vmem:[%s1 + $0x1f4] sm:$0xf]
    %v95 = vld [vmem:[%s1 + $0x1f8] sm:$0xff]
    %v96 = vld [vmem:[%s1 + $0x200] sm:$0xff]
    %v97 = vld [vmem:[%s1 + $0x208] sm:$0xff]
    %v98 = vld [vmem:[%s1 + $0x210] sm:$0xf]
    %v99 = vld [vmem:[%s1 + $0x214] sm:$0xff]
    %v100 = vld [vmem:[%s1 + $0x21c] sm:$0xff]
    %v101 = vld [vmem:[%s1 + $0x224] sm:$0xff]
    %v102 = vld [vmem:[%s1 + $0x22c] sm:$0xf]
    %v103 = vld [vmem:[%s1 + $0x230] sm:$0xff]
    %v104 = vld [vmem:[%s1 + $0x238] sm:$0xff]
    %v105 = vld [vmem:[%s1 + $0x240] sm:$0xff]
    %v106 = vld [vmem:[%s1 + $0x248] sm:$0xf]
    %v107 = vld [vmem:[%s1 + $0x24c] sm:$0xff]
    %v108 = vld [vmem:[%s1 + $0x254] sm:$0xff]
    %v109 = vld [vmem:[%s1 + $0x25c] sm:$0xff]
    %v110 = vld [vmem:[%s1 + $0x264] sm:$0xf]
    %v111 = vld [vmem:[%s1 + $0x268] sm:$0xff]
    %v112 = vld [vmem:[%s1 + $0x270] sm:$0xff]
    %v113 = vld [vmem:[%s1 + $0x278] sm:$0xff]
    %v114 = vld [vmem:[%s1 + $0x280] sm:$0xf]
    %v115 = vld [vmem:[%s1 + $0x284] sm:$0xff]
    %v116 = vld [vmem:[%s1 + $0x28c] sm:$0xff]
    %v117 = vld [vmem:[%s1 + $0x294] sm:$0xff]
    %v118 = vld [vmem:[%s1 + $0x29c] sm:$0xf]
    %v119 = vld [vmem:[%s1 + $0x2a0] sm:$0xff]
    %v120 = vld [vmem:[%s1 + $0x2a8] sm:$0xff]
    %v121 = vld [vmem:[%s1 + $0x2b0] sm:$0xff]
    %v122 = vld [vmem:[%s1 + $0x2b8] sm:$0xf]
    %v123 = vld [vmem:[%s1 + $0x2bc] sm:$0xff]
    %v124 = vld [vmem:[%s1 + $0x2c4] sm:$0xff]
    %v125 = vld [vmem:[%s1 + $0x2cc] sm:$0xff]
    %v126 = vld [vmem:[%s1 + $0x2d4] sm:$0xf]
    %v127 = vld [vmem:[%s1 + $0x2d8] sm:$0xff]
    %v128 = vld [vmem:[%s1 + $0x2e0] sm:$0xff]
    %v129 = vld [vmem:[%s1 + $0x2e8] sm:$0xff]
    %v130 = vld [vmem:[%s1 + $0x2f0] sm:$0xf]
    %v131 = vld [vmem:[%s1 + $0x2f4] sm:$0xff]
    %v132 = vld [vmem:[%s1 + $0x2fc] sm:$0xff]
    %v133 = vld [vmem:[%s1 + $0x304] sm:$0xff]
    %v134 = vld [vmem:[%s1 + $0x30c] sm:$0xf]
    %v135 = vld [vmem:[%s1 + $0x310] sm:$0xff]
    %v136 = vld [vmem:[%s1 + $0x318] sm:$0xff]
    %v137 = vld [vmem:[%s1 + $0x320] sm:$0xff]
    %v138 = vld [vmem:[%s1 + $0x328] sm:$0xf]
    %v139 = vld [vmem:[%s1 + $0x32c] sm:$0xff]
    %v140 = vld [vmem:[%s1 + $0x334] sm:$0xff]
    %v141 = vld [vmem:[%s1 + $0x33c] sm:$0xff]
    %v142 = vld [vmem:[%s1 + $0x344] sm:$0xf]
    %v143 = vld [vmem:[%s1 + $0x348] sm:$0xff]
    %v144 = vld [vmem:[%s1 + $0x350] sm:$0xff]
    %v145 = vld [vmem:[%s1 + $0x358] sm:$0xff]
    %v146 = vld [vmem:[%s1 + $0x360] sm:$0xf]
    %v147 = vld [vmem:[%s1 + $0x364] sm:$0xff]
    %v148 = vld [vmem:[%s1 + $0x36c] sm:$0xff]
    %v149 = vld [vmem:[%s1 + $0x374] sm:$0xff]
    %v150 = vld [vmem:[%s1 + $0x37c] sm:$0xf]
    %v151 = vld [vmem:[%s1 + $0x380] sm:$0xff]
    %v152 = vld [vmem:[%s1 + $0x388] sm:$0xff]
    %v153 = vld [vmem:[%s1 + $0x390] sm:$0xff]
    %v154 = vld [vmem:[%s1 + $0x398] sm:$0xf]
    %v155 = vld [vmem:[%s1 + $0x39c] sm:$0xff]
    %v156 = vld [vmem:[%s1 + $0x3a4] sm:$0xff]
    %v157 = vld [vmem:[%s1 + $0x3ac] sm:$0xff]
    %v158 = vld [vmem:[%s1 + $0x3b4] sm:$0xf]
    %v159 = vld [vmem:[%s1 + $0x3b8] sm:$0xff]
    %v160 = vld [vmem:[%s1 + $0x3c0] sm:$0xff]
    %v161 = vld [vmem:[%s1 + $0x3c8] sm:$0xff]
    %v162 = vld [vmem:[%s1 + $0x3d0] sm:$0xf]
    %v163 = vld [vmem:[%s1 + $0x3d4] sm:$0xff]
    %v164 = vld [vmem:[%s1 + $0x3dc] sm:$0xff]
    %v165 = vld [vmem:[%s1 + $0x3e4] sm:$0xff]
    %v166 = vld [vmem:[%s1 + $0x3ec] sm:$0xf]
    %v167 = vld [vmem:[%s1 + $0x3f0] sm:$0xff]
    %v168 = vld [vmem:[%s1 + $0x3f8] sm:$0xff]
    %v169 = vld [vmem:[%s1 + $0x400] sm:$0xff]
    %v170 = vld [vmem:[%s1 + $0x408] sm:$0xf]
    %v171 = vld [vmem:[%s1 + $0x40c] sm:$0xff]
    %v172 = vld [vmem:[%s1 + $0x414] sm:$0xff]
    %v173 = vld [vmem:[%s1 + $0x41c] sm:$0xff]
    %v174 = vld [vmem:[%s1 + $0x424] sm:$0xf]
    %v175 = vld [vmem:[%s1 + $0x428] sm:$0xff]
    %v176 = vld [vmem:[%s1 + $0x430] sm:$0xff]
    %v177 = vld [vmem:[%s1 + $0x438] sm:$0xff]
    %v178 = vld [vmem:[%s1 + $0x440] sm:$0xf]
    %v179 = vld [vmem:[%s1 + $0x444] sm:$0xff]
    %v180 = vld [vmem:[%s1 + $0x44c] sm:$0xff]
    %v181 = vld [vmem:[%s1 + $0x454] sm:$0xff]
    %v182 = vld [vmem:[%s1 + $0x45c] sm:$0xf]
    %v183 = vld [vmem:[%s1 + $0x460] sm:$0xff]
    %v184 = vld [vmem:[%s1 + $0x468] sm:$0xff]
    %v185 = vld [vmem:[%s1 + $0x470] sm:$0xff]
    %v186 = vld [vmem:[%s1 + $0x478] sm:$0xf]
    %v187 = vld [vmem:[%s1 + $0x47c] sm:$0xff]
    %v188 = vld [vmem:[%s1 + $0x484] sm:$0xff]
    %v189 = vld [vmem:[%s1 + $0x48c] sm:$0xff]
    %v190 = vld [vmem:[%s1 + $0x494] sm:$0xf]
    %v191 = vld [vmem:[%s1 + $0x498] sm:$0xff]
    %v192 = vld [vmem:[%s1 + $0x4a0] sm:$0xff]
    %v193 = vld [vmem:[%s1 + $0x4a8] sm:$0xff]
    %v194 = vld [vmem:[%s1 + $0x4b0] sm:$0xf]
    %v195 = vld [vmem:[%s1 + $0x4b4] sm:$0xff]
    %v196 = vld [vmem:[%s1 + $0x4bc] sm:$0xff]
    %v197 = vld [vmem:[%s1 + $0x4c4] sm:$0xff]
    %v198 = vld [vmem:[%s1 + $0x4cc] sm:$0xf]
    %v199 = vld [vmem:[%s1 + $0x4d0] sm:$0xff]
    %v200 = vld [vmem:[%s1 + $0x4d8] sm:$0xff]
    %v201 = vld [vmem:[%s1 + $0x4e0] sm:$0xff]
    %v202 = vld [vmem:[%s1 + $0x4e8] sm:$0xf]
    %v203 = vld [vmem:[%s1 + $0x4ec] sm:$0xff]
    %v204 = vld [vmem:[%s1 + $0x4f4] sm:$0xff]
    %v205 = vld [vmem:[%s1 + $0x4fc] sm:$0xff]
    %v206 = vld [vmem:[%s1 + $0x504] sm:$0xf]
    %v207 = vld [vmem:[%s1 + $0x508] sm:$0xff]
    %v208 = vld [vmem:[%s1 + $0x510] sm:$0xff]
    %v209 = vld [vmem:[%s1 + $0x518] sm:$0xff]
    %v210 = vld [vmem:[%s1 + $0x520] sm:$0xf]
    %v211 = vld [vmem:[%s1 + $0x524] sm:$0xff]
    %v212 = vld [vmem:[%s1 + $0x52c] sm:$0xff]
    %v213 = vld [vmem:[%s1 + $0x534] sm:$0xff]
    %v214 = vld [vmem:[%s1 + $0x53c] sm:$0xf]
    %v215 = vld [vmem:[%s1 + $0x540] sm:$0xff]
    %v216 = vld [vmem:[%s1 + $0x548] sm:$0xff]
    %v217 = vld [vmem:[%s1 + $0x550] sm:$0xff]
    %v218 = vld [vmem:[%s1 + $0x558] sm:$0xf]
    %v219 = vld [vmem:[%s1 + $0x55c] sm:$0xff]
    %v220 = vld [vmem:[%s1 + $0x564] sm:$0xff]
    %v221 = vld [vmem:[%s1 + $0x56c] sm:$0xff]
    %v222 = vld [vmem:[%s1 + $0x574] sm:$0xf]
    %v223 = vld [vmem:[%s1 + $0x578] sm:$0xff]
    %v224 = vld [vmem:[%s1 + $0x580] sm:$0xff]
    %v225 = vld [vmem:[%s1 + $0x588] sm:$0xff]
    %v226 = vld [vmem:[%s1 + $0x590] sm:$0xf]
    %v227 = vld [vmem:[%s1 + $0x594] sm:$0xff]
    %v228 = vld [vmem:[%s1 + $0x59c] sm:$0xff]
    %v229 = vld [vmem:[%s1 + $0x5a4] sm:$0xff]
    %v230 = vld [vmem:[%s1 + $0x5ac] sm:$0xf]
    %v231 = vld [vmem:[%s1 + $0x5b0] sm:$0xff]
    %v232 = vld [vmem:[%s1 + $0x5b8] sm:$0xff]
    %v233 = vld [vmem:[%s1 + $0x5c0] sm:$0xff]
    %v234 = vld [vmem:[%s1 + $0x5c8] sm:$0xf]
    %v235 = vld [vmem:[%s1 + $0x5cc] sm:$0xff]
    %v236 = vld [vmem:[%s1 + $0x5d4] sm:$0xff]
    %v237 = vld [vmem:[%s1 + $0x5dc] sm:$0xff]
    %v238 = vld [vmem:[%s1 + $0x5e4] sm:$0xf]
    %v239 = vld [vmem:[%s1 + $0x5e8] sm:$0xff]
    %v240 = vld [vmem:[%s1 + $0x5f0] sm:$0xff]
    %v241 = vld [vmem:[%s1 + $0x5f8] sm:$0xff]
    %v242 = vld [vmem:[%s1 + $0x600] sm:$0xf]
    %v243 = vld [vmem:[%s1 + $0x604] sm:$0xff]
    %v244 = vld [vmem:[%s1 + $0x60c] sm:$0xff]
    %v245 = vld [vmem:[%s1 + $0x614] sm:$0xff]
    %v246 = vld [vmem:[%s1 + $0x61c] sm:$0xf]
    %v247 = vld [vmem:[%s1 + $0x620] sm:$0xff]
    %v248 = vld [vmem:[%s1 + $0x628] sm:$0xff]
    %v249 = vld [vmem:[%s1 + $0x630] sm:$0xff]
    %v250 = vld [vmem:[%s1 + $0x638] sm:$0xf]
    %v251 = vld [vmem:[%s1 + $0x63c] sm:$0xff]
    %v252 = vld [vmem:[%s1 + $0x644] sm:$0xff]
    %v253 = vld [vmem:[%s1 + $0x64c] sm:$0xff]
    %v254 = vld [vmem:[%s1 + $0x654] sm:$0xf]
    %v255 = vld [vmem:[%s1 + $0x658] sm:$0xff]
    %v256 = vld [vmem:[%s1 + $0x660] sm:$0xff]
    %v257 = vld [vmem:[%s1 + $0x668] sm:$0xff]
    %v258 = vld [vmem:[%s1 + $0x670] sm:$0xf]
    %v259 = vld [vmem:[%s1 + $0x674] sm:$0xff]
    %v260 = vld [vmem:[%s1 + $0x67c] sm:$0xff]
    %v261 = vld [vmem:[%s1 + $0x684] sm:$0xff]
    %v262 = vld [vmem:[%s1 + $0x68c] sm:$0xf]
    %v263 = vld [vmem:[%s1 + $0x690] sm:$0xff]
    %v264 = vld [vmem:[%s1 + $0x698] sm:$0xff]
    %v265 = vld [vmem:[%s1 + $0x6a0] sm:$0xff]
    %v266 = vld [vmem:[%s1 + $0x6a8] sm:$0xf]
    %v267 = vld [vmem:[%s1 + $0x6ac] sm:$0xff]
    %v268 = vld [vmem:[%s1 + $0x6b4] sm:$0xff]
    %v269 = vld [vmem:[%s1 + $0x6bc] sm:$0xff]
    %v270 = vld [vmem:[%s1 + $0x6c4] sm:$0xf]
    %v271 = vld [vmem:[%s1 + $0x6c8] sm:$0xff]
    %v272 = vld [vmem:[%s1 + $0x6d0] sm:$0xff]
    %v273 = vld [vmem:[%s1 + $0x6d8] sm:$0xff]
    %v274 = vld [vmem:[%s1 + $0x6e0] sm:$0xf]
    %v275 = vld [vmem:[%s1 + $0x6e4] sm:$0xff]
    %v276 = vld [vmem:[%s1 + $0x6ec] sm:$0xff]
    %v277 = vld [vmem:[%s1 + $0x6f4] sm:$0xff]
    %v278 = vld [vmem:[%s1 + $0x6fc] sm:$0xf]
    %v279 = vld [vmem:[%s1 + $0x700] sm:$0xff]
    %v280 = vld [vmem:[%s1 + $0x708] sm:$0xff]
    %v281 = vld [vmem:[%s1 + $0x710] sm:$0xff]
    %v282 = vld [vmem:[%s1 + $0x718] sm:$0xf]
    %v283 = vld [vmem:[%s1 + $0x71c] sm:$0xff]
    %v284 = vld [vmem:[%s1 + $0x724] sm:$0xff]
    %v285 = vld [vmem:[%s1 + $0x72c] sm:$0xff]
    %v286 = vld [vmem:[%s1 + $0x734] sm:$0xf]
    %v287 = vld [vmem:[%s1 + $0x738] sm:$0xff]
    %v288 = vld [vmem:[%s1 + $0x740] sm:$0xff]
    %v289 = vld [vmem:[%s1 + $0x748] sm:$0xff]
    %v290 = vld [vmem:[%s1 + $0x750] sm:$0xf]
    %v291 = vld [vmem:[%s1 + $0x754] sm:$0xff]
    %v292 = vld [vmem:[%s1 + $0x75c] sm:$0xff]
    %v293 = vld [vmem:[%s1 + $0x764] sm:$0xff]
    %v294 = vld [vmem:[%s1 + $0x76c] sm:$0xf]
    %v295 = vld [vmem:[%s1 + $0x770] sm:$0xff]
    %v296 = vld [vmem:[%s1 + $0x778] sm:$0xff]
    %v297 = vld [vmem:[%s1 + $0x780] sm:$0xff]
    %v298 = vld [vmem:[%s1 + $0x788] sm:$0xf]
    %v299 = vld [vmem:[%s1 + $0x78c] sm:$0xff]
    %v300 = vld [vmem:[%s1 + $0x794] sm:$0xff]
    %v301 = vld [vmem:[%s1 + $0x79c] sm:$0xff]
    %v302 = vld [vmem:[%s1 + $0x7a4] sm:$0xf]
    %v303 = vld [vmem:[%s1 + $0x7a8] sm:$0xff]
    %v304 = vld [vmem:[%s1 + $0x7b0] sm:$0xff]
    %v305 = vld [vmem:[%s1 + $0x7b8] sm:$0xff]
    %v306 = vld [vmem:[%s1 + $0x7c0] sm:$0xf]
    %v307 = vld [vmem:[%s1 + $0x7c4] sm:$0xff]
    %v308 = vld [vmem:[%s1 + $0x7cc] sm:$0xff]
    %v309 = vld [vmem:[%s1 + $0x7d4] sm:$0xff]
    %v310 = vld [vmem:[%s1 + $0x7dc] sm:$0xf]
    %v311 = vld [vmem:[%s1 + $0x7e0] sm:$0xff]
    %v312 = vld [vmem:[%s1 + $0x7e8] sm:$0xff]
    %v313 = vld [vmem:[%s1 + $0x7f0] sm:$0xff]
    %v314 = vld [vmem:[%s1 + $0x7f8] sm:$0xf]
    %v315 = vld [vmem:[%s1 + $0x7fc] sm:$0xff]
    %v316 = vld [vmem:[%s1 + $0x804] sm:$0xff]
    %v317 = vld [vmem:[%s1 + $0x80c] sm:$0xff]
    %v318 = vld [vmem:[%s1 + $0x814] sm:$0xf]
    %v319 = vld [vmem:[%s1 + $0x818] sm:$0xff]
    %v320 = vld [vmem:[%s1 + $0x820] sm:$0xff]
    %v321 = vld [vmem:[%s1 + $0x828] sm:$0xff]
    %v322 = vld [vmem:[%s1 + $0x830] sm:$0xf]
    %v323 = vld [vmem:[%s1 + $0x834] sm:$0xff]
    %v324 = vld [vmem:[%s1 + $0x83c] sm:$0xff]
    %v325 = vld [vmem:[%s1 + $0x844] sm:$0xff]
    %v326 = vld [vmem:[%s1 + $0x84c] sm:$0xf]
    %v327 = vld [vmem:[%s1 + $0x850] sm:$0xff]
    %v328 = vld [vmem:[%s1 + $0x858] sm:$0xff]
    %v329 = vld [vmem:[%s1 + $0x860] sm:$0xff]
    %v330 = vld [vmem:[%s1 + $0x868] sm:$0xf]
    %v331 = vld [vmem:[%s1 + $0x86c] sm:$0xff]
    %v332 = vld [vmem:[%s1 + $0x874] sm:$0xff]
    %v333 = vld [vmem:[%s1 + $0x87c] sm:$0xff]
    %v334 = vld [vmem:[%s1 + $0x884] sm:$0xf]
    %v335 = vld [vmem:[%s1 + $0x888] sm:$0xff]
    %v336 = vld [vmem:[%s1 + $0x890] sm:$0xff]
    %v337 = vld [vmem:[%s1 + $0x898] sm:$0xff]
    %v338 = vld [vmem:[%s1 + $0x8a0] sm:$0xf]
    %v339 = vld [vmem:[%s1 + $0x8a4] sm:$0xff]
    %v340 = vld [vmem:[%s1 + $0x8ac] sm:$0xff]
    %v341 = vld [vmem:[%s1 + $0x8b4] sm:$0xff]
    %v342 = vld [vmem:[%s1 + $0x8bc] sm:$0xf]
    %v343 = vld [vmem:[%s1 + $0x8c0] sm:$0xff]
    %v344 = vld [vmem:[%s1 + $0x8c8] sm:$0xff]
    %v345 = vld [vmem:[%s1 + $0x8d0] sm:$0xff]
    %v346 = vld [vmem:[%s1 + $0x8d8] sm:$0xf]
    %v347 = vld [vmem:[%s1 + $0x8dc] sm:$0xff]
    %v348 = vld [vmem:[%s1 + $0x8e4] sm:$0xff]
    %v349 = vld [vmem:[%s1 + $0x8ec] sm:$0xff]
    %v350 = vld [vmem:[%s1 + $0x8f4] sm:$0xf]
    %v351 = vld [vmem:[%s1 + $0x8f8] sm:$0xff]
    %v352 = vld [vmem:[%s1 + $0x900] sm:$0xff]
    %v353 = vld [vmem:[%s1 + $0x908] sm:$0xff]
    %v354 = vld [vmem:[%s1 + $0x910] sm:$0xf]
    %v355 = vld [vmem:[%s1 + $0x914] sm:$0xff]
    %v356 = vld [vmem:[%s1 + $0x91c] sm:$0xff]
    %v357 = vld [vmem:[%s1 + $0x924] sm:$0xff]
    %v358 = vld [vmem:[%s1 + $0x92c] sm:$0xf]
    %v359 = vld [vmem:[%s1 + $0x930] sm:$0xff]
    %v360 = vld [vmem:[%s1 + $0x938] sm:$0xff]
    %v361 = vld [vmem:[%s1 + $0x940] sm:$0xff]
    %v362 = vld [vmem:[%s1 + $0x948] sm:$0xf]
    %v363 = vld [vmem:[%s1 + $0x94c] sm:$0xff]
    %v364 = vld [vmem:[%s1 + $0x954] sm:$0xff]
    %v365 = vld [vmem:[%s1 + $0x95c] sm:$0xff]
    %v366 = vld [vmem:[%s1 + $0x964] sm:$0xf]
    %v367 = vld [vmem:[%s1 + $0x968] sm:$0xff]
    %v368 = vld [vmem:[%s1 + $0x970] sm:$0xff]
    %v369 = vld [vmem:[%s1 + $0x978] sm:$0xff]
    %v370 = vld [vmem:[%s1 + $0x980] sm:$0xf]
    %v371 = vld [vmem:[%s1 + $0x984] sm:$0xff]
    %v372 = vld [vmem:[%s1 + $0x98c] sm:$0xff]
    %v373 = vld [vmem:[%s1 + $0x994] sm:$0xff]
    %v374 = vld [vmem:[%s1 + $0x99c] sm:$0xf]
    %v375 = vld [vmem:[%s1 + $0x9a0] sm:$0xff]
    %v376 = vld [vmem:[%s1 + $0x9a8] sm:$0xff]
    %v377 = vld [vmem:[%s1 + $0x9b0] sm:$0xff]
    %v378 = vld [vmem:[%s1 + $0x9b8] sm:$0xf]
    %v379 = vld [vmem:[%s1 + $0x9bc] sm:$0xff]
    %v380 = vld [vmem:[%s1 + $0x9c4] sm:$0xff]
    %v381 = vld [vmem:[%s1 + $0x9cc] sm:$0xff]
    %v382 = vld [vmem:[%s1 + $0x9d4] sm:$0xf]
    %v383 = vld [vmem:[%s1 + $0x9d8] sm:$0xff]
    %v384 = vld [vmem:[%s1 + $0x9e0] sm:$0xff]
    %v385 = vld [vmem:[%s1 + $0x9e8] sm:$0xff]
    %v386 = vld [vmem:[%s1 + $0x9f0] sm:$0xf]
    %v387 = vld [vmem:[%s1 + $0x9f4] sm:$0xff]
    %v388 = vld [vmem:[%s1 + $0x9fc] sm:$0xff]
    %v389 = vld [vmem:[%s1 + $0xa04] sm:$0xff]
    %v390 = vld [vmem:[%s1 + $0xa0c] sm:$0xf]
    %v391 = vld [vmem:[%s1 + $0xa10] sm:$0xff]
    %v392 = vld [vmem:[%s1 + $0xa18] sm:$0xff]
    %v393 = vld [vmem:[%s1 + $0xa20] sm:$0xff]
    %v394 = vld [vmem:[%s1 + $0xa28] sm:$0xf]
    %v395 = vld [vmem:[%s1 + $0xa2c] sm:$0xff]
    %v396 = vld [vmem:[%s1 + $0xa34] sm:$0xff]
    %v397 = vld [vmem:[%s1 + $0xa3c] sm:$0xff]
    %v398 = vld [vmem:[%s1 + $0xa44] sm:$0xf]
    %v399 = vld [vmem:[%s1 + $0xa48] sm:$0xff]
    %v400 = vld [vmem:[%s1 + $0xa50] sm:$0xff]
    %v401 = vld [vmem:[%s1 + $0xa58] sm:$0xff]
    %v402 = vld [vmem:[%s1 + $0xa60] sm:$0xf]
    %v403 = vld [vmem:[%s1 + $0xa64] sm:$0xff]
    %v404 = vld [vmem:[%s1 + $0xa6c] sm:$0xff]
    %v405 = vld [vmem:[%s1 + $0xa74] sm:$0xff]
    %v406 = vld [vmem:[%s1 + $0xa7c] sm:$0xf]
    %v407 = vld [vmem:[%s2] sm:$0x7f]
    %v409 = vlaneseq
    %v410 = vshrl.u32 %v409, 7
    %v411 = vsub.s32 0, %v410
    %v412 = vrot.slane %v407, %v411
    %v413 = vlaneseq
    %v414 = vshrl.u32 %v413, 7
    %v415 = vsub.s32 1, %v414
    %v416 = vrot.slane %v407, %v415
    %v417 = vlaneseq
    %v418 = vshrl.u32 %v417, 7
    %v419 = vsub.s32 2, %v418
    %v420 = vrot.slane %v407, %v419
    %v421 = vlaneseq
    %v422 = vshrl.u32 %v421, 7
    %v423 = vsub.s32 3, %v422
    %v424 = vrot.slane %v407, %v423
    %v425 = vlaneseq
    %v426 = vshrl.u32 %v425, 7
    %v427 = vsub.s32 4, %v426
    %v428 = vrot.slane %v407, %v427
    %v429 = vlaneseq
    %v430 = vshrl.u32 %v429, 7
    %v431 = vsub.s32 5, %v430
    %v432 = vrot.slane %v407, %v431
    %v433 = vlaneseq
    %v434 = vshrl.u32 %v433, 7
    %v435 = vsub.s32 6, %v434
    %v436 = vrot.slane %v407, %v435
    %v445 = vcombine.high %v22, %v22
    %v447 = vunpack.c.l.s4 1966171168
    %v448 = vunpack.c.0.s8 %v447
    %v449 = vlaneseq
    %v450 = vshrl.u32 %v449, 7
    %v451 = vsub.s32 %v448, %v450
    %v452 = vrot.slane %v22, %v451
    %v454 = vunpack.c.l.s4 1966171168
    %v455 = vunpack.c.0.s8 %v454
    %v456 = vlaneseq
    %v457 = vshrl.u32 %v456, 7
    %v458 = vsub.s32 %v455, %v457
    %v459 = vrot.slane %v445, %v458
    %v460 = vcombine.high %v452, %v452
    %v461 = vcombine.high %v459, %v459
    %v463 = vunpack.c.l.s4 1966171168
    %v464 = vunpack.c.0.s8 %v463
    %v465 = vlaneseq
    %v466 = vshrl.u32 %v465, 7
    %v467 = vsub.s32 %v464, %v466
    %v468 = vrot.slane %v452, %v467
    %v470 = vunpack.c.l.s4 1966171168
    %v471 = vunpack.c.0.s8 %v470
    %v472 = vlaneseq
    %v473 = vshrl.u32 %v472, 7
    %v474 = vsub.s32 %v471, %v473
    %v475 = vrot.slane %v459, %v474
    %v477 = vunpack.c.l.s4 1966171168
    %v478 = vunpack.c.0.s8 %v477
    %v479 = vlaneseq
    %v480 = vshrl.u32 %v479, 7
    %v481 = vsub.s32 %v478, %v480
    %v482 = vrot.slane %v460, %v481
    %v484 = vunpack.c.l.s4 1966171168
    %v485 = vunpack.c.0.s8 %v484
    %v486 = vlaneseq
    %v487 = vshrl.u32 %v486, 7
    %v488 = vsub.s32 %v485, %v487
    %v489 = vrot.slane %v461, %v488
    %v490 = vcombine.high %v468, %v468
    %v491 = vcombine.high %v482, %v482
    %v882 = vunpack.c.l.b16 %v23
    %v883 = vunpack.c.h.b16 %v23
    %v884 = vunpack.c.l.b16 %v24
    %v885 = vunpack.c.h.b16 %v24
    %v886 = vunpack.c.l.b16 %v25
    %v887 = vunpack.c.h.b16 %v25
    %v888 = vunpack.c.l.b16 %v26
    %v889 = vunpack.c.l.b16 %v27
    %v890 = vunpack.c.h.b16 %v27
    %v891 = vunpack.c.l.b16 %v28
    %v892 = vunpack.c.h.b16 %v28
    %v893 = vunpack.c.l.b16 %v29
    %v894 = vunpack.c.h.b16 %v29
    %v895 = vunpack.c.l.b16 %v30
    %v896 = vunpack.c.l.b16 %v31
    %v897 = vunpack.c.h.b16 %v31
    %v898 = vunpack.c.l.b16 %v32
    %v899 = vunpack.c.h.b16 %v32
    %v900 = vunpack.c.l.b16 %v33
    %v901 = vunpack.c.h.b16 %v33
    %v902 = vunpack.c.l.b16 %v34
    %v903 = vunpack.c.l.b16 %v35
    %v904 = vunpack.c.h.b16 %v35
    %v905 = vunpack.c.l.b16 %v36
    %v906 = vunpack.c.h.b16 %v36
    %v907 = vunpack.c.l.b16 %v37
    %v908 = vunpack.c.h.b16 %v37
    %v909 = vunpack.c.l.b16 %v38
    %v910 = vunpack.c.l.b16 %v39
    %v911 = vunpack.c.h.b16 %v39
    %v912 = vunpack.c.l.b16 %v40
    %v913 = vunpack.c.h.b16 %v40
    %v914 = vunpack.c.l.b16 %v41
    %v915 = vunpack.c.h.b16 %v41
    %v916 = vunpack.c.l.b16 %v42
    %v917 = vunpack.c.l.b16 %v43
    %v918 = vunpack.c.h.b16 %v43
    %v919 = vunpack.c.l.b16 %v44
    %v920 = vunpack.c.h.b16 %v44
    %v921 = vunpack.c.l.b16 %v45
    %v922 = vunpack.c.h.b16 %v45
    %v923 = vunpack.c.l.b16 %v46
    %v924 = vunpack.c.l.b16 %v47
    %v925 = vunpack.c.h.b16 %v47
    %v926 = vunpack.c.l.b16 %v48
    %v927 = vunpack.c.h.b16 %v48
    %v928 = vunpack.c.l.b16 %v49
    %v929 = vunpack.c.h.b16 %v49
    %v930 = vunpack.c.l.b16 %v50
    %v931 = vunpack.c.l.b16 %v51
    %v932 = vunpack.c.h.b16 %v51
    %v933 = vunpack.c.l.b16 %v52
    %v934 = vunpack.c.h.b16 %v52
    %v935 = vunpack.c.l.b16 %v53
    %v936 = vunpack.c.h.b16 %v53
    %v937 = vunpack.c.l.b16 %v54
    %v938 = vunpack.c.l.b16 %v55
    %v939 = vunpack.c.h.b16 %v55
    %v940 = vunpack.c.l.b16 %v56
    %v941 = vunpack.c.h.b16 %v56
    %v942 = vunpack.c.l.b16 %v57
    %v943 = vunpack.c.h.b16 %v57
    %v944 = vunpack.c.l.b16 %v58
    %v945 = vunpack.c.l.b16 %v59
    %v946 = vunpack.c.h.b16 %v59
    %v947 = vunpack.c.l.b16 %v60
    %v948 = vunpack.c.h.b16 %v60
    %v949 = vunpack.c.l.b16 %v61
    %v950 = vunpack.c.h.b16 %v61
    %v951 = vunpack.c.l.b16 %v62
    %v952 = vunpack.c.l.b16 %v63
    %v953 = vunpack.c.h.b16 %v63
    %v954 = vunpack.c.l.b16 %v64
    %v955 = vunpack.c.h.b16 %v64
    %v956 = vunpack.c.l.b16 %v65
    %v957 = vunpack.c.h.b16 %v65
    %v958 = vunpack.c.l.b16 %v66
    %v959 = vunpack.c.l.b16 %v67
    %v960 = vunpack.c.h.b16 %v67
    %v961 = vunpack.c.l.b16 %v68
    %v962 = vunpack.c.h.b16 %v68
    %v963 = vunpack.c.l.b16 %v69
    %v964 = vunpack.c.h.b16 %v69
    %v965 = vunpack.c.l.b16 %v70
    %v966 = vunpack.c.l.b16 %v71
    %v967 = vunpack.c.h.b16 %v71
    %v968 = vunpack.c.l.b16 %v72
    %v969 = vunpack.c.h.b16 %v72
    %v970 = vunpack.c.l.b16 %v73
    %v971 = vunpack.c.h.b16 %v73
    %v972 = vunpack.c.l.b16 %v74
    %v973 = vunpack.c.l.b16 %v75
    %v974 = vunpack.c.h.b16 %v75
    %v975 = vunpack.c.l.b16 %v76
    %v976 = vunpack.c.h.b16 %v76
    %v977 = vunpack.c.l.b16 %v77
    %v978 = vunpack.c.h.b16 %v77
    %v979 = vunpack.c.l.b16 %v78
    %v980 = vunpack.c.l.b16 %v79
    %v981 = vunpack.c.h.b16 %v79
    %v982 = vunpack.c.l.b16 %v80
    %v983 = vunpack.c.h.b16 %v80
    %v984 = vunpack.c.l.b16 %v81
    %v985 = vunpack.c.h.b16 %v81
    %v986 = vunpack.c.l.b16 %v82
    %v987 = vunpack.c.l.b16 %v83
    %v988 = vunpack.c.h.b16 %v83
    %v989 = vunpack.c.l.b16 %v84
    %v990 = vunpack.c.h.b16 %v84
    %v991 = vunpack.c.l.b16 %v85
    %v992 = vunpack.c.h.b16 %v85
    %v993 = vunpack.c.l.b16 %v86
    %v994 = vunpack.c.l.b16 %v87
    %v995 = vunpack.c.h.b16 %v87
    %v996 = vunpack.c.l.b16 %v88
    %v997 = vunpack.c.h.b16 %v88
    %v998 = vunpack.c.l.b16 %v89
    %v999 = vunpack.c.h.b16 %v89
    %v1000 = vunpack.c.l.b16 %v90
    %v1001 = vunpack.c.l.b16 %v91
    %v1002 = vunpack.c.h.b16 %v91
    %v1003 = vunpack.c.l.b16 %v92
    %v1004 = vunpack.c.h.b16 %v92
    %v1005 = vunpack.c.l.b16 %v93
    %v1006 = vunpack.c.h.b16 %v93
    %v1007 = vunpack.c.l.b16 %v94
    %v1008 = vunpack.c.l.b16 %v95
    %v1009 = vunpack.c.h.b16 %v95
    %v1010 = vunpack.c.l.b16 %v96
    %v1011 = vunpack.c.h.b16 %v96
    %v1012 = vunpack.c.l.b16 %v97
    %v1013 = vunpack.c.h.b16 %v97
    %v1014 = vunpack.c.l.b16 %v98
    %v1015 = vunpack.c.l.b16 %v99
    %v1016 = vunpack.c.h.b16 %v99
    %v1017 = vunpack.c.l.b16 %v100
    %v1018 = vunpack.c.h.b16 %v100
    %v1019 = vunpack.c.l.b16 %v101
    %v1020 = vunpack.c.h.b16 %v101
    %v1021 = vunpack.c.l.b16 %v102
    %v1022 = vunpack.c.l.b16 %v103
    %v1023 = vunpack.c.h.b16 %v103
    %v1024 = vunpack.c.l.b16 %v104
    %v1025 = vunpack.c.h.b16 %v104
    %v1026 = vunpack.c.l.b16 %v105
    %v1027 = vunpack.c.h.b16 %v105
    %v1028 = vunpack.c.l.b16 %v106
    %v1029 = vunpack.c.l.b16 %v107
    %v1030 = vunpack.c.h.b16 %v107
    %v1031 = vunpack.c.l.b16 %v108
    %v1032 = vunpack.c.h.b16 %v108
    %v1033 = vunpack.c.l.b16 %v109
    %v1034 = vunpack.c.h.b16 %v109
    %v1035 = vunpack.c.l.b16 %v110
    %v1036 = vunpack.c.l.b16 %v111
    %v1037 = vunpack.c.h.b16 %v111
    %v1038 = vunpack.c.l.b16 %v112
    %v1039 = vunpack.c.h.b16 %v112
    %v1040 = vunpack.c.l.b16 %v113
    %v1041 = vunpack.c.h.b16 %v113
    %v1042 = vunpack.c.l.b16 %v114
    %v1043 = vunpack.c.l.b16 %v115
    %v1044 = vunpack.c.h.b16 %v115
    %v1045 = vunpack.c.l.b16 %v116
    %v1046 = vunpack.c.h.b16 %v116
    %v1047 = vunpack.c.l.b16 %v117
    %v1048 = vunpack.c.h.b16 %v117
    %v1049 = vunpack.c.l.b16 %v118
    %v1050 = vunpack.c.l.b16 %v119
    %v1051 = vunpack.c.h.b16 %v119
    %v1052 = vunpack.c.l.b16 %v120
    %v1053 = vunpack.c.h.b16 %v120
    %v1054 = vunpack.c.l.b16 %v121
    %v1055 = vunpack.c.h.b16 %v121
    %v1056 = vunpack.c.l.b16 %v122
    %v1057 = vunpack.c.l.b16 %v123
    %v1058 = vunpack.c.h.b16 %v123
    %v1059 = vunpack.c.l.b16 %v124
    %v1060 = vunpack.c.h.b16 %v124
    %v1061 = vunpack.c.l.b16 %v125
    %v1062 = vunpack.c.h.b16 %v125
    %v1063 = vunpack.c.l.b16 %v126
    %v1064 = vunpack.c.l.b16 %v127
    %v1065 = vunpack.c.h.b16 %v127
    %v1066 = vunpack.c.l.b16 %v128
    %v1067 = vunpack.c.h.b16 %v128
    %v1068 = vunpack.c.l.b16 %v129
    %v1069 = vunpack.c.h.b16 %v129
    %v1070 = vunpack.c.l.b16 %v130
    %v1071 = vunpack.c.l.b16 %v131
    %v1072 = vunpack.c.h.b16 %v131
    %v1073 = vunpack.c.l.b16 %v132
    %v1074 = vunpack.c.h.b16 %v132
    %v1075 = vunpack.c.l.b16 %v133
    %v1076 = vunpack.c.h.b16 %v133
    %v1077 = vunpack.c.l.b16 %v134
    %v1078 = vunpack.c.l.b16 %v135
    %v1079 = vunpack.c.h.b16 %v135
    %v1080 = vunpack.c.l.b16 %v136
    %v1081 = vunpack.c.h.b16 %v136
    %v1082 = vunpack.c.l.b16 %v137
    %v1083 = vunpack.c.h.b16 %v137
    %v1084 = vunpack.c.l.b16 %v138
    %v1085 = vunpack.c.l.b16 %v139
    %v1086 = vunpack.c.h.b16 %v139
    %v1087 = vunpack.c.l.b16 %v140
    %v1088 = vunpack.c.h.b16 %v140
    %v1089 = vunpack.c.l.b16 %v141
    %v1090 = vunpack.c.h.b16 %v141
    %v1091 = vunpack.c.l.b16 %v142
    %v1092 = vunpack.c.l.b16 %v143
    %v1093 = vunpack.c.h.b16 %v143
    %v1094 = vunpack.c.l.b16 %v144
    %v1095 = vunpack.c.h.b16 %v144
    %v1096 = vunpack.c.l.b16 %v145
    %v1097 = vunpack.c.h.b16 %v145
    %v1098 = vunpack.c.l.b16 %v146
    %v1099 = vunpack.c.l.b16 %v147
    %v1100 = vunpack.c.h.b16 %v147
    %v1101 = vunpack.c.l.b16 %v148
    %v1102 = vunpack.c.h.b16 %v148
    %v1103 = vunpack.c.l.b16 %v149
    %v1104 = vunpack.c.h.b16 %v149
    %v1105 = vunpack.c.l.b16 %v150
    %v1106 = vunpack.c.l.b16 %v151
    %v1107 = vunpack.c.h.b16 %v151
    %v1108 = vunpack.c.l.b16 %v152
    %v1109 = vunpack.c.h.b16 %v152
    %v1110 = vunpack.c.l.b16 %v153
    %v1111 = vunpack.c.h.b16 %v153
    %v1112 = vunpack.c.l.b16 %v154
    %v1113 = vunpack.c.l.b16 %v155
    %v1114 = vunpack.c.h.b16 %v155
    %v1115 = vunpack.c.l.b16 %v156
    %v1116 = vunpack.c.h.b16 %v156
    %v1117 = vunpack.c.l.b16 %v157
    %v1118 = vunpack.c.h.b16 %v157
    %v1119 = vunpack.c.l.b16 %v158
    %v1120 = vunpack.c.l.b16 %v159
    %v1121 = vunpack.c.h.b16 %v159
    %v1122 = vunpack.c.l.b16 %v160
    %v1123 = vunpack.c.h.b16 %v160
    %v1124 = vunpack.c.l.b16 %v161
    %v1125 = vunpack.c.h.b16 %v161
    %v1126 = vunpack.c.l.b16 %v162
    %v1127 = vunpack.c.l.b16 %v163
    %v1128 = vunpack.c.h.b16 %v163
    %v1129 = vunpack.c.l.b16 %v164
    %v1130 = vunpack.c.h.b16 %v164
    %v1131 = vunpack.c.l.b16 %v165
    %v1132 = vunpack.c.h.b16 %v165
    %v1133 = vunpack.c.l.b16 %v166
    %v1134 = vunpack.c.l.b16 %v167
    %v1135 = vunpack.c.h.b16 %v167
    %v1136 = vunpack.c.l.b16 %v168
    %v1137 = vunpack.c.h.b16 %v168
    %v1138 = vunpack.c.l.b16 %v169
    %v1139 = vunpack.c.h.b16 %v169
    %v1140 = vunpack.c.l.b16 %v170
    %v1141 = vunpack.c.l.b16 %v171
    %v1142 = vunpack.c.h.b16 %v171
    %v1143 = vunpack.c.l.b16 %v172
    %v1144 = vunpack.c.h.b16 %v172
    %v1145 = vunpack.c.l.b16 %v173
    %v1146 = vunpack.c.h.b16 %v173
    %v1147 = vunpack.c.l.b16 %v174
    %v1148 = vunpack.c.l.b16 %v175
    %v1149 = vunpack.c.h.b16 %v175
    %v1150 = vunpack.c.l.b16 %v176
    %v1151 = vunpack.c.h.b16 %v176
    %v1152 = vunpack.c.l.b16 %v177
    %v1153 = vunpack.c.h.b16 %v177
    %v1154 = vunpack.c.l.b16 %v178
    %v1155 = vunpack.c.l.b16 %v179
    %v1156 = vunpack.c.h.b16 %v179
    %v1157 = vunpack.c.l.b16 %v180
    %v1158 = vunpack.c.h.b16 %v180
    %v1159 = vunpack.c.l.b16 %v181
    %v1160 = vunpack.c.h.b16 %v181
    %v1161 = vunpack.c.l.b16 %v182
    %v1162 = vunpack.c.l.b16 %v183
    %v1163 = vunpack.c.h.b16 %v183
    %v1164 = vunpack.c.l.b16 %v184
    %v1165 = vunpack.c.h.b16 %v184
    %v1166 = vunpack.c.l.b16 %v185
    %v1167 = vunpack.c.h.b16 %v185
    %v1168 = vunpack.c.l.b16 %v186
    %v1169 = vunpack.c.l.b16 %v187
    %v1170 = vunpack.c.h.b16 %v187
    %v1171 = vunpack.c.l.b16 %v188
    %v1172 = vunpack.c.h.b16 %v188
    %v1173 = vunpack.c.l.b16 %v189
    %v1174 = vunpack.c.h.b16 %v189
    %v1175 = vunpack.c.l.b16 %v190
    %v1176 = vunpack.c.l.b16 %v191
    %v1177 = vunpack.c.h.b16 %v191
    %v1178 = vunpack.c.l.b16 %v192
    %v1179 = vunpack.c.h.b16 %v192
    %v1180 = vunpack.c.l.b16 %v193
    %v1181 = vunpack.c.h.b16 %v193
    %v1182 = vunpack.c.l.b16 %v194
    %v1183 = vunpack.c.l.b16 %v195
    %v1184 = vunpack.c.h.b16 %v195
    %v1185 = vunpack.c.l.b16 %v196
    %v1186 = vunpack.c.h.b16 %v196
    %v1187 = vunpack.c.l.b16 %v197
    %v1188 = vunpack.c.h.b16 %v197
    %v1189 = vunpack.c.l.b16 %v198
    %v1190 = vunpack.c.l.b16 %v199
    %v1191 = vunpack.c.h.b16 %v199
    %v1192 = vunpack.c.l.b16 %v200
    %v1193 = vunpack.c.h.b16 %v200
    %v1194 = vunpack.c.l.b16 %v201
    %v1195 = vunpack.c.h.b16 %v201
    %v1196 = vunpack.c.l.b16 %v202
    %v1197 = vunpack.c.l.b16 %v203
    %v1198 = vunpack.c.h.b16 %v203
    %v1199 = vunpack.c.l.b16 %v204
    %v1200 = vunpack.c.h.b16 %v204
    %v1201 = vunpack.c.l.b16 %v205
    %v1202 = vunpack.c.h.b16 %v205
    %v1203 = vunpack.c.l.b16 %v206
    %v1204 = vunpack.c.l.b16 %v207
    %v1205 = vunpack.c.h.b16 %v207
    %v1206 = vunpack.c.l.b16 %v208
    %v1207 = vunpack.c.h.b16 %v208
    %v1208 = vunpack.c.l.b16 %v209
    %v1209 = vunpack.c.h.b16 %v209
    %v1210 = vunpack.c.l.b16 %v210
    %v1211 = vunpack.c.l.b16 %v211
    %v1212 = vunpack.c.h.b16 %v211
    %v1213 = vunpack.c.l.b16 %v212
    %v1214 = vunpack.c.h.b16 %v212
    %v1215 = vunpack.c.l.b16 %v213
    %v1216 = vunpack.c.h.b16 %v213
    %v1217 = vunpack.c.l.b16 %v214
    %v1218 = vunpack.c.l.b16 %v215
    %v1219 = vunpack.c.h.b16 %v215
    %v1220 = vunpack.c.l.b16 %v216
    %v1221 = vunpack.c.h.b16 %v216
    %v1222 = vunpack.c.l.b16 %v217
    %v1223 = vunpack.c.h.b16 %v217
    %v1224 = vunpack.c.l.b16 %v218
    %v1225 = vunpack.c.l.b16 %v219
    %v1226 = vunpack.c.h.b16 %v219
    %v1227 = vunpack.c.l.b16 %v220
    %v1228 = vunpack.c.h.b16 %v220
    %v1229 = vunpack.c.l.b16 %v221
    %v1230 = vunpack.c.h.b16 %v221
    %v1231 = vunpack.c.l.b16 %v222
    %v1232 = vunpack.c.l.b16 %v223
    %v1233 = vunpack.c.h.b16 %v223
    %v1234 = vunpack.c.l.b16 %v224
    %v1235 = vunpack.c.h.b16 %v224
    %v1236 = vunpack.c.l.b16 %v225
    %v1237 = vunpack.c.h.b16 %v225
    %v1238 = vunpack.c.l.b16 %v226
    %v1239 = vunpack.c.l.b16 %v227
    %v1240 = vunpack.c.h.b16 %v227
    %v1241 = vunpack.c.l.b16 %v228
    %v1242 = vunpack.c.h.b16 %v228
    %v1243 = vunpack.c.l.b16 %v229
    %v1244 = vunpack.c.h.b16 %v229
    %v1245 = vunpack.c.l.b16 %v230
    %v1246 = vunpack.c.l.b16 %v231
    %v1247 = vunpack.c.h.b16 %v231
    %v1248 = vunpack.c.l.b16 %v232
    %v1249 = vunpack.c.h.b16 %v232
    %v1250 = vunpack.c.l.b16 %v233
    %v1251 = vunpack.c.h.b16 %v233
    %v1252 = vunpack.c.l.b16 %v234
    %v1253 = vunpack.c.l.b16 %v235
    %v1254 = vunpack.c.h.b16 %v235
    %v1255 = vunpack.c.l.b16 %v236
    %v1256 = vunpack.c.h.b16 %v236
    %v1257 = vunpack.c.l.b16 %v237
    %v1258 = vunpack.c.h.b16 %v237
    %v1259 = vunpack.c.l.b16 %v238
    %v1260 = vunpack.c.l.b16 %v239
    %v1261 = vunpack.c.h.b16 %v239
    %v1262 = vunpack.c.l.b16 %v240
    %v1263 = vunpack.c.h.b16 %v240
    %v1264 = vunpack.c.l.b16 %v241
    %v1265 = vunpack.c.h.b16 %v241
    %v1266 = vunpack.c.l.b16 %v242
    %v1267 = vunpack.c.l.b16 %v243
    %v1268 = vunpack.c.h.b16 %v243
    %v1269 = vunpack.c.l.b16 %v244
    %v1270 = vunpack.c.h.b16 %v244
    %v1271 = vunpack.c.l.b16 %v245
    %v1272 = vunpack.c.h.b16 %v245
    %v1273 = vunpack.c.l.b16 %v246
    %v1274 = vunpack.c.l.b16 %v247
    %v1275 = vunpack.c.h.b16 %v247
    %v1276 = vunpack.c.l.b16 %v248
    %v1277 = vunpack.c.h.b16 %v248
    %v1278 = vunpack.c.l.b16 %v249
    %v1279 = vunpack.c.h.b16 %v249
    %v1280 = vunpack.c.l.b16 %v250
    %v1281 = vunpack.c.l.b16 %v251
    %v1282 = vunpack.c.h.b16 %v251
    %v1283 = vunpack.c.l.b16 %v252
    %v1284 = vunpack.c.h.b16 %v252
    %v1285 = vunpack.c.l.b16 %v253
    %v1286 = vunpack.c.h.b16 %v253
    %v1287 = vunpack.c.l.b16 %v254
    %v1288 = vunpack.c.l.b16 %v255
    %v1289 = vunpack.c.h.b16 %v255
    %v1290 = vunpack.c.l.b16 %v256
    %v1291 = vunpack.c.h.b16 %v256
    %v1292 = vunpack.c.l.b16 %v257
    %v1293 = vunpack.c.h.b16 %v257
    %v1294 = vunpack.c.l.b16 %v258
    %v1295 = vunpack.c.l.b16 %v259
    %v1296 = vunpack.c.h.b16 %v259
    %v1297 = vunpack.c.l.b16 %v260
    %v1298 = vunpack.c.h.b16 %v260
    %v1299 = vunpack.c.l.b16 %v261
    %v1300 = vunpack.c.h.b16 %v261
    %v1301 = vunpack.c.l.b16 %v262
    %v1302 = vunpack.c.l.b16 %v263
    %v1303 = vunpack.c.h.b16 %v263
    %v1304 = vunpack.c.l.b16 %v264
    %v1305 = vunpack.c.h.b16 %v264
    %v1306 = vunpack.c.l.b16 %v265
    %v1307 = vunpack.c.h.b16 %v265
    %v1308 = vunpack.c.l.b16 %v266
    %v1309 = vunpack.c.l.b16 %v267
    %v1310 = vunpack.c.h.b16 %v267
    %v1311 = vunpack.c.l.b16 %v268
    %v1312 = vunpack.c.h.b16 %v268
    %v1313 = vunpack.c.l.b16 %v269
    %v1314 = vunpack.c.h.b16 %v269
    %v1315 = vunpack.c.l.b16 %v270
    %v1316 = vunpack.c.l.b16 %v271
    %v1317 = vunpack.c.h.b16 %v271
    %v1318 = vunpack.c.l.b16 %v272
    %v1319 = vunpack.c.h.b16 %v272
    %v1320 = vunpack.c.l.b16 %v273
    %v1321 = vunpack.c.h.b16 %v273
    %v1322 = vunpack.c.l.b16 %v274
    %v1323 = vunpack.c.l.b16 %v275
    %v1324 = vunpack.c.h.b16 %v275
    %v1325 = vunpack.c.l.b16 %v276
    %v1326 = vunpack.c.h.b16 %v276
    %v1327 = vunpack.c.l.b16 %v277
    %v1328 = vunpack.c.h.b16 %v277
    %v1329 = vunpack.c.l.b16 %v278
    %v1330 = vunpack.c.l.b16 %v279
    %v1331 = vunpack.c.h.b16 %v279
    %v1332 = vunpack.c.l.b16 %v280
    %v1333 = vunpack.c.h.b16 %v280
    %v1334 = vunpack.c.l.b16 %v281
    %v1335 = vunpack.c.h.b16 %v281
    %v1336 = vunpack.c.l.b16 %v282
    %v1337 = vunpack.c.l.b16 %v283
    %v1338 = vunpack.c.h.b16 %v283
    %v1339 = vunpack.c.l.b16 %v284
    %v1340 = vunpack.c.h.b16 %v284
    %v1341 = vunpack.c.l.b16 %v285
    %v1342 = vunpack.c.h.b16 %v285
    %v1343 = vunpack.c.l.b16 %v286
    %v1344 = vunpack.c.l.b16 %v287
    %v1345 = vunpack.c.h.b16 %v287
    %v1346 = vunpack.c.l.b16 %v288
    %v1347 = vunpack.c.h.b16 %v288
    %v1348 = vunpack.c.l.b16 %v289
    %v1349 = vunpack.c.h.b16 %v289
    %v1350 = vunpack.c.l.b16 %v290
    %v1351 = vunpack.c.l.b16 %v291
    %v1352 = vunpack.c.h.b16 %v291
    %v1353 = vunpack.c.l.b16 %v292
    %v1354 = vunpack.c.h.b16 %v292
    %v1355 = vunpack.c.l.b16 %v293
    %v1356 = vunpack.c.h.b16 %v293
    %v1357 = vunpack.c.l.b16 %v294
    %v1358 = vunpack.c.l.b16 %v295
    %v1359 = vunpack.c.h.b16 %v295
    %v1360 = vunpack.c.l.b16 %v296
    %v1361 = vunpack.c.h.b16 %v296
    %v1362 = vunpack.c.l.b16 %v297
    %v1363 = vunpack.c.h.b16 %v297
    %v1364 = vunpack.c.l.b16 %v298
    %v1365 = vunpack.c.l.b16 %v299
    %v1366 = vunpack.c.h.b16 %v299
    %v1367 = vunpack.c.l.b16 %v300
    %v1368 = vunpack.c.h.b16 %v300
    %v1369 = vunpack.c.l.b16 %v301
    %v1370 = vunpack.c.h.b16 %v301
    %v1371 = vunpack.c.l.b16 %v302
    %v1372 = vunpack.c.l.b16 %v303
    %v1373 = vunpack.c.h.b16 %v303
    %v1374 = vunpack.c.l.b16 %v304
    %v1375 = vunpack.c.h.b16 %v304
    %v1376 = vunpack.c.l.b16 %v305
    %v1377 = vunpack.c.h.b16 %v305
    %v1378 = vunpack.c.l.b16 %v306
    %v1379 = vunpack.c.l.b16 %v307
    %v1380 = vunpack.c.h.b16 %v307
    %v1381 = vunpack.c.l.b16 %v308
    %v1382 = vunpack.c.h.b16 %v308
    %v1383 = vunpack.c.l.b16 %v309
    %v1384 = vunpack.c.h.b16 %v309
    %v1385 = vunpack.c.l.b16 %v310
    %v1386 = vunpack.c.l.b16 %v311
    %v1387 = vunpack.c.h.b16 %v311
    %v1388 = vunpack.c.l.b16 %v312
    %v1389 = vunpack.c.h.b16 %v312
    %v1390 = vunpack.c.l.b16 %v313
    %v1391 = vunpack.c.h.b16 %v313
    %v1392 = vunpack.c.l.b16 %v314
    %v1393 = vunpack.c.l.b16 %v315
    %v1394 = vunpack.c.h.b16 %v315
    %v1395 = vunpack.c.l.b16 %v316
    %v1396 = vunpack.c.h.b16 %v316
    %v1397 = vunpack.c.l.b16 %v317
    %v1398 = vunpack.c.h.b16 %v317
    %v1399 = vunpack.c.l.b16 %v318
    %v1400 = vunpack.c.l.b16 %v319
    %v1401 = vunpack.c.h.b16 %v319
    %v1402 = vunpack.c.l.b16 %v320
    %v1403 = vunpack.c.h.b16 %v320
    %v1404 = vunpack.c.l.b16 %v321
    %v1405 = vunpack.c.h.b16 %v321
    %v1406 = vunpack.c.l.b16 %v322
    %v1407 = vunpack.c.l.b16 %v323
    %v1408 = vunpack.c.h.b16 %v323
    %v1409 = vunpack.c.l.b16 %v324
    %v1410 = vunpack.c.h.b16 %v324
    %v1411 = vunpack.c.l.b16 %v325
    %v1412 = vunpack.c.h.b16 %v325
    %v1413 = vunpack.c.l.b16 %v326
    %v1414 = vunpack.c.l.b16 %v327
    %v1415 = vunpack.c.h.b16 %v327
    %v1416 = vunpack.c.l.b16 %v328
    %v1417 = vunpack.c.h.b16 %v328
    %v1418 = vunpack.c.l.b16 %v329
    %v1419 = vunpack.c.h.b16 %v329
    %v1420 = vunpack.c.l.b16 %v330
    %v1421 = vunpack.c.l.b16 %v331
    %v1422 = vunpack.c.h.b16 %v331
    %v1423 = vunpack.c.l.b16 %v332
    %v1424 = vunpack.c.h.b16 %v332
    %v1425 = vunpack.c.l.b16 %v333
    %v1426 = vunpack.c.h.b16 %v333
    %v1427 = vunpack.c.l.b16 %v334
    %v1428 = vunpack.c.l.b16 %v335
    %v1429 = vunpack.c.h.b16 %v335
    %v1430 = vunpack.c.l.b16 %v336
    %v1431 = vunpack.c.h.b16 %v336
    %v1432 = vunpack.c.l.b16 %v337
    %v1433 = vunpack.c.h.b16 %v337
    %v1434 = vunpack.c.l.b16 %v338
    %v1435 = vunpack.c.l.b16 %v339
    %v1436 = vunpack.c.h.b16 %v339
    %v1437 = vunpack.c.l.b16 %v340
    %v1438 = vunpack.c.h.b16 %v340
    %v1439 = vunpack.c.l.b16 %v341
    %v1440 = vunpack.c.h.b16 %v341
    %v1441 = vunpack.c.l.b16 %v342
    %v1442 = vunpack.c.l.b16 %v343
    %v1443 = vunpack.c.h.b16 %v343
    %v1444 = vunpack.c.l.b16 %v344
    %v1445 = vunpack.c.h.b16 %v344
    %v1446 = vunpack.c.l.b16 %v345
    %v1447 = vunpack.c.h.b16 %v345
    %v1448 = vunpack.c.l.b16 %v346
    %v1449 = vunpack.c.l.b16 %v347
    %v1450 = vunpack.c.h.b16 %v347
    %v1451 = vunpack.c.l.b16 %v348
    %v1452 = vunpack.c.h.b16 %v348
    %v1453 = vunpack.c.l.b16 %v349
    %v1454 = vunpack.c.h.b16 %v349
    %v1455 = vunpack.c.l.b16 %v350
    %v1456 = vunpack.c.l.b16 %v351
    %v1457 = vunpack.c.h.b16 %v351
    %v1458 = vunpack.c.l.b16 %v352
    %v1459 = vunpack.c.h.b16 %v352
    %v1460 = vunpack.c.l.b16 %v353
    %v1461 = vunpack.c.h.b16 %v353
    %v1462 = vunpack.c.l.b16 %v354
    %v1463 = vunpack.c.l.b16 %v355
    %v1464 = vunpack.c.h.b16 %v355
    %v1465 = vunpack.c.l.b16 %v356
    %v1466 = vunpack.c.h.b16 %v356
    %v1467 = vunpack.c.l.b16 %v357
    %v1468 = vunpack.c.h.b16 %v357
    %v1469 = vunpack.c.l.b16 %v358
    %v1470 = vunpack.c.l.b16 %v359
    %v1471 = vunpack.c.h.b16 %v359
    %v1472 = vunpack.c.l.b16 %v360
    %v1473 = vunpack.c.h.b16 %v360
    %v1474 = vunpack.c.l.b16 %v361
    %v1475 = vunpack.c.h.b16 %v361
    %v1476 = vunpack.c.l.b16 %v362
    %v1477 = vunpack.c.l.b16 %v363
    %v1478 = vunpack.c.h.b16 %v363
    %v1479 = vunpack.c.l.b16 %v364
    %v1480 = vunpack.c.h.b16 %v364
    %v1481 = vunpack.c.l.b16 %v365
    %v1482 = vunpack.c.h.b16 %v365
    %v1483 = vunpack.c.l.b16 %v366
    %v1484 = vunpack.c.l.b16 %v367
    %v1485 = vunpack.c.h.b16 %v367
    %v1486 = vunpack.c.l.b16 %v368
    %v1487 = vunpack.c.h.b16 %v368
    %v1488 = vunpack.c.l.b16 %v369
    %v1489 = vunpack.c.h.b16 %v369
    %v1490 = vunpack.c.l.b16 %v370
    %v1491 = vunpack.c.l.b16 %v371
    %v1492 = vunpack.c.h.b16 %v371
    %v1493 = vunpack.c.l.b16 %v372
    %v1494 = vunpack.c.h.b16 %v372
    %v1495 = vunpack.c.l.b16 %v373
    %v1496 = vunpack.c.h.b16 %v373
    %v1497 = vunpack.c.l.b16 %v374
    %v1498 = vunpack.c.l.b16 %v375
    %v1499 = vunpack.c.h.b16 %v375
    %v1500 = vunpack.c.l.b16 %v376
    %v1501 = vunpack.c.h.b16 %v376
    %v1502 = vunpack.c.l.b16 %v377
    %v1503 = vunpack.c.h.b16 %v377
    %v1504 = vunpack.c.l.b16 %v378
    %v1505 = vunpack.c.l.b16 %v379
    %v1506 = vunpack.c.h.b16 %v379
    %v1507 = vunpack.c.l.b16 %v380
    %v1508 = vunpack.c.h.b16 %v380
    %v1509 = vunpack.c.l.b16 %v381
    %v1510 = vunpack.c.h.b16 %v381
    %v1511 = vunpack.c.l.b16 %v382
    %v1512 = vunpack.c.l.b16 %v383
    %v1513 = vunpack.c.h.b16 %v383
    %v1514 = vunpack.c.l.b16 %v384
    %v1515 = vunpack.c.h.b16 %v384
    %v1516 = vunpack.c.l.b16 %v385
    %v1517 = vunpack.c.h.b16 %v385
    %v1518 = vunpack.c.l.b16 %v386
    %v1519 = vunpack.c.l.b16 %v387
    %v1520 = vunpack.c.h.b16 %v387
    %v1521 = vunpack.c.l.b16 %v388
    %v1522 = vunpack.c.h.b16 %v388
    %v1523 = vunpack.c.l.b16 %v389
    %v1524 = vunpack.c.h.b16 %v389
    %v1525 = vunpack.c.l.b16 %v390
    %v1526 = vunpack.c.l.b16 %v391
    %v1527 = vunpack.c.h.b16 %v391
    %v1528 = vunpack.c.l.b16 %v392
    %v1529 = vunpack.c.h.b16 %v392
    %v1530 = vunpack.c.l.b16 %v393
    %v1531 = vunpack.c.h.b16 %v393
    %v1532 = vunpack.c.l.b16 %v394
    %v1533 = vunpack.c.l.b16 %v395
    %v1534 = vunpack.c.h.b16 %v395
    %v1535 = vunpack.c.l.b16 %v396
    %v1536 = vunpack.c.h.b16 %v396
    %v1537 = vunpack.c.l.b16 %v397
    %v1538 = vunpack.c.h.b16 %v397
    %v1539 = vunpack.c.l.b16 %v398
    %v1540 = vunpack.c.l.b16 %v399
    %v1541 = vunpack.c.h.b16 %v399
    %v1542 = vunpack.c.l.b16 %v400
    %v1543 = vunpack.c.h.b16 %v400
    %v1544 = vunpack.c.l.b16 %v401
    %v1545 = vunpack.c.h.b16 %v401
    %v1546 = vunpack.c.l.b16 %v402
    %v1547 = vunpack.c.l.b16 %v403
    %v1548 = vunpack.c.h.b16 %v403
    %v1549 = vunpack.c.l.b16 %v404
    %v1550 = vunpack.c.h.b16 %v404
    %v1551 = vunpack.c.l.b16 %v405
    %v1552 = vunpack.c.h.b16 %v405
    %v1553 = vunpack.c.l.b16 %v406
    %v1554 = vpack.c.b16 %v889, %v882
    %v1555 = vpack.c.b16 %v890, %v883
    %v1556 = vpack.c.b16 %v891, %v884
    %v1557 = vpack.c.b16 %v892, %v885
    %v1558 = vpack.c.b16 %v893, %v886
    %v1559 = vpack.c.b16 %v894, %v887
    %v1560 = vpack.c.b16 %v895, %v888
    %v1561 = vpack.c.b16 %v903, %v896
    %v1562 = vpack.c.b16 %v904, %v897
    %v1563 = vpack.c.b16 %v905, %v898
    %v1564 = vpack.c.b16 %v906, %v899
    %v1565 = vpack.c.b16 %v907, %v900
    %v1566 = vpack.c.b16 %v908, %v901
    %v1567 = vpack.c.b16 %v909, %v902
    %v1568 = vpack.c.b16 %v917, %v910
    %v1569 = vpack.c.b16 %v918, %v911
    %v1570 = vpack.c.b16 %v919, %v912
    %v1571 = vpack.c.b16 %v920, %v913
    %v1572 = vpack.c.b16 %v921, %v914
    %v1573 = vpack.c.b16 %v922, %v915
    %v1574 = vpack.c.b16 %v923, %v916
    %v1575 = vpack.c.b16 %v931, %v924
    %v1576 = vpack.c.b16 %v932, %v925
    %v1577 = vpack.c.b16 %v933, %v926
    %v1578 = vpack.c.b16 %v934, %v927
    %v1579 = vpack.c.b16 %v935, %v928
    %v1580 = vpack.c.b16 %v936, %v929
    %v1581 = vpack.c.b16 %v937, %v930
    %v1582 = vpack.c.b16 %v945, %v938
    %v1583 = vpack.c.b16 %v946, %v939
    %v1584 = vpack.c.b16 %v947, %v940
    %v1585 = vpack.c.b16 %v948, %v941
    %v1586 = vpack.c.b16 %v949, %v942
    %v1587 = vpack.c.b16 %v950, %v943
    %v1588 = vpack.c.b16 %v951, %v944
    %v1589 = vpack.c.b16 %v959, %v952
    %v1590 = vpack.c.b16 %v960, %v953
    %v1591 = vpack.c.b16 %v961, %v954
    %v1592 = vpack.c.b16 %v962, %v955
    %v1593 = vpack.c.b16 %v963, %v956
    %v1594 = vpack.c.b16 %v964, %v957
    %v1595 = vpack.c.b16 %v965, %v958
    %v1596 = vpack.c.b16 %v973, %v966
    %v1597 = vpack.c.b16 %v974, %v967
    %v1598 = vpack.c.b16 %v975, %v968
    %v1599 = vpack.c.b16 %v976, %v969
    %v1600 = vpack.c.b16 %v977, %v970
    %v1601 = vpack.c.b16 %v978, %v971
    %v1602 = vpack.c.b16 %v979, %v972
    %v1603 = vpack.c.b16 %v987, %v980
    %v1604 = vpack.c.b16 %v988, %v981
    %v1605 = vpack.c.b16 %v989, %v982
    %v1606 = vpack.c.b16 %v990, %v983
    %v1607 = vpack.c.b16 %v991, %v984
    %v1608 = vpack.c.b16 %v992, %v985
    %v1609 = vpack.c.b16 %v993, %v986
    %v1610 = vpack.c.b16 %v1001, %v994
    %v1611 = vpack.c.b16 %v1002, %v995
    %v1612 = vpack.c.b16 %v1003, %v996
    %v1613 = vpack.c.b16 %v1004, %v997
    %v1614 = vpack.c.b16 %v1005, %v998
    %v1615 = vpack.c.b16 %v1006, %v999
    %v1616 = vpack.c.b16 %v1007, %v1000
    %v1617 = vpack.c.b16 %v1015, %v1008
    %v1618 = vpack.c.b16 %v1016, %v1009
    %v1619 = vpack.c.b16 %v1017, %v1010
    %v1620 = vpack.c.b16 %v1018, %v1011
    %v1621 = vpack.c.b16 %v1019, %v1012
    %v1622 = vpack.c.b16 %v1020, %v1013
    %v1623 = vpack.c.b16 %v1021, %v1014
    %v1624 = vpack.c.b16 %v1029, %v1022
    %v1625 = vpack.c.b16 %v1030, %v1023
    %v1626 = vpack.c.b16 %v1031, %v1024
    %v1627 = vpack.c.b16 %v1032, %v1025
    %v1628 = vpack.c.b16 %v1033, %v1026
    %v1629 = vpack.c.b16 %v1034, %v1027
    %v1630 = vpack.c.b16 %v1035, %v1028
    %v1631 = vpack.c.b16 %v1043, %v1036
    %v1632 = vpack.c.b16 %v1044, %v1037
    %v1633 = vpack.c.b16 %v1045, %v1038
    %v1634 = vpack.c.b16 %v1046, %v1039
    %v1635 = vpack.c.b16 %v1047, %v1040
    %v1636 = vpack.c.b16 %v1048, %v1041
    %v1637 = vpack.c.b16 %v1049, %v1042
    %v1638 = vpack.c.b16 %v1057, %v1050
    %v1639 = vpack.c.b16 %v1058, %v1051
    %v1640 = vpack.c.b16 %v1059, %v1052
    %v1641 = vpack.c.b16 %v1060, %v1053
    %v1642 = vpack.c.b16 %v1061, %v1054
    %v1643 = vpack.c.b16 %v1062, %v1055
    %v1644 = vpack.c.b16 %v1063, %v1056
    %v1645 = vpack.c.b16 %v1071, %v1064
    %v1646 = vpack.c.b16 %v1072, %v1065
    %v1647 = vpack.c.b16 %v1073, %v1066
    %v1648 = vpack.c.b16 %v1074, %v1067
    %v1649 = vpack.c.b16 %v1075, %v1068
    %v1650 = vpack.c.b16 %v1076, %v1069
    %v1651 = vpack.c.b16 %v1077, %v1070
    %v1652 = vpack.c.b16 %v1085, %v1078
    %v1653 = vpack.c.b16 %v1086, %v1079
    %v1654 = vpack.c.b16 %v1087, %v1080
    %v1655 = vpack.c.b16 %v1088, %v1081
    %v1656 = vpack.c.b16 %v1089, %v1082
    %v1657 = vpack.c.b16 %v1090, %v1083
    %v1658 = vpack.c.b16 %v1091, %v1084
    %v1659 = vpack.c.b16 %v1099, %v1092
    %v1660 = vpack.c.b16 %v1100, %v1093
    %v1661 = vpack.c.b16 %v1101, %v1094
    %v1662 = vpack.c.b16 %v1102, %v1095
    %v1663 = vpack.c.b16 %v1103, %v1096
    %v1664 = vpack.c.b16 %v1104, %v1097
    %v1665 = vpack.c.b16 %v1105, %v1098
    %v1666 = vpack.c.b16 %v1113, %v1106
    %v1667 = vpack.c.b16 %v1114, %v1107
    %v1668 = vpack.c.b16 %v1115, %v1108
    %v1669 = vpack.c.b16 %v1116, %v1109
    %v1670 = vpack.c.b16 %v1117, %v1110
    %v1671 = vpack.c.b16 %v1118, %v1111
    %v1672 = vpack.c.b16 %v1119, %v1112
    %v1673 = vpack.c.b16 %v1127, %v1120
    %v1674 = vpack.c.b16 %v1128, %v1121
    %v1675 = vpack.c.b16 %v1129, %v1122
    %v1676 = vpack.c.b16 %v1130, %v1123
    %v1677 = vpack.c.b16 %v1131, %v1124
    %v1678 = vpack.c.b16 %v1132, %v1125
    %v1679 = vpack.c.b16 %v1133, %v1126
    %v1680 = vpack.c.b16 %v1141, %v1134
    %v1681 = vpack.c.b16 %v1142, %v1135
    %v1682 = vpack.c.b16 %v1143, %v1136
    %v1683 = vpack.c.b16 %v1144, %v1137
    %v1684 = vpack.c.b16 %v1145, %v1138
    %v1685 = vpack.c.b16 %v1146, %v1139
    %v1686 = vpack.c.b16 %v1147, %v1140
    %v1687 = vpack.c.b16 %v1155, %v1148
    %v1688 = vpack.c.b16 %v1156, %v1149
    %v1689 = vpack.c.b16 %v1157, %v1150
    %v1690 = vpack.c.b16 %v1158, %v1151
    %v1691 = vpack.c.b16 %v1159, %v1152
    %v1692 = vpack.c.b16 %v1160, %v1153
    %v1693 = vpack.c.b16 %v1161, %v1154
    %v1694 = vpack.c.b16 %v1169, %v1162
    %v1695 = vpack.c.b16 %v1170, %v1163
    %v1696 = vpack.c.b16 %v1171, %v1164
    %v1697 = vpack.c.b16 %v1172, %v1165
    %v1698 = vpack.c.b16 %v1173, %v1166
    %v1699 = vpack.c.b16 %v1174, %v1167
    %v1700 = vpack.c.b16 %v1175, %v1168
    %v1701 = vpack.c.b16 %v1183, %v1176
    %v1702 = vpack.c.b16 %v1184, %v1177
    %v1703 = vpack.c.b16 %v1185, %v1178
    %v1704 = vpack.c.b16 %v1186, %v1179
    %v1705 = vpack.c.b16 %v1187, %v1180
    %v1706 = vpack.c.b16 %v1188, %v1181
    %v1707 = vpack.c.b16 %v1189, %v1182
    %v1708 = vpack.c.b16 %v1197, %v1190
    %v1709 = vpack.c.b16 %v1198, %v1191
    %v1710 = vpack.c.b16 %v1199, %v1192
    %v1711 = vpack.c.b16 %v1200, %v1193
    %v1712 = vpack.c.b16 %v1201, %v1194
    %v1713 = vpack.c.b16 %v1202, %v1195
    %v1714 = vpack.c.b16 %v1203, %v1196
    %v1715 = vpack.c.b16 %v1211, %v1204
    %v1716 = vpack.c.b16 %v1212, %v1205
    %v1717 = vpack.c.b16 %v1213, %v1206
    %v1718 = vpack.c.b16 %v1214, %v1207
    %v1719 = vpack.c.b16 %v1215, %v1208
    %v1720 = vpack.c.b16 %v1216, %v1209
    %v1721 = vpack.c.b16 %v1217, %v1210
    %v1722 = vpack.c.b16 %v1225, %v1218
    %v1723 = vpack.c.b16 %v1226, %v1219
    %v1724 = vpack.c.b16 %v1227, %v1220
    %v1725 = vpack.c.b16 %v1228, %v1221
    %v1726 = vpack.c.b16 %v1229, %v1222
    %v1727 = vpack.c.b16 %v1230, %v1223
    %v1728 = vpack.c.b16 %v1231, %v1224
    %v1729 = vpack.c.b16 %v1239, %v1232
    %v1730 = vpack.c.b16 %v1240, %v1233
    %v1731 = vpack.c.b16 %v1241, %v1234
    %v1732 = vpack.c.b16 %v1242, %v1235
    %v1733 = vpack.c.b16 %v1243, %v1236
    %v1734 = vpack.c.b16 %v1244, %v1237
    %v1735 = vpack.c.b16 %v1245, %v1238
    %v1736 = vpack.c.b16 %v1253, %v1246
    %v1737 = vpack.c.b16 %v1254, %v1247
    %v1738 = vpack.c.b16 %v1255, %v1248
    %v1739 = vpack.c.b16 %v1256, %v1249
    %v1740 = vpack.c.b16 %v1257, %v1250
    %v1741 = vpack.c.b16 %v1258, %v1251
    %v1742 = vpack.c.b16 %v1259, %v1252
    %v1743 = vpack.c.b16 %v1267, %v1260
    %v1744 = vpack.c.b16 %v1268, %v1261
    %v1745 = vpack.c.b16 %v1269, %v1262
    %v1746 = vpack.c.b16 %v1270, %v1263
    %v1747 = vpack.c.b16 %v1271, %v1264
    %v1748 = vpack.c.b16 %v1272, %v1265
    %v1749 = vpack.c.b16 %v1273, %v1266
    %v1750 = vpack.c.b16 %v1281, %v1274
    %v1751 = vpack.c.b16 %v1282, %v1275
    %v1752 = vpack.c.b16 %v1283, %v1276
    %v1753 = vpack.c.b16 %v1284, %v1277
    %v1754 = vpack.c.b16 %v1285, %v1278
    %v1755 = vpack.c.b16 %v1286, %v1279
    %v1756 = vpack.c.b16 %v1287, %v1280
    %v1757 = vpack.c.b16 %v1295, %v1288
    %v1758 = vpack.c.b16 %v1296, %v1289
    %v1759 = vpack.c.b16 %v1297, %v1290
    %v1760 = vpack.c.b16 %v1298, %v1291
    %v1761 = vpack.c.b16 %v1299, %v1292
    %v1762 = vpack.c.b16 %v1300, %v1293
    %v1763 = vpack.c.b16 %v1301, %v1294
    %v1764 = vpack.c.b16 %v1309, %v1302
    %v1765 = vpack.c.b16 %v1310, %v1303
    %v1766 = vpack.c.b16 %v1311, %v1304
    %v1767 = vpack.c.b16 %v1312, %v1305
    %v1768 = vpack.c.b16 %v1313, %v1306
    %v1769 = vpack.c.b16 %v1314, %v1307
    %v1770 = vpack.c.b16 %v1315, %v1308
    %v1771 = vpack.c.b16 %v1323, %v1316
    %v1772 = vpack.c.b16 %v1324, %v1317
    %v1773 = vpack.c.b16 %v1325, %v1318
    %v1774 = vpack.c.b16 %v1326, %v1319
    %v1775 = vpack.c.b16 %v1327, %v1320
    %v1776 = vpack.c.b16 %v1328, %v1321
    %v1777 = vpack.c.b16 %v1329, %v1322
    %v1778 = vpack.c.b16 %v1337, %v1330
    %v1779 = vpack.c.b16 %v1338, %v1331
    %v1780 = vpack.c.b16 %v1339, %v1332
    %v1781 = vpack.c.b16 %v1340, %v1333
    %v1782 = vpack.c.b16 %v1341, %v1334
    %v1783 = vpack.c.b16 %v1342, %v1335
    %v1784 = vpack.c.b16 %v1343, %v1336
    %v1785 = vpack.c.b16 %v1351, %v1344
    %v1786 = vpack.c.b16 %v1352, %v1345
    %v1787 = vpack.c.b16 %v1353, %v1346
    %v1788 = vpack.c.b16 %v1354, %v1347
    %v1789 = vpack.c.b16 %v1355, %v1348
    %v1790 = vpack.c.b16 %v1356, %v1349
    %v1791 = vpack.c.b16 %v1357, %v1350
    %v1792 = vpack.c.b16 %v1365, %v1358
    %v1793 = vpack.c.b16 %v1366, %v1359
    %v1794 = vpack.c.b16 %v1367, %v1360
    %v1795 = vpack.c.b16 %v1368, %v1361
    %v1796 = vpack.c.b16 %v1369, %v1362
    %v1797 = vpack.c.b16 %v1370, %v1363
    %v1798 = vpack.c.b16 %v1371, %v1364
    %v1799 = vpack.c.b16 %v1379, %v1372
    %v1800 = vpack.c.b16 %v1380, %v1373
    %v1801 = vpack.c.b16 %v1381, %v1374
    %v1802 = vpack.c.b16 %v1382, %v1375
    %v1803 = vpack.c.b16 %v1383, %v1376
    %v1804 = vpack.c.b16 %v1384, %v1377
    %v1805 = vpack.c.b16 %v1385, %v1378
    %v1806 = vpack.c.b16 %v1393, %v1386
    %v1807 = vpack.c.b16 %v1394, %v1387
    %v1808 = vpack.c.b16 %v1395, %v1388
    %v1809 = vpack.c.b16 %v1396, %v1389
    %v1810 = vpack.c.b16 %v1397, %v1390
    %v1811 = vpack.c.b16 %v1398, %v1391
    %v1812 = vpack.c.b16 %v1399, %v1392
    %v1813 = vpack.c.b16 %v1407, %v1400
    %v1814 = vpack.c.b16 %v1408, %v1401
    %v1815 = vpack.c.b16 %v1409, %v1402
    %v1816 = vpack.c.b16 %v1410, %v1403
    %v1817 = vpack.c.b16 %v1411, %v1404
    %v1818 = vpack.c.b16 %v1412, %v1405
    %v1819 = vpack.c.b16 %v1413, %v1406
    %v1820 = vpack.c.b16 %v1421, %v1414
    %v1821 = vpack.c.b16 %v1422, %v1415
    %v1822 = vpack.c.b16 %v1423, %v1416
    %v1823 = vpack.c.b16 %v1424, %v1417
    %v1824 = vpack.c.b16 %v1425, %v1418
    %v1825 = vpack.c.b16 %v1426, %v1419
    %v1826 = vpack.c.b16 %v1427, %v1420
    %v1827 = vpack.c.b16 %v1435, %v1428
    %v1828 = vpack.c.b16 %v1436, %v1429
    %v1829 = vpack.c.b16 %v1437, %v1430
    %v1830 = vpack.c.b16 %v1438, %v1431
    %v1831 = vpack.c.b16 %v1439, %v1432
    %v1832 = vpack.c.b16 %v1440, %v1433
    %v1833 = vpack.c.b16 %v1441, %v1434
    %v1834 = vpack.c.b16 %v1449, %v1442
    %v1835 = vpack.c.b16 %v1450, %v1443
    %v1836 = vpack.c.b16 %v1451, %v1444
    %v1837 = vpack.c.b16 %v1452, %v1445
    %v1838 = vpack.c.b16 %v1453, %v1446
    %v1839 = vpack.c.b16 %v1454, %v1447
    %v1840 = vpack.c.b16 %v1455, %v1448
    %v1841 = vpack.c.b16 %v1463, %v1456
    %v1842 = vpack.c.b16 %v1464, %v1457
    %v1843 = vpack.c.b16 %v1465, %v1458
    %v1844 = vpack.c.b16 %v1466, %v1459
    %v1845 = vpack.c.b16 %v1467, %v1460
    %v1846 = vpack.c.b16 %v1468, %v1461
    %v1847 = vpack.c.b16 %v1469, %v1462
    %v1848 = vpack.c.b16 %v1477, %v1470
    %v1849 = vpack.c.b16 %v1478, %v1471
    %v1850 = vpack.c.b16 %v1479, %v1472
    %v1851 = vpack.c.b16 %v1480, %v1473
    %v1852 = vpack.c.b16 %v1481, %v1474
    %v1853 = vpack.c.b16 %v1482, %v1475
    %v1854 = vpack.c.b16 %v1483, %v1476
    %v1855 = vpack.c.b16 %v1491, %v1484
    %v1856 = vpack.c.b16 %v1492, %v1485
    %v1857 = vpack.c.b16 %v1493, %v1486
    %v1858 = vpack.c.b16 %v1494, %v1487
    %v1859 = vpack.c.b16 %v1495, %v1488
    %v1860 = vpack.c.b16 %v1496, %v1489
    %v1861 = vpack.c.b16 %v1497, %v1490
    %v1862 = vpack.c.b16 %v1505, %v1498
    %v1863 = vpack.c.b16 %v1506, %v1499
    %v1864 = vpack.c.b16 %v1507, %v1500
    %v1865 = vpack.c.b16 %v1508, %v1501
    %v1866 = vpack.c.b16 %v1509, %v1502
    %v1867 = vpack.c.b16 %v1510, %v1503
    %v1868 = vpack.c.b16 %v1511, %v1504
    %v1869 = vpack.c.b16 %v1519, %v1512
    %v1870 = vpack.c.b16 %v1520, %v1513
    %v1871 = vpack.c.b16 %v1521, %v1514
    %v1872 = vpack.c.b16 %v1522, %v1515
    %v1873 = vpack.c.b16 %v1523, %v1516
    %v1874 = vpack.c.b16 %v1524, %v1517
    %v1875 = vpack.c.b16 %v1525, %v1518
    %v1876 = vpack.c.b16 %v1533, %v1526
    %v1877 = vpack.c.b16 %v1534, %v1527
    %v1878 = vpack.c.b16 %v1535, %v1528
    %v1879 = vpack.c.b16 %v1536, %v1529
    %v1880 = vpack.c.b16 %v1537, %v1530
    %v1881 = vpack.c.b16 %v1538, %v1531
    %v1882 = vpack.c.b16 %v1539, %v1532
    %v1883 = vpack.c.b16 %v1547, %v1540
    %v1884 = vpack.c.b16 %v1548, %v1541
    %v1885 = vpack.c.b16 %v1549, %v1542
    %v1886 = vpack.c.b16 %v1550, %v1543
    %v1887 = vpack.c.b16 %v1551, %v1544
    %v1888 = vpack.c.b16 %v1552, %v1545
    %v1889 = vpack.c.b16 %v1553, %v1546
    %2226 = vmatprep.subr.bf16.mxu0 %v1604
    %2227 = vmatpush1.bf16.msra.mxu0 %v1603
    %2228 = vmatprep.subr.bf16.mxu0 %v1597
    %2229 = vmatpush1.bf16.msra.mxu0 %v1596
    %2230 = vmatprep.subr.bf16.mxu0 %v1590
    %2231 = vmatpush1.bf16.msra.mxu0 %v1589
    %2232 = vmatprep.subr.bf16.mxu0 %v1583
    %2233 = vmatpush1.bf16.msra.mxu0 %v1582
    %2234 = vmatprep.subr.bf16.mxu0 %v1576
    %2235 = vmatpush1.bf16.msra.mxu0 %v1575
    %2236 = vmatprep.subr.bf16.mxu0 %v1569
    %2237 = vmatpush1.bf16.msra.mxu0 %v1568
    %2238 = vmatprep.subr.bf16.mxu0 %v1562
    %2239 = vmatpush1.bf16.msra.mxu0 %v1561
    %2240 = vmatprep.subr.bf16.mxu0 %v1555
    %2241 = vmatpush1.bf16.msra.mxu0 %v1554
    %2242 = vmatprep.subr.bf16.mxu0 %v1660
    %2243 = vmatpush2.bf16.msra.mxu0 %v1659
    %2244 = vmatprep.subr.bf16.mxu0 %v1653
    %2245 = vmatpush2.bf16.msra.mxu0 %v1652
    %2246 = vmatprep.subr.bf16.mxu0 %v1646
    %2247 = vmatpush2.bf16.msra.mxu0 %v1645
    %2248 = vmatprep.subr.bf16.mxu0 %v1639
    %2249 = vmatpush2.bf16.msra.mxu0 %v1638
    %2250 = vmatprep.subr.bf16.mxu0 %v1632
    %2251 = vmatpush2.bf16.msra.mxu0 %v1631
    %2252 = vmatprep.subr.bf16.mxu0 %v1625
    %2253 = vmatpush2.bf16.msra.mxu0 %v1624
    %2254 = vmatprep.subr.bf16.mxu0 %v1618
    %2255 = vmatpush2.bf16.msra.mxu0 %v1617
    %2256 = vmatprep.subr.bf16.mxu0 %v1611
    %2257 = vmatpush2.bf16.msra.mxu0 %v1610
    %2258 = vmatprep.mubr.bf16.mxu0 %v482
    %2259 = vmatmul.mubr.bf16.gmra.mxu0 %v468
    %v2260 = vpop.f32.mrf.mxu0
    %v2261 = vadd.f32 %v412, %v2260
    %v2262 = vpop.f32.mrf.mxu0
    %v2263 = vadd.f32 %v416, %v2262
    %v2264 = vpop.f32.mrf.mxu0
    %v2265 = vpop.f32.mrf.mxu0
    %2266 = vdwg.mxu0
    %2267 = vmatprep.subr.bf16.mxu0 %v1716
    %2268 = vmatpush1.bf16.msra.mxu0 %v1715
    %2269 = vmatprep.subr.bf16.mxu0 %v1709
    %2270 = vmatpush1.bf16.msra.mxu0 %v1708
    %2271 = vmatprep.subr.bf16.mxu0 %v1702
    %2272 = vmatpush1.bf16.msra.mxu0 %v1701
    %2273 = vmatprep.subr.bf16.mxu0 %v1695
    %2274 = vmatpush1.bf16.msra.mxu0 %v1694
    %2275 = vmatprep.subr.bf16.mxu0 %v1688
    %2276 = vmatpush1.bf16.msra.mxu0 %v1687
    %2277 = vmatprep.subr.bf16.mxu0 %v1681
    %2278 = vmatpush1.bf16.msra.mxu0 %v1680
    %2279 = vmatprep.subr.bf16.mxu0 %v1674
    %2280 = vmatpush1.bf16.msra.mxu0 %v1673
    %2281 = vmatprep.subr.bf16.mxu0 %v1667
    %2282 = vmatpush1.bf16.msra.mxu0 %v1666
    %2283 = vmatprep.subr.bf16.mxu0 %v1772
    %2284 = vmatpush2.bf16.msra.mxu0 %v1771
    %2285 = vmatprep.subr.bf16.mxu0 %v1765
    %2286 = vmatpush2.bf16.msra.mxu0 %v1764
    %2287 = vmatprep.subr.bf16.mxu0 %v1758
    %2288 = vmatpush2.bf16.msra.mxu0 %v1757
    %2289 = vmatprep.subr.bf16.mxu0 %v1751
    %2290 = vmatpush2.bf16.msra.mxu0 %v1750
    %2291 = vmatprep.subr.bf16.mxu0 %v1744
    %2292 = vmatpush2.bf16.msra.mxu0 %v1743
    %2293 = vmatprep.subr.bf16.mxu0 %v1737
    %2294 = vmatpush2.bf16.msra.mxu0 %v1736
    %2295 = vmatprep.subr.bf16.mxu0 %v1730
    %2296 = vmatpush2.bf16.msra.mxu0 %v1729
    %2297 = vmatprep.subr.bf16.mxu0 %v1723
    %2298 = vmatpush2.bf16.msra.mxu0 %v1722
    %2299 = vmatprep.mubr.bf16.mxu0 %v491
    %2300 = vmatmul.mubr.bf16.gmra.mxu0 %v490
    %v2301 = vpop.f32.mrf.mxu0
    %v2302 = vadd.f32 %v2261, %v2301
    %v2303 = vpop.f32.mrf.mxu0
    %v2304 = vadd.f32 %v2263, %v2303
    %v2305 = vpop.f32.mrf.mxu0
    %v2306 = vpop.f32.mrf.mxu0
    %2307 = vdwg.mxu0
    %2308 = vmatprep.subr.bf16.mxu0 %v1828
    %2309 = vmatpush1.bf16.msra.mxu0 %v1827
    %2310 = vmatprep.subr.bf16.mxu0 %v1821
    %2311 = vmatpush1.bf16.msra.mxu0 %v1820
    %2312 = vmatprep.subr.bf16.mxu0 %v1814
    %2313 = vmatpush1.bf16.msra.mxu0 %v1813
    %2314 = vmatprep.subr.bf16.mxu0 %v1807
    %2315 = vmatpush1.bf16.msra.mxu0 %v1806
    %2316 = vmatprep.subr.bf16.mxu0 %v1800
    %2317 = vmatpush1.bf16.msra.mxu0 %v1799
    %2318 = vmatprep.subr.bf16.mxu0 %v1793
    %2319 = vmatpush1.bf16.msra.mxu0 %v1792
    %2320 = vmatprep.subr.bf16.mxu0 %v1786
    %2321 = vmatpush1.bf16.msra.mxu0 %v1785
    %2322 = vmatprep.subr.bf16.mxu0 %v1779
    %2323 = vmatpush1.bf16.msra.mxu0 %v1778
    %2324 = vmatprep.subr.bf16.mxu0 %v1884
    %2325 = vmatpush2.bf16.msra.mxu0 %v1883
    %2326 = vmatprep.subr.bf16.mxu0 %v1877
    %2327 = vmatpush2.bf16.msra.mxu0 %v1876
    %2328 = vmatprep.subr.bf16.mxu0 %v1870
    %2329 = vmatpush2.bf16.msra.mxu0 %v1869
    %2330 = vmatprep.subr.bf16.mxu0 %v1863
    %2331 = vmatpush2.bf16.msra.mxu0 %v1862
    %2332 = vmatprep.subr.bf16.mxu0 %v1856
    %2333 = vmatpush2.bf16.msra.mxu0 %v1855
    %2334 = vmatprep.subr.bf16.mxu0 %v1849
    %2335 = vmatpush2.bf16.msra.mxu0 %v1848
    %2336 = vmatprep.subr.bf16.mxu0 %v1842
    %2337 = vmatpush2.bf16.msra.mxu0 %v1841
    %2338 = vmatprep.subr.bf16.mxu0 %v1835
    %2339 = vmatpush2.bf16.msra.mxu0 %v1834
    %2340 = vmatprep.mubr.bf16.mxu0 %v489
    %2341 = vmatmul.mubr.bf16.gmra.mxu0 %v475
    %v2342 = vpop.f32.mrf.mxu0
    %v2343 = vadd.f32 %v2302, %v2342
    %v2344 = vpop.f32.mrf.mxu0
    %v2345 = vadd.f32 %v2304, %v2344
    %v2346 = vpop.f32.mrf.mxu0
    %v2347 = vpop.f32.mrf.mxu0
    %2348 = vdwg.mxu0
    %2349 = vmatprep.subr.bf16.mxu0 %v1606
    %2350 = vmatpush1.bf16.msra.mxu0 %v1605
    %2351 = vmatprep.subr.bf16.mxu0 %v1599
    %2352 = vmatpush1.bf16.msra.mxu0 %v1598
    %2353 = vmatprep.subr.bf16.mxu0 %v1592
    %2354 = vmatpush1.bf16.msra.mxu0 %v1591
    %2355 = vmatprep.subr.bf16.mxu0 %v1585
    %2356 = vmatpush1.bf16.msra.mxu0 %v1584
    %2357 = vmatprep.subr.bf16.mxu0 %v1578
    %2358 = vmatpush1.bf16.msra.mxu0 %v1577
    %2359 = vmatprep.subr.bf16.mxu0 %v1571
    %2360 = vmatpush1.bf16.msra.mxu0 %v1570
    %2361 = vmatprep.subr.bf16.mxu0 %v1564
    %2362 = vmatpush1.bf16.msra.mxu0 %v1563
    %2363 = vmatprep.subr.bf16.mxu0 %v1557
    %2364 = vmatpush1.bf16.msra.mxu0 %v1556
    %2365 = vmatprep.subr.bf16.mxu0 %v1662
    %2366 = vmatpush2.bf16.msra.mxu0 %v1661
    %2367 = vmatprep.subr.bf16.mxu0 %v1655
    %2368 = vmatpush2.bf16.msra.mxu0 %v1654
    %2369 = vmatprep.subr.bf16.mxu0 %v1648
    %2370 = vmatpush2.bf16.msra.mxu0 %v1647
    %2371 = vmatprep.subr.bf16.mxu0 %v1641
    %2372 = vmatpush2.bf16.msra.mxu0 %v1640
    %2373 = vmatprep.subr.bf16.mxu0 %v1634
    %2374 = vmatpush2.bf16.msra.mxu0 %v1633
    %2375 = vmatprep.subr.bf16.mxu0 %v1627
    %2376 = vmatpush2.bf16.msra.mxu0 %v1626
    %2377 = vmatprep.subr.bf16.mxu0 %v1620
    %2378 = vmatpush2.bf16.msra.mxu0 %v1619
    %2379 = vmatprep.subr.bf16.mxu0 %v1613
    %2380 = vmatpush2.bf16.msra.mxu0 %v1612
    %2381 = vmatprep.mubr.bf16.mxu0 %v482
    %2382 = vmatmul.mubr.bf16.gmra.mxu0 %v468
    %v2383 = vpop.f32.mrf.mxu0
    %v2384 = vadd.f32 %v420, %v2383
    %v2385 = vpop.f32.mrf.mxu0
    %v2386 = vadd.f32 %v424, %v2385
    %v2387 = vpop.f32.mrf.mxu0
    %v2388 = vpop.f32.mrf.mxu0
    %2389 = vdwg.mxu0
    %2390 = vmatprep.subr.bf16.mxu0 %v1718
    %2391 = vmatpush1.bf16.msra.mxu0 %v1717
    %2392 = vmatprep.subr.bf16.mxu0 %v1711
    %2393 = vmatpush1.bf16.msra.mxu0 %v1710
    %2394 = vmatprep.subr.bf16.mxu0 %v1704
    %2395 = vmatpush1.bf16.msra.mxu0 %v1703
    %2396 = vmatprep.subr.bf16.mxu0 %v1697
    %2397 = vmatpush1.bf16.msra.mxu0 %v1696
    %2398 = vmatprep.subr.bf16.mxu0 %v1690
    %2399 = vmatpush1.bf16.msra.mxu0 %v1689
    %2400 = vmatprep.subr.bf16.mxu0 %v1683
    %2401 = vmatpush1.bf16.msra.mxu0 %v1682
    %2402 = vmatprep.subr.bf16.mxu0 %v1676
    %2403 = vmatpush1.bf16.msra.mxu0 %v1675
    %2404 = vmatprep.subr.bf16.mxu0 %v1669
    %2405 = vmatpush1.bf16.msra.mxu0 %v1668
    %2406 = vmatprep.subr.bf16.mxu0 %v1774
    %2407 = vmatpush2.bf16.msra.mxu0 %v1773
    %2408 = vmatprep.subr.bf16.mxu0 %v1767
    %2409 = vmatpush2.bf16.msra.mxu0 %v1766
    %2410 = vmatprep.subr.bf16.mxu0 %v1760
    %2411 = vmatpush2.bf16.msra.mxu0 %v1759
    %2412 = vmatprep.subr.bf16.mxu0 %v1753
    %2413 = vmatpush2.bf16.msra.mxu0 %v1752
    %2414 = vmatprep.subr.bf16.mxu0 %v1746
    %2415 = vmatpush2.bf16.msra.mxu0 %v1745
    %2416 = vmatprep.subr.bf16.mxu0 %v1739
    %2417 = vmatpush2.bf16.msra.mxu0 %v1738
    %2418 = vmatprep.subr.bf16.mxu0 %v1732
    %2419 = vmatpush2.bf16.msra.mxu0 %v1731
    %2420 = vmatprep.subr.bf16.mxu0 %v1725
    %2421 = vmatpush2.bf16.msra.mxu0 %v1724
    %2422 = vmatprep.mubr.bf16.mxu0 %v491
    %2423 = vmatmul.mubr.bf16.gmra.mxu0 %v490
    %v2424 = vpop.f32.mrf.mxu0
    %v2425 = vadd.f32 %v2384, %v2424
    %v2426 = vpop.f32.mrf.mxu0
    %v2427 = vadd.f32 %v2386, %v2426
    %v2428 = vpop.f32.mrf.mxu0
    %v2429 = vpop.f32.mrf.mxu0
    %2430 = vdwg.mxu0
    %2431 = vmatprep.subr.bf16.mxu0 %v1830
    %2432 = vmatpush1.bf16.msra.mxu0 %v1829
    %2433 = vmatprep.subr.bf16.mxu0 %v1823
    %2434 = vmatpush1.bf16.msra.mxu0 %v1822
    %2435 = vmatprep.subr.bf16.mxu0 %v1816
    %2436 = vmatpush1.bf16.msra.mxu0 %v1815
    %2437 = vmatprep.subr.bf16.mxu0 %v1809
    %2438 = vmatpush1.bf16.msra.mxu0 %v1808
    %2439 = vmatprep.subr.bf16.mxu0 %v1802
    %2440 = vmatpush1.bf16.msra.mxu0 %v1801
    %2441 = vmatprep.subr.bf16.mxu0 %v1795
    %2442 = vmatpush1.bf16.msra.mxu0 %v1794
    %2443 = vmatprep.subr.bf16.mxu0 %v1788
    %2444 = vmatpush1.bf16.msra.mxu0 %v1787
    %2445 = vmatprep.subr.bf16.mxu0 %v1781
    %2446 = vmatpush1.bf16.msra.mxu0 %v1780
    %2447 = vmatprep.subr.bf16.mxu0 %v1886
    %2448 = vmatpush2.bf16.msra.mxu0 %v1885
    %2449 = vmatprep.subr.bf16.mxu0 %v1879
    %2450 = vmatpush2.bf16.msra.mxu0 %v1878
    %2451 = vmatprep.subr.bf16.mxu0 %v1872
    %2452 = vmatpush2.bf16.msra.mxu0 %v1871
    %2453 = vmatprep.subr.bf16.mxu0 %v1865
    %2454 = vmatpush2.bf16.msra.mxu0 %v1864
    %2455 = vmatprep.subr.bf16.mxu0 %v1858
    %2456 = vmatpush2.bf16.msra.mxu0 %v1857
    %2457 = vmatprep.subr.bf16.mxu0 %v1851
    %2458 = vmatpush2.bf16.msra.mxu0 %v1850
    %2459 = vmatprep.subr.bf16.mxu0 %v1844
    %2460 = vmatpush2.bf16.msra.mxu0 %v1843
    %2461 = vmatprep.subr.bf16.mxu0 %v1837
    %2462 = vmatpush2.bf16.msra.mxu0 %v1836
    %2463 = vmatprep.mubr.bf16.mxu0 %v489
    %2464 = vmatmul.mubr.bf16.gmra.mxu0 %v475
    %v2465 = vpop.f32.mrf.mxu0
    %v2466 = vadd.f32 %v2425, %v2465
    %v2467 = vpop.f32.mrf.mxu0
    %v2468 = vadd.f32 %v2427, %v2467
    %v2469 = vpop.f32.mrf.mxu0
    %v2470 = vpop.f32.mrf.mxu0
    %2471 = vdwg.mxu0
    %2472 = vmatprep.subr.bf16.mxu0 %v1608
    %2473 = vmatpush1.bf16.msra.mxu0 %v1607
    %2474 = vmatprep.subr.bf16.mxu0 %v1601
    %2475 = vmatpush1.bf16.msra.mxu0 %v1600
    %2476 = vmatprep.subr.bf16.mxu0 %v1594
    %2477 = vmatpush1.bf16.msra.mxu0 %v1593
    %2478 = vmatprep.subr.bf16.mxu0 %v1587
    %2479 = vmatpush1.bf16.msra.mxu0 %v1586
    %2480 = vmatprep.subr.bf16.mxu0 %v1580
    %2481 = vmatpush1.bf16.msra.mxu0 %v1579
    %2482 = vmatprep.subr.bf16.mxu0 %v1573
    %2483 = vmatpush1.bf16.msra.mxu0 %v1572
    %2484 = vmatprep.subr.bf16.mxu0 %v1566
    %2485 = vmatpush1.bf16.msra.mxu0 %v1565
    %2486 = vmatprep.subr.bf16.mxu0 %v1559
    %2487 = vmatpush1.bf16.msra.mxu0 %v1558
    %2488 = vmatprep.subr.bf16.mxu0 %v1664
    %2489 = vmatpush2.bf16.msra.mxu0 %v1663
    %2490 = vmatprep.subr.bf16.mxu0 %v1657
    %2491 = vmatpush2.bf16.msra.mxu0 %v1656
    %2492 = vmatprep.subr.bf16.mxu0 %v1650
    %2493 = vmatpush2.bf16.msra.mxu0 %v1649
    %2494 = vmatprep.subr.bf16.mxu0 %v1643
    %2495 = vmatpush2.bf16.msra.mxu0 %v1642
    %2496 = vmatprep.subr.bf16.mxu0 %v1636
    %2497 = vmatpush2.bf16.msra.mxu0 %v1635
    %2498 = vmatprep.subr.bf16.mxu0 %v1629
    %2499 = vmatpush2.bf16.msra.mxu0 %v1628
    %2500 = vmatprep.subr.bf16.mxu0 %v1622
    %2501 = vmatpush2.bf16.msra.mxu0 %v1621
    %2502 = vmatprep.subr.bf16.mxu0 %v1615
    %2503 = vmatpush2.bf16.msra.mxu0 %v1614
    %2504 = vmatprep.mubr.bf16.mxu0 %v482
    %2505 = vmatmul.mubr.bf16.gmra.mxu0 %v468
    %v2506 = vpop.f32.mrf.mxu0
    %v2507 = vadd.f32 %v428, %v2506
    %v2508 = vpop.f32.mrf.mxu0
    %v2509 = vadd.f32 %v432, %v2508
    %v2510 = vpop.f32.mrf.mxu0
    %v2511 = vpop.f32.mrf.mxu0
    %2512 = vdwg.mxu0
    %2513 = vmatprep.subr.bf16.mxu0 %v1720
    %2514 = vmatpush1.bf16.msra.mxu0 %v1719
    %2515 = vmatprep.subr.bf16.mxu0 %v1713
    %2516 = vmatpush1.bf16.msra.mxu0 %v1712
    %2517 = vmatprep.subr.bf16.mxu0 %v1706
    %2518 = vmatpush1.bf16.msra.mxu0 %v1705
    %2519 = vmatprep.subr.bf16.mxu0 %v1699
    %2520 = vmatpush1.bf16.msra.mxu0 %v1698
    %2521 = vmatprep.subr.bf16.mxu0 %v1692
    %2522 = vmatpush1.bf16.msra.mxu0 %v1691
    %2523 = vmatprep.subr.bf16.mxu0 %v1685
    %2524 = vmatpush1.bf16.msra.mxu0 %v1684
    %2525 = vmatprep.subr.bf16.mxu0 %v1678
    %2526 = vmatpush1.bf16.msra.mxu0 %v1677
    %2527 = vmatprep.subr.bf16.mxu0 %v1671
    %2528 = vmatpush1.bf16.msra.mxu0 %v1670
    %2529 = vmatprep.subr.bf16.mxu0 %v1776
    %2530 = vmatpush2.bf16.msra.mxu0 %v1775
    %2531 = vmatprep.subr.bf16.mxu0 %v1769
    %2532 = vmatpush2.bf16.msra.mxu0 %v1768
    %2533 = vmatprep.subr.bf16.mxu0 %v1762
    %2534 = vmatpush2.bf16.msra.mxu0 %v1761
    %2535 = vmatprep.subr.bf16.mxu0 %v1755
    %2536 = vmatpush2.bf16.msra.mxu0 %v1754
    %2537 = vmatprep.subr.bf16.mxu0 %v1748
    %2538 = vmatpush2.bf16.msra.mxu0 %v1747
    %2539 = vmatprep.subr.bf16.mxu0 %v1741
    %2540 = vmatpush2.bf16.msra.mxu0 %v1740
    %2541 = vmatprep.subr.bf16.mxu0 %v1734
    %2542 = vmatpush2.bf16.msra.mxu0 %v1733
    %2543 = vmatprep.subr.bf16.mxu0 %v1727
    %2544 = vmatpush2.bf16.msra.mxu0 %v1726
    %2545 = vmatprep.mubr.bf16.mxu0 %v491
    %2546 = vmatmul.mubr.bf16.gmra.mxu0 %v490
    %v2547 = vpop.f32.mrf.mxu0
    %v2548 = vadd.f32 %v2507, %v2547
    %v2549 = vpop.f32.mrf.mxu0
    %v2550 = vadd.f32 %v2509, %v2549
    %v2551 = vpop.f32.mrf.mxu0
    %v2552 = vpop.f32.mrf.mxu0
    %2553 = vdwg.mxu0
    %2554 = vmatprep.subr.bf16.mxu0 %v1832
    %2555 = vmatpush1.bf16.msra.mxu0 %v1831
    %2556 = vmatprep.subr.bf16.mxu0 %v1825
    %2557 = vmatpush1.bf16.msra.mxu0 %v1824
    %2558 = vmatprep.subr.bf16.mxu0 %v1818
    %2559 = vmatpush1.bf16.msra.mxu0 %v1817
    %2560 = vmatprep.subr.bf16.mxu0 %v1811
    %2561 = vmatpush1.bf16.msra.mxu0 %v1810
    %2562 = vmatprep.subr.bf16.mxu0 %v1804
    %2563 = vmatpush1.bf16.msra.mxu0 %v1803
    %2564 = vmatprep.subr.bf16.mxu0 %v1797
    %2565 = vmatpush1.bf16.msra.mxu0 %v1796
    %2566 = vmatprep.subr.bf16.mxu0 %v1790
    %2567 = vmatpush1.bf16.msra.mxu0 %v1789
    %2568 = vmatprep.subr.bf16.mxu0 %v1783
    %2569 = vmatpush1.bf16.msra.mxu0 %v1782
    %2570 = vmatprep.subr.bf16.mxu0 %v1888
    %2571 = vmatpush2.bf16.msra.mxu0 %v1887
    %2572 = vmatprep.subr.bf16.mxu0 %v1881
    %2573 = vmatpush2.bf16.msra.mxu0 %v1880
    %2574 = vmatprep.subr.bf16.mxu0 %v1874
    %2575 = vmatpush2.bf16.msra.mxu0 %v1873
    %2576 = vmatprep.subr.bf16.mxu0 %v1867
    %2577 = vmatpush2.bf16.msra.mxu0 %v1866
    %2578 = vmatprep.subr.bf16.mxu0 %v1860
    %2579 = vmatpush2.bf16.msra.mxu0 %v1859
    %2580 = vmatprep.subr.bf16.mxu0 %v1853
    %2581 = vmatpush2.bf16.msra.mxu0 %v1852
    %2582 = vmatprep.subr.bf16.mxu0 %v1846
    %2583 = vmatpush2.bf16.msra.mxu0 %v1845
    %2584 = vmatprep.subr.bf16.mxu0 %v1839
    %2585 = vmatpush2.bf16.msra.mxu0 %v1838
    %2586 = vmatprep.mubr.bf16.mxu0 %v489
    %2587 = vmatmul.mubr.bf16.gmra.mxu0 %v475
    %v2588 = vpop.f32.mrf.mxu0
    %v2589 = vadd.f32 %v2548, %v2588
    %v2590 = vpop.f32.mrf.mxu0
    %v2591 = vadd.f32 %v2550, %v2590
    %v2592 = vpop.f32.mrf.mxu0
    %v2593 = vpop.f32.mrf.mxu0
    %2594 = vdwg.mxu0
    %2595 = vmatprep.subr.bf16.mxu0 0
    %2596 = vmatpush1.bf16.msra.mxu0 %v1609
    %2597 = vmatprep.subr.bf16.mxu0 0
    %2598 = vmatpush1.bf16.msra.mxu0 %v1602
    %2599 = vmatprep.subr.bf16.mxu0 0
    %2600 = vmatpush1.bf16.msra.mxu0 %v1595
    %2601 = vmatprep.subr.bf16.mxu0 0
    %2602 = vmatpush1.bf16.msra.mxu0 %v1588
    %2603 = vmatprep.subr.bf16.mxu0 0
    %2604 = vmatpush1.bf16.msra.mxu0 %v1581
    %2605 = vmatprep.subr.bf16.mxu0 0
    %2606 = vmatpush1.bf16.msra.mxu0 %v1574
    %2607 = vmatprep.subr.bf16.mxu0 0
    %2608 = vmatpush1.bf16.msra.mxu0 %v1567
    %2609 = vmatprep.subr.bf16.mxu0 0
    %2610 = vmatpush1.bf16.msra.mxu0 %v1560
    %2611 = vmatprep.subr.bf16.mxu0 0
    %2612 = vmatpush2.bf16.msra.mxu0 %v1665
    %2613 = vmatprep.subr.bf16.mxu0 0
    %2614 = vmatpush2.bf16.msra.mxu0 %v1658
    %2615 = vmatprep.subr.bf16.mxu0 0
    %2616 = vmatpush2.bf16.msra.mxu0 %v1651
    %2617 = vmatprep.subr.bf16.mxu0 0
    %2618 = vmatpush2.bf16.msra.mxu0 %v1644
    %2619 = vmatprep.subr.bf16.mxu0 0
    %2620 = vmatpush2.bf16.msra.mxu0 %v1637
    %2621 = vmatprep.subr.bf16.mxu0 0
    %2622 = vmatpush2.bf16.msra.mxu0 %v1630
    %2623 = vmatprep.subr.bf16.mxu0 0
    %2624 = vmatpush2.bf16.msra.mxu0 %v1623
    %2625 = vmatprep.subr.bf16.mxu0 0
    %2626 = vmatpush2.bf16.msra.mxu0 %v1616
    %2627 = vmatprep.mubr.bf16.mxu0 %v482
    %2628 = vmatmul.mubr.bf16.gmra.mxu0 %v468
    %v2629 = vpop.f32.mrf.mxu0
    %v2630 = vadd.f32 %v436, %v2629
    %v2631 = vpop.f32.mrf.mxu0
    %v2632 = vpop.f32.mrf.mxu0
    %v2633 = vpop.f32.mrf.mxu0
    %2634 = vdwg.mxu0
    %2635 = vmatprep.subr.bf16.mxu0 0
    %2636 = vmatpush1.bf16.msra.mxu0 %v1721
    %2637 = vmatprep.subr.bf16.mxu0 0
    %2638 = vmatpush1.bf16.msra.mxu0 %v1714
    %2639 = vmatprep.subr.bf16.mxu0 0
    %2640 = vmatpush1.bf16.msra.mxu0 %v1707
    %2641 = vmatprep.subr.bf16.mxu0 0
    %2642 = vmatpush1.bf16.msra.mxu0 %v1700
    %2643 = vmatprep.subr.bf16.mxu0 0
    %2644 = vmatpush1.bf16.msra.mxu0 %v1693
    %2645 = vmatprep.subr.bf16.mxu0 0
    %2646 = vmatpush1.bf16.msra.mxu0 %v1686
    %2647 = vmatprep.subr.bf16.mxu0 0
    %2648 = vmatpush1.bf16.msra.mxu0 %v1679
    %2649 = vmatprep.subr.bf16.mxu0 0
    %2650 = vmatpush1.bf16.msra.mxu0 %v1672
    %2651 = vmatprep.subr.bf16.mxu0 0
    %2652 = vmatpush2.bf16.msra.mxu0 %v1777
    %2653 = vmatprep.subr.bf16.mxu0 0
    %2654 = vmatpush2.bf16.msra.mxu0 %v1770
    %2655 = vmatprep.subr.bf16.mxu0 0
    %2656 = vmatpush2.bf16.msra.mxu0 %v1763
    %2657 = vmatprep.subr.bf16.mxu0 0
    %2658 = vmatpush2.bf16.msra.mxu0 %v1756
    %2659 = vmatprep.subr.bf16.mxu0 0
    %2660 = vmatpush2.bf16.msra.mxu0 %v1749
    %2661 = vmatprep.subr.bf16.mxu0 0
    %2662 = vmatpush2.bf16.msra.mxu0 %v1742
    %2663 = vmatprep.subr.bf16.mxu0 0
    %2664 = vmatpush2.bf16.msra.mxu0 %v1735
    %2665 = vmatprep.subr.bf16.mxu0 0
    %2666 = vmatpush2.bf16.msra.mxu0 %v1728
    %2667 = vmatprep.mubr.bf16.mxu0 %v491
    %2668 = vmatmul.mubr.bf16.gmra.mxu0 %v490
    %v2669 = vpop.f32.mrf.mxu0
    %v2670 = vadd.f32 %v2630, %v2669
    %v2671 = vpop.f32.mrf.mxu0
    %v2672 = vpop.f32.mrf.mxu0
    %v2673 = vpop.f32.mrf.mxu0
    %2674 = vdwg.mxu0
    %2675 = vmatprep.subr.bf16.mxu0 0
    %2676 = vmatpush1.bf16.msra.mxu0 %v1833
    %2677 = vmatprep.subr.bf16.mxu0 0
    %2678 = vmatpush1.bf16.msra.mxu0 %v1826
    %2679 = vmatprep.subr.bf16.mxu0 0
    %2680 = vmatpush1.bf16.msra.mxu0 %v1819
    %2681 = vmatprep.subr.bf16.mxu0 0
    %2682 = vmatpush1.bf16.msra.mxu0 %v1812
    %2683 = vmatprep.subr.bf16.mxu0 0
    %2684 = vmatpush1.bf16.msra.mxu0 %v1805
    %2685 = vmatprep.subr.bf16.mxu0 0
    %2686 = vmatpush1.bf16.msra.mxu0 %v1798
    %2687 = vmatprep.subr.bf16.mxu0 0
    %2688 = vmatpush1.bf16.msra.mxu0 %v1791
    %2689 = vmatprep.subr.bf16.mxu0 0
    %2690 = vmatpush1.bf16.msra.mxu0 %v1784
    %2691 = vmatprep.subr.bf16.mxu0 0
    %2692 = vmatpush2.bf16.msra.mxu0 %v1889
    %2693 = vmatprep.subr.bf16.mxu0 0
    %2694 = vmatpush2.bf16.msra.mxu0 %v1882
    %2695 = vmatprep.subr.bf16.mxu0 0
    %2696 = vmatpush2.bf16.msra.mxu0 %v1875
    %2697 = vmatprep.subr.bf16.mxu0 0
    %2698 = vmatpush2.bf16.msra.mxu0 %v1868
    %2699 = vmatprep.subr.bf16.mxu0 0
    %2700 = vmatpush2.bf16.msra.mxu0 %v1861
    %2701 = vmatprep.subr.bf16.mxu0 0
    %2702 = vmatpush2.bf16.msra.mxu0 %v1854
    %2703 = vmatprep.subr.bf16.mxu0 0
    %2704 = vmatpush2.bf16.msra.mxu0 %v1847
    %2705 = vmatprep.subr.bf16.mxu0 0
    %2706 = vmatpush2.bf16.msra.mxu0 %v1840
    %2707 = vmatprep.mubr.bf16.mxu0 %v489
    %2708 = vmatmul.mubr.bf16.gmra.mxu0 %v475
    %v2709 = vpop.f32.mrf.mxu0
    %v2710 = vadd.f32 %v2670, %v2709
    %v2711 = vpop.f32.mrf.mxu0
    %v2712 = vpop.f32.mrf.mxu0
    %v2713 = vpop.f32.mrf.mxu0
    %2714 = vdwg.mxu0
    %v2715 = vmax.f32 %v2343, 0.0
    %v2716 = vmax.f32 %v2345, 0.0
    %v2717 = vmax.f32 %v2466, 0.0
    %v2718 = vmax.f32 %v2468, 0.0
    %v2719 = vmax.f32 %v2589, 0.0
    %v2720 = vmax.f32 %v2591, 0.0
    %v2721 = vmax.f32 %v2710, 0.0
    %v2722 = vpack.c.bf16 %v2715, %v2715
    %v2723 = vpack.c.bf16 %v2716, %v2716
    %v2724 = vpack.c.bf16 %v2717, %v2717
    %v2725 = vpack.c.bf16 %v2718, %v2718
    %v2726 = vpack.c.bf16 %v2719, %v2719
    %v2727 = vpack.c.bf16 %v2720, %v2720
    %v2728 = vpack.c.bf16 %v2721, %v2721
    %v2729 = vld [vmem:[%s3] sm:$0xff]
    %v2730 = vld [vmem:[%s3 + $0x8] sm:$0xff]
    %v2731 = vld [vmem:[%s3 + $0x10] sm:$0xff]
    %v2732 = vld [vmem:[%s3 + $0x18] sm:$0xff]
    %v2733 = vld [vmem:[%s3 + $0x20] sm:$0xff]
    %v2734 = vld [vmem:[%s3 + $0x28] sm:$0xff]
    %v2735 = vld [vmem:[%s3 + $0x30] sm:$0xff]
    %v2736 = vld [vmem:[%s3 + $0x38] sm:$0xff]
    %v2737 = vld [vmem:[%s3 + $0x40] sm:$0xff]
    %v2738 = vld [vmem:[%s3 + $0x48] sm:$0xff]
    %v2739 = vld [vmem:[%s3 + $0x50] sm:$0xff]
    %v2740 = vld [vmem:[%s3 + $0x58] sm:$0xff]
    %v2741 = vld [vmem:[%s3 + $0x60] sm:$0xff]
    %v2742 = vld [vmem:[%s3 + $0x68] sm:$0xff]
    %v2743 = vld [vmem:[%s3 + $0x70] sm:$0xff]
    %v2744 = vld [vmem:[%s3 + $0x78] sm:$0xff]
    %v2745 = vld [vmem:[%s3 + $0x80] sm:$0xff]
    %v2746 = vld [vmem:[%s3 + $0x88] sm:$0xff]
    %v2747 = vld [vmem:[%s3 + $0x90] sm:$0xff]
    %v2748 = vld [vmem:[%s3 + $0x98] sm:$0xff]
    %v2749 = vld [vmem:[%s3 + $0xa0] sm:$0xff]
    %v2750 = vld [vmem:[%s3 + $0xa8] sm:$0xff]
    %v2751 = vld [vmem:[%s3 + $0xb0] sm:$0xff]
    %v2752 = vld [vmem:[%s3 + $0xb8] sm:$0xff]
    %v2753 = vld [vmem:[%s3 + $0xc0] sm:$0xff]
    %v2754 = vld [vmem:[%s3 + $0xc8] sm:$0xff]
    %v2755 = vld [vmem:[%s3 + $0xd0] sm:$0xff]
    %v2756 = vld [vmem:[%s3 + $0xd8] sm:$0xff]
    %v2757 = vld [vmem:[%s3 + $0xe0] sm:$0xff]
    %v2758 = vld [vmem:[%s3 + $0xe8] sm:$0xff]
    %v2759 = vld [vmem:[%s3 + $0xf0] sm:$0xff]
    %v2760 = vld [vmem:[%s3 + $0xf8] sm:$0xff]
    %v2761 = vld [vmem:[%s3 + $0x100] sm:$0xff]
    %v2762 = vld [vmem:[%s3 + $0x108] sm:$0xff]
    %v2763 = vld [vmem:[%s3 + $0x110] sm:$0xff]
    %v2764 = vld [vmem:[%s3 + $0x118] sm:$0xff]
    %v2765 = vld [vmem:[%s3 + $0x120] sm:$0xff]
    %v2766 = vld [vmem:[%s3 + $0x128] sm:$0xff]
    %v2767 = vld [vmem:[%s3 + $0x130] sm:$0xff]
    %v2768 = vld [vmem:[%s3 + $0x138] sm:$0xff]
    %v2769 = vld [vmem:[%s3 + $0x140] sm:$0xff]
    %v2770 = vld [vmem:[%s3 + $0x148] sm:$0xff]
    %v2771 = vld [vmem:[%s3 + $0x150] sm:$0xff]
    %v2772 = vld [vmem:[%s3 + $0x158] sm:$0xff]
    %v2773 = vld [vmem:[%s3 + $0x160] sm:$0xff]
    %v2774 = vld [vmem:[%s3 + $0x168] sm:$0xff]
    %v2775 = vld [vmem:[%s3 + $0x170] sm:$0xff]
    %v2776 = vld [vmem:[%s3 + $0x178] sm:$0xff]
    %v2777 = vld [vmem:[%s3 + $0x180] sm:$0xff]
    %v2778 = vld [vmem:[%s3 + $0x188] sm:$0xff]
    %v2779 = vld [vmem:[%s3 + $0x190] sm:$0xff]
    %v2780 = vld [vmem:[%s3 + $0x198] sm:$0xff]
    %v2781 = vld [vmem:[%s3 + $0x1a0] sm:$0xff]
    %v2782 = vld [vmem:[%s3 + $0x1a8] sm:$0xff]
    %v2783 = vld [vmem:[%s3 + $0x1b0] sm:$0xff]
    %v2784 = vld [vmem:[%s3 + $0x1b8] sm:$0xff]
    %v2785 = vld [vmem:[%s3 + $0x1c0] sm:$0xff]
    %v2786 = vld [vmem:[%s3 + $0x1c8] sm:$0xff]
    %v2787 = vld [vmem:[%s3 + $0x1d0] sm:$0xff]
    %v2788 = vld [vmem:[%s3 + $0x1d8] sm:$0xff]
    %v2789 = vld [vmem:[%s3 + $0x1e0] sm:$0xff]
    %v2790 = vld [vmem:[%s3 + $0x1e8] sm:$0xff]
    %v2791 = vld [vmem:[%s3 + $0x1f0] sm:$0xff]
    %v2792 = vld [vmem:[%s3 + $0x1f8] sm:$0xff]
    %v2793 = vld [vmem:[%s3 + $0x200] sm:$0xff]
    %v2794 = vld [vmem:[%s3 + $0x208] sm:$0xff]
    %v2795 = vld [vmem:[%s3 + $0x210] sm:$0xff]
    %v2796 = vld [vmem:[%s3 + $0x218] sm:$0xff]
    %v2797 = vld [vmem:[%s3 + $0x220] sm:$0xff]
    %v2798 = vld [vmem:[%s3 + $0x228] sm:$0xff]
    %v2799 = vld [vmem:[%s3 + $0x230] sm:$0xff]
    %v2800 = vld [vmem:[%s3 + $0x238] sm:$0xff]
    %v2801 = vld [vmem:[%s3 + $0x240] sm:$0xff]
    %v2802 = vld [vmem:[%s3 + $0x248] sm:$0xff]
    %v2803 = vld [vmem:[%s3 + $0x250] sm:$0xff]
    %v2804 = vld [vmem:[%s3 + $0x258] sm:$0xff]
    %v2805 = vld [vmem:[%s3 + $0x260] sm:$0xff]
    %v2806 = vld [vmem:[%s3 + $0x268] sm:$0xff]
    %v2807 = vld [vmem:[%s3 + $0x270] sm:$0xff]
    %v2808 = vld [vmem:[%s3 + $0x278] sm:$0xff]
    %v2809 = vld [vmem:[%s3 + $0x280] sm:$0xff]
    %v2810 = vld [vmem:[%s3 + $0x288] sm:$0xff]
    %v2811 = vld [vmem:[%s3 + $0x290] sm:$0xff]
    %v2812 = vld [vmem:[%s3 + $0x298] sm:$0xff]
    %v2813 = vld [vmem:[%s3 + $0x2a0] sm:$0xff]
    %v2814 = vld [vmem:[%s3 + $0x2a8] sm:$0xff]
    %v2815 = vld [vmem:[%s3 + $0x2b0] sm:$0xff]
    %v2816 = vld [vmem:[%s3 + $0x2b8] sm:$0xff]
    %v2817 = vld [vmem:[%s3 + $0x2c0] sm:$0xff]
    %v2818 = vld [vmem:[%s3 + $0x2c8] sm:$0xff]
    %v2819 = vld [vmem:[%s3 + $0x2d0] sm:$0xff]
    %v2820 = vld [vmem:[%s3 + $0x2d8] sm:$0xff]
    %v2821 = vld [vmem:[%s3 + $0x2e0] sm:$0xff]
    %v2822 = vld [vmem:[%s3 + $0x2e8] sm:$0xff]
    %v2823 = vld [vmem:[%s3 + $0x2f0] sm:$0xff]
    %v2824 = vld [vmem:[%s3 + $0x2f8] sm:$0xff]
    %v2825 = vld [vmem:[%s3 + $0x300] sm:$0xff]
    %v2826 = vld [vmem:[%s3 + $0x308] sm:$0xff]
    %v2827 = vld [vmem:[%s3 + $0x310] sm:$0xff]
    %v2828 = vld [vmem:[%s3 + $0x318] sm:$0xff]
    %v2829 = vld [vmem:[%s3 + $0x320] sm:$0xff]
    %v2830 = vld [vmem:[%s3 + $0x328] sm:$0xff]
    %v2831 = vld [vmem:[%s3 + $0x330] sm:$0xff]
    %v2832 = vld [vmem:[%s3 + $0x338] sm:$0xff]
    %v2833 = vld [vmem:[%s3 + $0x340] sm:$0xff]
    %v2834 = vld [vmem:[%s3 + $0x348] sm:$0xff]
    %v2835 = vld [vmem:[%s3 + $0x350] sm:$0xff]
    %v2836 = vld [vmem:[%s3 + $0x358] sm:$0xff]
    %v2837 = vld [vmem:[%s3 + $0x360] sm:$0xff]
    %v2838 = vld [vmem:[%s3 + $0x368] sm:$0xff]
    %v2839 = vld [vmem:[%s3 + $0x370] sm:$0xff]
    %v2840 = vld [vmem:[%s3 + $0x378] sm:$0xff]
    %v2841 = vld [vmem:[%s3 + $0x380] sm:$0xff]
    %v2842 = vld [vmem:[%s3 + $0x388] sm:$0xff]
    %v2843 = vld [vmem:[%s3 + $0x390] sm:$0xff]
    %v2844 = vld [vmem:[%s3 + $0x398] sm:$0xff]
    %v2845 = vld [vmem:[%s3 + $0x3a0] sm:$0xff]
    %v2846 = vld [vmem:[%s3 + $0x3a8] sm:$0xff]
    %v2847 = vld [vmem:[%s3 + $0x3b0] sm:$0xff]
    %v2848 = vld [vmem:[%s3 + $0x3b8] sm:$0xff]
    %v2849 = vld [vmem:[%s3 + $0x3c0] sm:$0xff]
    %v2850 = vld [vmem:[%s3 + $0x3c8] sm:$0xff]
    %v2851 = vld [vmem:[%s3 + $0x3d0] sm:$0xff]
    %v2852 = vld [vmem:[%s3 + $0x3d8] sm:$0xff]
    %v2853 = vld [vmem:[%s3 + $0x3e0] sm:$0xff]
    %v2854 = vld [vmem:[%s3 + $0x3e8] sm:$0xff]
    %v2855 = vld [vmem:[%s3 + $0x3f0] sm:$0xff]
    %v2856 = vld [vmem:[%s3 + $0x3f8] sm:$0xff]
    %v2857 = vld [vmem:[%s3 + $0x400] sm:$0xff]
    %v2858 = vld [vmem:[%s3 + $0x408] sm:$0xff]
    %v2859 = vld [vmem:[%s3 + $0x410] sm:$0xff]
    %v2860 = vld [vmem:[%s3 + $0x418] sm:$0xff]
    %v2861 = vld [vmem:[%s3 + $0x420] sm:$0xff]
    %v2862 = vld [vmem:[%s3 + $0x428] sm:$0xff]
    %v2863 = vld [vmem:[%s3 + $0x430] sm:$0xff]
    %v2864 = vld [vmem:[%s3 + $0x438] sm:$0xff]
    %v2865 = vld [vmem:[%s3 + $0x440] sm:$0xff]
    %v2866 = vld [vmem:[%s3 + $0x448] sm:$0xff]
    %v2867 = vld [vmem:[%s3 + $0x450] sm:$0xff]
    %v2868 = vld [vmem:[%s3 + $0x458] sm:$0xff]
    %v2869 = vld [vmem:[%s3 + $0x460] sm:$0xff]
    %v2870 = vld [vmem:[%s3 + $0x468] sm:$0xff]
    %v2871 = vld [vmem:[%s3 + $0x470] sm:$0xff]
    %v2872 = vld [vmem:[%s3 + $0x478] sm:$0xff]
    %v2873 = vld [vmem:[%s3 + $0x480] sm:$0xff]
    %v2874 = vld [vmem:[%s3 + $0x488] sm:$0xff]
    %v2875 = vld [vmem:[%s3 + $0x490] sm:$0xff]
    %v2876 = vld [vmem:[%s3 + $0x498] sm:$0xff]
    %v2877 = vld [vmem:[%s3 + $0x4a0] sm:$0xff]
    %v2878 = vld [vmem:[%s3 + $0x4a8] sm:$0xff]
    %v2879 = vld [vmem:[%s3 + $0x4b0] sm:$0xff]
    %v2880 = vld [vmem:[%s3 + $0x4b8] sm:$0xff]
    %v2881 = vld [vmem:[%s3 + $0x4c0] sm:$0xff]
    %v2882 = vld [vmem:[%s3 + $0x4c8] sm:$0xff]
    %v2883 = vld [vmem:[%s3 + $0x4d0] sm:$0xff]
    %v2884 = vld [vmem:[%s3 + $0x4d8] sm:$0xff]
    %v2885 = vld [vmem:[%s3 + $0x4e0] sm:$0xff]
    %v2886 = vld [vmem:[%s3 + $0x4e8] sm:$0xff]
    %v2887 = vld [vmem:[%s3 + $0x4f0] sm:$0xff]
    %v2888 = vld [vmem:[%s3 + $0x4f8] sm:$0xff]
    %v2889 = vld [vmem:[%s3 + $0x500] sm:$0xff]
    %v2890 = vld [vmem:[%s3 + $0x508] sm:$0xff]
    %v2891 = vld [vmem:[%s3 + $0x510] sm:$0xff]
    %v2892 = vld [vmem:[%s3 + $0x518] sm:$0xff]
    %v2893 = vld [vmem:[%s3 + $0x520] sm:$0xff]
    %v2894 = vld [vmem:[%s3 + $0x528] sm:$0xff]
    %v2895 = vld [vmem:[%s3 + $0x530] sm:$0xff]
    %v2896 = vld [vmem:[%s3 + $0x538] sm:$0xff]
    %v2897 = vld [vmem:[%s3 + $0x540] sm:$0xff]
    %v2898 = vld [vmem:[%s3 + $0x548] sm:$0xff]
    %v2899 = vld [vmem:[%s3 + $0x550] sm:$0xff]
    %v2900 = vld [vmem:[%s3 + $0x558] sm:$0xff]
    %v2901 = vld [vmem:[%s3 + $0x560] sm:$0xff]
    %v2902 = vld [vmem:[%s3 + $0x568] sm:$0xff]
    %v2903 = vld [vmem:[%s3 + $0x570] sm:$0xff]
    %v2904 = vld [vmem:[%s3 + $0x578] sm:$0xff]
    %v2905 = vld [vmem:[%s3 + $0x580] sm:$0xff]
    %v2906 = vld [vmem:[%s3 + $0x588] sm:$0xff]
    %v2907 = vld [vmem:[%s3 + $0x590] sm:$0xff]
    %v2908 = vld [vmem:[%s3 + $0x598] sm:$0xff]
    %v2909 = vld [vmem:[%s3 + $0x5a0] sm:$0xff]
    %v2910 = vld [vmem:[%s3 + $0x5a8] sm:$0xff]
    %v2911 = vld [vmem:[%s3 + $0x5b0] sm:$0xff]
    %v2912 = vld [vmem:[%s3 + $0x5b8] sm:$0xff]
    %v2913 = vld [vmem:[%s3 + $0x5c0] sm:$0xff]
    %v2914 = vld [vmem:[%s3 + $0x5c8] sm:$0xff]
    %v2915 = vld [vmem:[%s3 + $0x5d0] sm:$0xff]
    %v2916 = vld [vmem:[%s3 + $0x5d8] sm:$0xff]
    %v2917 = vld [vmem:[%s3 + $0x5e0] sm:$0xff]
    %v2918 = vld [vmem:[%s3 + $0x5e8] sm:$0xff]
    %v2919 = vld [vmem:[%s3 + $0x5f0] sm:$0xff]
    %v2920 = vld [vmem:[%s3 + $0x5f8] sm:$0xff]
    %v2921 = vld [vmem:[%s3 + $0x600] sm:$0xff]
    %v2922 = vld [vmem:[%s3 + $0x608] sm:$0xff]
    %v2923 = vld [vmem:[%s3 + $0x610] sm:$0xff]
    %v2924 = vld [vmem:[%s3 + $0x618] sm:$0xff]
    %v2925 = vld [vmem:[%s3 + $0x620] sm:$0xff]
    %v2926 = vld [vmem:[%s3 + $0x628] sm:$0xff]
    %v2927 = vld [vmem:[%s3 + $0x630] sm:$0xff]
    %v2928 = vld [vmem:[%s3 + $0x638] sm:$0xff]
    %v2929 = vld [vmem:[%s3 + $0x640] sm:$0xff]
    %v2930 = vld [vmem:[%s3 + $0x648] sm:$0xff]
    %v2931 = vld [vmem:[%s3 + $0x650] sm:$0xff]
    %v2932 = vld [vmem:[%s3 + $0x658] sm:$0xff]
    %v2933 = vld [vmem:[%s3 + $0x660] sm:$0xff]
    %v2934 = vld [vmem:[%s3 + $0x668] sm:$0xff]
    %v2935 = vld [vmem:[%s3 + $0x670] sm:$0xff]
    %v2936 = vld [vmem:[%s3 + $0x678] sm:$0xff]
    %v2937 = vld [vmem:[%s3 + $0x680] sm:$0xff]
    %v2938 = vld [vmem:[%s3 + $0x688] sm:$0xff]
    %v2939 = vld [vmem:[%s3 + $0x690] sm:$0xff]
    %v2940 = vld [vmem:[%s3 + $0x698] sm:$0xff]
    %v2941 = vld [vmem:[%s3 + $0x6a0] sm:$0xff]
    %v2942 = vld [vmem:[%s3 + $0x6a8] sm:$0xff]
    %v2943 = vld [vmem:[%s3 + $0x6b0] sm:$0xff]
    %v2944 = vld [vmem:[%s3 + $0x6b8] sm:$0xff]
    %v2945 = vld [vmem:[%s3 + $0x6c0] sm:$0xff]
    %v2946 = vld [vmem:[%s3 + $0x6c8] sm:$0xff]
    %v2947 = vld [vmem:[%s3 + $0x6d0] sm:$0xff]
    %v2948 = vld [vmem:[%s3 + $0x6d8] sm:$0xff]
    %v2949 = vld [vmem:[%s3 + $0x6e0] sm:$0xff]
    %v2950 = vld [vmem:[%s3 + $0x6e8] sm:$0xff]
    %v2951 = vld [vmem:[%s3 + $0x6f0] sm:$0xff]
    %v2952 = vld [vmem:[%s3 + $0x6f8] sm:$0xff]
    %v2953 = vld [vmem:[%s3 + $0x700] sm:$0xff]
    %v2954 = vld [vmem:[%s3 + $0x708] sm:$0xff]
    %v2955 = vld [vmem:[%s3 + $0x710] sm:$0xff]
    %v2956 = vld [vmem:[%s3 + $0x718] sm:$0xff]
    %v2957 = vld [vmem:[%s3 + $0x720] sm:$0xff]
    %v2958 = vld [vmem:[%s3 + $0x728] sm:$0xff]
    %v2959 = vld [vmem:[%s3 + $0x730] sm:$0xff]
    %v2960 = vld [vmem:[%s3 + $0x738] sm:$0xff]
    %v2961 = vld [vmem:[%s3 + $0x740] sm:$0xff]
    %v2962 = vld [vmem:[%s3 + $0x748] sm:$0xff]
    %v2963 = vld [vmem:[%s3 + $0x750] sm:$0xff]
    %v2964 = vld [vmem:[%s3 + $0x758] sm:$0xff]
    %v2965 = vld [vmem:[%s3 + $0x760] sm:$0xff]
    %v2966 = vld [vmem:[%s3 + $0x768] sm:$0xff]
    %v2967 = vld [vmem:[%s3 + $0x770] sm:$0xff]
    %v2968 = vld [vmem:[%s3 + $0x778] sm:$0xff]
    %v2969 = vld [vmem:[%s3 + $0x780] sm:$0xff]
    %v2970 = vld [vmem:[%s3 + $0x788] sm:$0xff]
    %v2971 = vld [vmem:[%s3 + $0x790] sm:$0xff]
    %v2972 = vld [vmem:[%s3 + $0x798] sm:$0xff]
    %v2973 = vld [vmem:[%s3 + $0x7a0] sm:$0xff]
    %v2974 = vld [vmem:[%s3 + $0x7a8] sm:$0xff]
    %v2975 = vld [vmem:[%s3 + $0x7b0] sm:$0xff]
    %v2976 = vld [vmem:[%s3 + $0x7b8] sm:$0xff]
    %v2977 = vld [vmem:[%s3 + $0x7c0] sm:$0xff]
    %v2978 = vld [vmem:[%s3 + $0x7c8] sm:$0xff]
    %v2979 = vld [vmem:[%s3 + $0x7d0] sm:$0xff]
    %v2980 = vld [vmem:[%s3 + $0x7d8] sm:$0xff]
    %v2981 = vld [vmem:[%s3 + $0x7e0] sm:$0xff]
    %v2982 = vld [vmem:[%s3 + $0x7e8] sm:$0xff]
    %v2983 = vld [vmem:[%s3 + $0x7f0] sm:$0xff]
    %v2984 = vld [vmem:[%s3 + $0x7f8] sm:$0xff]
    %v2985 = vld [vmem:[%s3 + $0x800] sm:$0xff]
    %v2986 = vld [vmem:[%s3 + $0x808] sm:$0xff]
    %v2987 = vld [vmem:[%s3 + $0x810] sm:$0xff]
    %v2988 = vld [vmem:[%s3 + $0x818] sm:$0xff]
    %v2989 = vld [vmem:[%s3 + $0x820] sm:$0xff]
    %v2990 = vld [vmem:[%s3 + $0x828] sm:$0xff]
    %v2991 = vld [vmem:[%s3 + $0x830] sm:$0xff]
    %v2992 = vld [vmem:[%s3 + $0x838] sm:$0xff]
    %v2993 = vld [vmem:[%s3 + $0x840] sm:$0xff]
    %v2994 = vld [vmem:[%s3 + $0x848] sm:$0xff]
    %v2995 = vld [vmem:[%s3 + $0x850] sm:$0xff]
    %v2996 = vld [vmem:[%s3 + $0x858] sm:$0xff]
    %v2997 = vld [vmem:[%s3 + $0x860] sm:$0xff]
    %v2998 = vld [vmem:[%s3 + $0x868] sm:$0xff]
    %v2999 = vld [vmem:[%s3 + $0x870] sm:$0xff]
    %v3000 = vld [vmem:[%s3 + $0x878] sm:$0xff]
    %v3001 = vld [vmem:[%s3 + $0x880] sm:$0xff]
    %v3002 = vld [vmem:[%s3 + $0x888] sm:$0xff]
    %v3003 = vld [vmem:[%s3 + $0x890] sm:$0xff]
    %v3004 = vld [vmem:[%s3 + $0x898] sm:$0xff]
    %v3005 = vld [vmem:[%s3 + $0x8a0] sm:$0xff]
    %v3006 = vld [vmem:[%s3 + $0x8a8] sm:$0xff]
    %v3007 = vld [vmem:[%s3 + $0x8b0] sm:$0xff]
    %v3008 = vld [vmem:[%s3 + $0x8b8] sm:$0xff]
    %v3009 = vld [vmem:[%s3 + $0x8c0] sm:$0xff]
    %v3010 = vld [vmem:[%s3 + $0x8c8] sm:$0xff]
    %v3011 = vld [vmem:[%s3 + $0x8d0] sm:$0xff]
    %v3012 = vld [vmem:[%s3 + $0x8d8] sm:$0xff]
    %v3013 = vld [vmem:[%s3 + $0x8e0] sm:$0xff]
    %v3014 = vld [vmem:[%s3 + $0x8e8] sm:$0xff]
    %v3015 = vld [vmem:[%s3 + $0x8f0] sm:$0xff]
    %v3016 = vld [vmem:[%s3 + $0x8f8] sm:$0xff]
    %v3017 = vld [vmem:[%s3 + $0x900] sm:$0xff]
    %v3018 = vld [vmem:[%s3 + $0x908] sm:$0xff]
    %v3019 = vld [vmem:[%s3 + $0x910] sm:$0xff]
    %v3020 = vld [vmem:[%s3 + $0x918] sm:$0xff]
    %v3021 = vld [vmem:[%s3 + $0x920] sm:$0xff]
    %v3022 = vld [vmem:[%s3 + $0x928] sm:$0xff]
    %v3023 = vld [vmem:[%s3 + $0x930] sm:$0xff]
    %v3024 = vld [vmem:[%s3 + $0x938] sm:$0xff]
    %v3025 = vld [vmem:[%s3 + $0x940] sm:$0xff]
    %v3026 = vld [vmem:[%s3 + $0x948] sm:$0xff]
    %v3027 = vld [vmem:[%s3 + $0x950] sm:$0xff]
    %v3028 = vld [vmem:[%s3 + $0x958] sm:$0xff]
    %v3029 = vld [vmem:[%s3 + $0x960] sm:$0xff]
    %v3030 = vld [vmem:[%s3 + $0x968] sm:$0xff]
    %v3031 = vld [vmem:[%s3 + $0x970] sm:$0xff]
    %v3032 = vld [vmem:[%s3 + $0x978] sm:$0xff]
    %v3033 = vld [vmem:[%s3 + $0x980] sm:$0xff]
    %v3034 = vld [vmem:[%s3 + $0x988] sm:$0xff]
    %v3035 = vld [vmem:[%s3 + $0x990] sm:$0xff]
    %v3036 = vld [vmem:[%s3 + $0x998] sm:$0xff]
    %v3037 = vld [vmem:[%s3 + $0x9a0] sm:$0xff]
    %v3038 = vld [vmem:[%s3 + $0x9a8] sm:$0xff]
    %v3039 = vld [vmem:[%s3 + $0x9b0] sm:$0xff]
    %v3040 = vld [vmem:[%s3 + $0x9b8] sm:$0xff]
    %v3041 = vld [vmem:[%s3 + $0x9c0] sm:$0xff]
    %v3042 = vld [vmem:[%s3 + $0x9c8] sm:$0xff]
    %v3043 = vld [vmem:[%s3 + $0x9d0] sm:$0xff]
    %v3044 = vld [vmem:[%s3 + $0x9d8] sm:$0xff]
    %v3045 = vld [vmem:[%s3 + $0x9e0] sm:$0xff]
    %v3046 = vld [vmem:[%s3 + $0x9e8] sm:$0xff]
    %v3047 = vld [vmem:[%s3 + $0x9f0] sm:$0xff]
    %v3048 = vld [vmem:[%s3 + $0x9f8] sm:$0xff]
    %v3049 = vld [vmem:[%s3 + $0xa00] sm:$0xff]
    %v3050 = vld [vmem:[%s3 + $0xa08] sm:$0xff]
    %v3051 = vld [vmem:[%s3 + $0xa10] sm:$0xff]
    %v3052 = vld [vmem:[%s3 + $0xa18] sm:$0xff]
    %v3053 = vld [vmem:[%s3 + $0xa20] sm:$0xff]
    %v3054 = vld [vmem:[%s3 + $0xa28] sm:$0xff]
    %v3055 = vld [vmem:[%s3 + $0xa30] sm:$0xff]
    %v3056 = vld [vmem:[%s3 + $0xa38] sm:$0xff]
    %v3057 = vld [vmem:[%s3 + $0xa40] sm:$0xff]
    %v3058 = vld [vmem:[%s3 + $0xa48] sm:$0xff]
    %v3059 = vld [vmem:[%s3 + $0xa50] sm:$0xff]
    %v3060 = vld [vmem:[%s3 + $0xa58] sm:$0xff]
    %v3061 = vld [vmem:[%s3 + $0xa60] sm:$0xff]
    %v3062 = vld [vmem:[%s3 + $0xa68] sm:$0xff]
    %v3063 = vld [vmem:[%s3 + $0xa70] sm:$0xff]
    %v3064 = vld [vmem:[%s3 + $0xa78] sm:$0xff]
    %v3065 = vld [vmem:[%s3 + $0xa80] sm:$0xff]
    %v3066 = vld [vmem:[%s3 + $0xa88] sm:$0xff]
    %v3067 = vld [vmem:[%s3 + $0xa90] sm:$0xff]
    %v3068 = vld [vmem:[%s3 + $0xa98] sm:$0xff]
    %v3069 = vld [vmem:[%s3 + $0xaa0] sm:$0xff]
    %v3070 = vld [vmem:[%s3 + $0xaa8] sm:$0xff]
    %v3071 = vld [vmem:[%s3 + $0xab0] sm:$0xff]
    %v3072 = vld [vmem:[%s3 + $0xab8] sm:$0xff]
    %v3073 = vld [vmem:[%s3 + $0xac0] sm:$0xff]
    %v3074 = vld [vmem:[%s3 + $0xac8] sm:$0xff]
    %v3075 = vld [vmem:[%s3 + $0xad0] sm:$0xff]
    %v3076 = vld [vmem:[%s3 + $0xad8] sm:$0xff]
    %v3077 = vld [vmem:[%s3 + $0xae0] sm:$0xff]
    %v3078 = vld [vmem:[%s3 + $0xae8] sm:$0xff]
    %v3079 = vld [vmem:[%s3 + $0xaf0] sm:$0xff]
    %v3080 = vld [vmem:[%s3 + $0xaf8] sm:$0xff]
    %v3081 = vld [vmem:[%s3 + $0xb00] sm:$0xff]
    %v3082 = vld [vmem:[%s3 + $0xb08] sm:$0xff]
    %v3083 = vld [vmem:[%s3 + $0xb10] sm:$0xff]
    %v3084 = vld [vmem:[%s3 + $0xb18] sm:$0xff]
    %v3085 = vld [vmem:[%s3 + $0xb20] sm:$0xff]
    %v3086 = vld [vmem:[%s3 + $0xb28] sm:$0xff]
    %v3087 = vld [vmem:[%s3 + $0xb30] sm:$0xff]
    %v3088 = vld [vmem:[%s3 + $0xb38] sm:$0xff]
    %v3089 = vld [vmem:[%s3 + $0xb40] sm:$0xff]
    %v3090 = vld [vmem:[%s3 + $0xb48] sm:$0xff]
    %v3091 = vld [vmem:[%s3 + $0xb50] sm:$0xff]
    %v3092 = vld [vmem:[%s3 + $0xb58] sm:$0xff]
    %v3093 = vld [vmem:[%s3 + $0xb60] sm:$0xff]
    %v3094 = vld [vmem:[%s3 + $0xb68] sm:$0xff]
    %v3095 = vld [vmem:[%s3 + $0xb70] sm:$0xff]
    %v3096 = vld [vmem:[%s3 + $0xb78] sm:$0xff]
    %v3097 = vld [vmem:[%s3 + $0xb80] sm:$0xff]
    %v3098 = vld [vmem:[%s3 + $0xb88] sm:$0xff]
    %v3099 = vld [vmem:[%s3 + $0xb90] sm:$0xff]
    %v3100 = vld [vmem:[%s3 + $0xb98] sm:$0xff]
    %v3101 = vld [vmem:[%s3 + $0xba0] sm:$0xff]
    %v3102 = vld [vmem:[%s3 + $0xba8] sm:$0xff]
    %v3103 = vld [vmem:[%s3 + $0xbb0] sm:$0xff]
    %v3104 = vld [vmem:[%s3 + $0xbb8] sm:$0xff]
    %v3105 = vld [vmem:[%s3 + $0xbc0] sm:$0xff]
    %v3106 = vld [vmem:[%s3 + $0xbc8] sm:$0xff]
    %v3107 = vld [vmem:[%s3 + $0xbd0] sm:$0xff]
    %v3108 = vld [vmem:[%s3 + $0xbd8] sm:$0xff]
    %v3109 = vld [vmem:[%s3 + $0xbe0] sm:$0xff]
    %v3110 = vld [vmem:[%s3 + $0xbe8] sm:$0xff]
    %v3111 = vld [vmem:[%s3 + $0xbf0] sm:$0xff]
    %v3112 = vld [vmem:[%s3 + $0xbf8] sm:$0xff]
    %v3113 = vld [vmem:[%s3 + $0xc00] sm:$0xff]
    %v3114 = vld [vmem:[%s3 + $0xc08] sm:$0xff]
    %v3115 = vld [vmem:[%s3 + $0xc10] sm:$0xff]
    %v3116 = vld [vmem:[%s3 + $0xc18] sm:$0xff]
    %v3117 = vld [vmem:[%s3 + $0xc20] sm:$0xff]
    %v3118 = vld [vmem:[%s3 + $0xc28] sm:$0xff]
    %v3119 = vld [vmem:[%s3 + $0xc30] sm:$0xff]
    %v3120 = vld [vmem:[%s3 + $0xc38] sm:$0xff]
    %v3121 = vld [vmem:[%s3 + $0xc40] sm:$0xff]
    %v3122 = vld [vmem:[%s3 + $0xc48] sm:$0xff]
    %v3123 = vld [vmem:[%s3 + $0xc50] sm:$0xff]
    %v3124 = vld [vmem:[%s3 + $0xc58] sm:$0xff]
    %v3125 = vld [vmem:[%s3 + $0xc60] sm:$0xff]
    %v3126 = vld [vmem:[%s3 + $0xc68] sm:$0xff]
    %v3127 = vld [vmem:[%s3 + $0xc70] sm:$0xff]
    %v3128 = vld [vmem:[%s3 + $0xc78] sm:$0xff]
    %v3129 = vld [vmem:[%s3 + $0xc80] sm:$0xff]
    %v3130 = vld [vmem:[%s3 + $0xc88] sm:$0xff]
    %v3131 = vld [vmem:[%s3 + $0xc90] sm:$0xff]
    %v3132 = vld [vmem:[%s3 + $0xc98] sm:$0xff]
    %v3133 = vld [vmem:[%s3 + $0xca0] sm:$0xff]
    %v3134 = vld [vmem:[%s3 + $0xca8] sm:$0xff]
    %v3135 = vld [vmem:[%s3 + $0xcb0] sm:$0xff]
    %v3136 = vld [vmem:[%s3 + $0xcb8] sm:$0xff]
    %v3137 = vld [vmem:[%s3 + $0xcc0] sm:$0xff]
    %v3138 = vld [vmem:[%s3 + $0xcc8] sm:$0xff]
    %v3139 = vld [vmem:[%s3 + $0xcd0] sm:$0xff]
    %v3140 = vld [vmem:[%s3 + $0xcd8] sm:$0xff]
    %v3141 = vld [vmem:[%s3 + $0xce0] sm:$0xff]
    %v3142 = vld [vmem:[%s3 + $0xce8] sm:$0xff]
    %v3143 = vld [vmem:[%s3 + $0xcf0] sm:$0xff]
    %v3144 = vld [vmem:[%s3 + $0xcf8] sm:$0xff]
    %v3145 = vld [vmem:[%s3 + $0xd00] sm:$0xff]
    %v3146 = vld [vmem:[%s3 + $0xd08] sm:$0xff]
    %v3147 = vld [vmem:[%s3 + $0xd10] sm:$0xff]
    %v3148 = vld [vmem:[%s3 + $0xd18] sm:$0xff]
    %v3149 = vld [vmem:[%s3 + $0xd20] sm:$0xff]
    %v3150 = vld [vmem:[%s3 + $0xd28] sm:$0xff]
    %v3151 = vld [vmem:[%s3 + $0xd30] sm:$0xff]
    %v3152 = vld [vmem:[%s3 + $0xd38] sm:$0xff]
    %v3153 = vld [vmem:[%s3 + $0xd40] sm:$0xff]
    %v3154 = vld [vmem:[%s3 + $0xd48] sm:$0xff]
    %v3155 = vld [vmem:[%s3 + $0xd50] sm:$0xff]
    %v3156 = vld [vmem:[%s3 + $0xd58] sm:$0xff]
    %v3157 = vld [vmem:[%s3 + $0xd60] sm:$0xff]
    %v3158 = vld [vmem:[%s3 + $0xd68] sm:$0xff]
    %v3159 = vld [vmem:[%s3 + $0xd70] sm:$0xff]
    %v3160 = vld [vmem:[%s3 + $0xd78] sm:$0xff]
    %v3161 = vld [vmem:[%s4] sm:$0xff]
    %v3163 = vlaneseq
    %v3164 = vshrl.u32 %v3163, 7
    %v3165 = vsub.s32 0, %v3164
    %v3166 = vrot.slane %v3161, %v3165
    %v3167 = vlaneseq
    %v3168 = vshrl.u32 %v3167, 7
    %v3169 = vsub.s32 1, %v3168
    %v3170 = vrot.slane %v3161, %v3169
    %v3171 = vlaneseq
    %v3172 = vshrl.u32 %v3171, 7
    %v3173 = vsub.s32 2, %v3172
    %v3174 = vrot.slane %v3161, %v3173
    %v3175 = vlaneseq
    %v3176 = vshrl.u32 %v3175, 7
    %v3177 = vsub.s32 3, %v3176
    %v3178 = vrot.slane %v3161, %v3177
    %v3179 = vlaneseq
    %v3180 = vshrl.u32 %v3179, 7
    %v3181 = vsub.s32 4, %v3180
    %v3182 = vrot.slane %v3161, %v3181
    %v3183 = vlaneseq
    %v3184 = vshrl.u32 %v3183, 7
    %v3185 = vsub.s32 5, %v3184
    %v3186 = vrot.slane %v3161, %v3185
    %v3187 = vlaneseq
    %v3188 = vshrl.u32 %v3187, 7
    %v3189 = vsub.s32 6, %v3188
    %v3190 = vrot.slane %v3161, %v3189
    %v3191 = vlaneseq
    %v3192 = vshrl.u32 %v3191, 7
    %v3193 = vsub.s32 7, %v3192
    %v3194 = vrot.slane %v3161, %v3193
    %v3635 = vunpack.c.l.b16 %v2729
    %v3636 = vunpack.c.h.b16 %v2729
    %v3637 = vunpack.c.l.b16 %v2730
    %v3638 = vunpack.c.h.b16 %v2730
    %v3639 = vunpack.c.l.b16 %v2731
    %v3640 = vunpack.c.h.b16 %v2731
    %v3641 = vunpack.c.l.b16 %v2732
    %v3642 = vunpack.c.h.b16 %v2732
    %v3643 = vunpack.c.l.b16 %v2733
    %v3644 = vunpack.c.h.b16 %v2733
    %v3645 = vunpack.c.l.b16 %v2734
    %v3646 = vunpack.c.h.b16 %v2734
    %v3647 = vunpack.c.l.b16 %v2735
    %v3648 = vunpack.c.h.b16 %v2735
    %v3649 = vunpack.c.l.b16 %v2736
    %v3650 = vunpack.c.h.b16 %v2736
    %v3651 = vunpack.c.l.b16 %v2737
    %v3652 = vunpack.c.h.b16 %v2737
    %v3653 = vunpack.c.l.b16 %v2738
    %v3654 = vunpack.c.h.b16 %v2738
    %v3655 = vunpack.c.l.b16 %v2739
    %v3656 = vunpack.c.h.b16 %v2739
    %v3657 = vunpack.c.l.b16 %v2740
    %v3658 = vunpack.c.h.b16 %v2740
    %v3659 = vunpack.c.l.b16 %v2741
    %v3660 = vunpack.c.h.b16 %v2741
    %v3661 = vunpack.c.l.b16 %v2742
    %v3662 = vunpack.c.h.b16 %v2742
    %v3663 = vunpack.c.l.b16 %v2743
    %v3664 = vunpack.c.h.b16 %v2743
    %v3665 = vunpack.c.l.b16 %v2744
    %v3666 = vunpack.c.h.b16 %v2744
    %v3667 = vunpack.c.l.b16 %v2745
    %v3668 = vunpack.c.h.b16 %v2745
    %v3669 = vunpack.c.l.b16 %v2746
    %v3670 = vunpack.c.h.b16 %v2746
    %v3671 = vunpack.c.l.b16 %v2747
    %v3672 = vunpack.c.h.b16 %v2747
    %v3673 = vunpack.c.l.b16 %v2748
    %v3674 = vunpack.c.h.b16 %v2748
    %v3675 = vunpack.c.l.b16 %v2749
    %v3676 = vunpack.c.h.b16 %v2749
    %v3677 = vunpack.c.l.b16 %v2750
    %v3678 = vunpack.c.h.b16 %v2750
    %v3679 = vunpack.c.l.b16 %v2751
    %v3680 = vunpack.c.h.b16 %v2751
    %v3681 = vunpack.c.l.b16 %v2752
    %v3682 = vunpack.c.h.b16 %v2752
    %v3683 = vunpack.c.l.b16 %v2753
    %v3684 = vunpack.c.h.b16 %v2753
    %v3685 = vunpack.c.l.b16 %v2754
    %v3686 = vunpack.c.h.b16 %v2754
    %v3687 = vunpack.c.l.b16 %v2755
    %v3688 = vunpack.c.h.b16 %v2755
    %v3689 = vunpack.c.l.b16 %v2756
    %v3690 = vunpack.c.h.b16 %v2756
    %v3691 = vunpack.c.l.b16 %v2757
    %v3692 = vunpack.c.h.b16 %v2757
    %v3693 = vunpack.c.l.b16 %v2758
    %v3694 = vunpack.c.h.b16 %v2758
    %v3695 = vunpack.c.l.b16 %v2759
    %v3696 = vunpack.c.h.b16 %v2759
    %v3697 = vunpack.c.l.b16 %v2760
    %v3698 = vunpack.c.h.b16 %v2760
    %v3699 = vunpack.c.l.b16 %v2761
    %v3700 = vunpack.c.h.b16 %v2761
    %v3701 = vunpack.c.l.b16 %v2762
    %v3702 = vunpack.c.h.b16 %v2762
    %v3703 = vunpack.c.l.b16 %v2763
    %v3704 = vunpack.c.h.b16 %v2763
    %v3705 = vunpack.c.l.b16 %v2764
    %v3706 = vunpack.c.h.b16 %v2764
    %v3707 = vunpack.c.l.b16 %v2765
    %v3708 = vunpack.c.h.b16 %v2765
    %v3709 = vunpack.c.l.b16 %v2766
    %v3710 = vunpack.c.h.b16 %v2766
    %v3711 = vunpack.c.l.b16 %v2767
    %v3712 = vunpack.c.h.b16 %v2767
    %v3713 = vunpack.c.l.b16 %v2768
    %v3714 = vunpack.c.h.b16 %v2768
    %v3715 = vunpack.c.l.b16 %v2769
    %v3716 = vunpack.c.h.b16 %v2769
    %v3717 = vunpack.c.l.b16 %v2770
    %v3718 = vunpack.c.h.b16 %v2770
    %v3719 = vunpack.c.l.b16 %v2771
    %v3720 = vunpack.c.h.b16 %v2771
    %v3721 = vunpack.c.l.b16 %v2772
    %v3722 = vunpack.c.h.b16 %v2772
    %v3723 = vunpack.c.l.b16 %v2773
    %v3724 = vunpack.c.h.b16 %v2773
    %v3725 = vunpack.c.l.b16 %v2774
    %v3726 = vunpack.c.h.b16 %v2774
    %v3727 = vunpack.c.l.b16 %v2775
    %v3728 = vunpack.c.h.b16 %v2775
    %v3729 = vunpack.c.l.b16 %v2776
    %v3730 = vunpack.c.h.b16 %v2776
    %v3731 = vunpack.c.l.b16 %v2777
    %v3732 = vunpack.c.h.b16 %v2777
    %v3733 = vunpack.c.l.b16 %v2778
    %v3734 = vunpack.c.h.b16 %v2778
    %v3735 = vunpack.c.l.b16 %v2779
    %v3736 = vunpack.c.h.b16 %v2779
    %v3737 = vunpack.c.l.b16 %v2780
    %v3738 = vunpack.c.h.b16 %v2780
    %v3739 = vunpack.c.l.b16 %v2781
    %v3740 = vunpack.c.h.b16 %v2781
    %v3741 = vunpack.c.l.b16 %v2782
    %v3742 = vunpack.c.h.b16 %v2782
    %v3743 = vunpack.c.l.b16 %v2783
    %v3744 = vunpack.c.h.b16 %v2783
    %v3745 = vunpack.c.l.b16 %v2784
    %v3746 = vunpack.c.h.b16 %v2784
    %v3747 = vunpack.c.l.b16 %v2785
    %v3748 = vunpack.c.h.b16 %v2785
    %v3749 = vunpack.c.l.b16 %v2786
    %v3750 = vunpack.c.h.b16 %v2786
    %v3751 = vunpack.c.l.b16 %v2787
    %v3752 = vunpack.c.h.b16 %v2787
    %v3753 = vunpack.c.l.b16 %v2788
    %v3754 = vunpack.c.h.b16 %v2788
    %v3755 = vunpack.c.l.b16 %v2789
    %v3756 = vunpack.c.h.b16 %v2789
    %v3757 = vunpack.c.l.b16 %v2790
    %v3758 = vunpack.c.h.b16 %v2790
    %v3759 = vunpack.c.l.b16 %v2791
    %v3760 = vunpack.c.h.b16 %v2791
    %v3761 = vunpack.c.l.b16 %v2792
    %v3762 = vunpack.c.h.b16 %v2792
    %v3763 = vunpack.c.l.b16 %v2793
    %v3764 = vunpack.c.h.b16 %v2793
    %v3765 = vunpack.c.l.b16 %v2794
    %v3766 = vunpack.c.h.b16 %v2794
    %v3767 = vunpack.c.l.b16 %v2795
    %v3768 = vunpack.c.h.b16 %v2795
    %v3769 = vunpack.c.l.b16 %v2796
    %v3770 = vunpack.c.h.b16 %v2796
    %v3771 = vunpack.c.l.b16 %v2797
    %v3772 = vunpack.c.h.b16 %v2797
    %v3773 = vunpack.c.l.b16 %v2798
    %v3774 = vunpack.c.h.b16 %v2798
    %v3775 = vunpack.c.l.b16 %v2799
    %v3776 = vunpack.c.h.b16 %v2799
    %v3777 = vunpack.c.l.b16 %v2800
    %v3778 = vunpack.c.h.b16 %v2800
    %v3779 = vunpack.c.l.b16 %v2801
    %v3780 = vunpack.c.h.b16 %v2801
    %v3781 = vunpack.c.l.b16 %v2802
    %v3782 = vunpack.c.h.b16 %v2802
    %v3783 = vunpack.c.l.b16 %v2803
    %v3784 = vunpack.c.h.b16 %v2803
    %v3785 = vunpack.c.l.b16 %v2804
    %v3786 = vunpack.c.h.b16 %v2804
    %v3787 = vunpack.c.l.b16 %v2805
    %v3788 = vunpack.c.h.b16 %v2805
    %v3789 = vunpack.c.l.b16 %v2806
    %v3790 = vunpack.c.h.b16 %v2806
    %v3791 = vunpack.c.l.b16 %v2807
    %v3792 = vunpack.c.h.b16 %v2807
    %v3793 = vunpack.c.l.b16 %v2808
    %v3794 = vunpack.c.h.b16 %v2808
    %v3795 = vunpack.c.l.b16 %v2809
    %v3796 = vunpack.c.h.b16 %v2809
    %v3797 = vunpack.c.l.b16 %v2810
    %v3798 = vunpack.c.h.b16 %v2810
    %v3799 = vunpack.c.l.b16 %v2811
    %v3800 = vunpack.c.h.b16 %v2811
    %v3801 = vunpack.c.l.b16 %v2812
    %v3802 = vunpack.c.h.b16 %v2812
    %v3803 = vunpack.c.l.b16 %v2813
    %v3804 = vunpack.c.h.b16 %v2813
    %v3805 = vunpack.c.l.b16 %v2814
    %v3806 = vunpack.c.h.b16 %v2814
    %v3807 = vunpack.c.l.b16 %v2815
    %v3808 = vunpack.c.h.b16 %v2815
    %v3809 = vunpack.c.l.b16 %v2816
    %v3810 = vunpack.c.h.b16 %v2816
    %v3811 = vunpack.c.l.b16 %v2817
    %v3812 = vunpack.c.h.b16 %v2817
    %v3813 = vunpack.c.l.b16 %v2818
    %v3814 = vunpack.c.h.b16 %v2818
    %v3815 = vunpack.c.l.b16 %v2819
    %v3816 = vunpack.c.h.b16 %v2819
    %v3817 = vunpack.c.l.b16 %v2820
    %v3818 = vunpack.c.h.b16 %v2820
    %v3819 = vunpack.c.l.b16 %v2821
    %v3820 = vunpack.c.h.b16 %v2821
    %v3821 = vunpack.c.l.b16 %v2822
    %v3822 = vunpack.c.h.b16 %v2822
    %v3823 = vunpack.c.l.b16 %v2823
    %v3824 = vunpack.c.h.b16 %v2823
    %v3825 = vunpack.c.l.b16 %v2824
    %v3826 = vunpack.c.h.b16 %v2824
    %v3827 = vunpack.c.l.b16 %v2825
    %v3828 = vunpack.c.h.b16 %v2825
    %v3829 = vunpack.c.l.b16 %v2826
    %v3830 = vunpack.c.h.b16 %v2826
    %v3831 = vunpack.c.l.b16 %v2827
    %v3832 = vunpack.c.h.b16 %v2827
    %v3833 = vunpack.c.l.b16 %v2828
    %v3834 = vunpack.c.h.b16 %v2828
    %v3835 = vunpack.c.l.b16 %v2829
    %v3836 = vunpack.c.h.b16 %v2829
    %v3837 = vunpack.c.l.b16 %v2830
    %v3838 = vunpack.c.h.b16 %v2830
    %v3839 = vunpack.c.l.b16 %v2831
    %v3840 = vunpack.c.h.b16 %v2831
    %v3841 = vunpack.c.l.b16 %v2832
    %v3842 = vunpack.c.h.b16 %v2832
    %v3843 = vunpack.c.l.b16 %v2833
    %v3844 = vunpack.c.h.b16 %v2833
    %v3845 = vunpack.c.l.b16 %v2834
    %v3846 = vunpack.c.h.b16 %v2834
    %v3847 = vunpack.c.l.b16 %v2835
    %v3848 = vunpack.c.h.b16 %v2835
    %v3849 = vunpack.c.l.b16 %v2836
    %v3850 = vunpack.c.h.b16 %v2836
    %v3851 = vunpack.c.l.b16 %v2837
    %v3852 = vunpack.c.h.b16 %v2837
    %v3853 = vunpack.c.l.b16 %v2838
    %v3854 = vunpack.c.h.b16 %v2838
    %v3855 = vunpack.c.l.b16 %v2839
    %v3856 = vunpack.c.h.b16 %v2839
    %v3857 = vunpack.c.l.b16 %v2840
    %v3858 = vunpack.c.h.b16 %v2840
    %v3859 = vunpack.c.l.b16 %v2841
    %v3860 = vunpack.c.h.b16 %v2841
    %v3861 = vunpack.c.l.b16 %v2842
    %v3862 = vunpack.c.h.b16 %v2842
    %v3863 = vunpack.c.l.b16 %v2843
    %v3864 = vunpack.c.h.b16 %v2843
    %v3865 = vunpack.c.l.b16 %v2844
    %v3866 = vunpack.c.h.b16 %v2844
    %v3867 = vunpack.c.l.b16 %v2845
    %v3868 = vunpack.c.h.b16 %v2845
    %v3869 = vunpack.c.l.b16 %v2846
    %v3870 = vunpack.c.h.b16 %v2846
    %v3871 = vunpack.c.l.b16 %v2847
    %v3872 = vunpack.c.h.b16 %v2847
    %v3873 = vunpack.c.l.b16 %v2848
    %v3874 = vunpack.c.h.b16 %v2848
    %v3875 = vunpack.c.l.b16 %v2849
    %v3876 = vunpack.c.h.b16 %v2849
    %v3877 = vunpack.c.l.b16 %v2850
    %v3878 = vunpack.c.h.b16 %v2850
    %v3879 = vunpack.c.l.b16 %v2851
    %v3880 = vunpack.c.h.b16 %v2851
    %v3881 = vunpack.c.l.b16 %v2852
    %v3882 = vunpack.c.h.b16 %v2852
    %v3883 = vunpack.c.l.b16 %v2853
    %v3884 = vunpack.c.h.b16 %v2853
    %v3885 = vunpack.c.l.b16 %v2854
    %v3886 = vunpack.c.h.b16 %v2854
    %v3887 = vunpack.c.l.b16 %v2855
    %v3888 = vunpack.c.h.b16 %v2855
    %v3889 = vunpack.c.l.b16 %v2856
    %v3890 = vunpack.c.h.b16 %v2856
    %v3891 = vunpack.c.l.b16 %v2857
    %v3892 = vunpack.c.h.b16 %v2857
    %v3893 = vunpack.c.l.b16 %v2858
    %v3894 = vunpack.c.h.b16 %v2858
    %v3895 = vunpack.c.l.b16 %v2859
    %v3896 = vunpack.c.h.b16 %v2859
    %v3897 = vunpack.c.l.b16 %v2860
    %v3898 = vunpack.c.h.b16 %v2860
    %v3899 = vunpack.c.l.b16 %v2861
    %v3900 = vunpack.c.h.b16 %v2861
    %v3901 = vunpack.c.l.b16 %v2862
    %v3902 = vunpack.c.h.b16 %v2862
    %v3903 = vunpack.c.l.b16 %v2863
    %v3904 = vunpack.c.h.b16 %v2863
    %v3905 = vunpack.c.l.b16 %v2864
    %v3906 = vunpack.c.h.b16 %v2864
    %v3907 = vunpack.c.l.b16 %v2865
    %v3908 = vunpack.c.h.b16 %v2865
    %v3909 = vunpack.c.l.b16 %v2866
    %v3910 = vunpack.c.h.b16 %v2866
    %v3911 = vunpack.c.l.b16 %v2867
    %v3912 = vunpack.c.h.b16 %v2867
    %v3913 = vunpack.c.l.b16 %v2868
    %v3914 = vunpack.c.h.b16 %v2868
    %v3915 = vunpack.c.l.b16 %v2869
    %v3916 = vunpack.c.h.b16 %v2869
    %v3917 = vunpack.c.l.b16 %v2870
    %v3918 = vunpack.c.h.b16 %v2870
    %v3919 = vunpack.c.l.b16 %v2871
    %v3920 = vunpack.c.h.b16 %v2871
    %v3921 = vunpack.c.l.b16 %v2872
    %v3922 = vunpack.c.h.b16 %v2872
    %v3923 = vunpack.c.l.b16 %v2873
    %v3924 = vunpack.c.h.b16 %v2873
    %v3925 = vunpack.c.l.b16 %v2874
    %v3926 = vunpack.c.h.b16 %v2874
    %v3927 = vunpack.c.l.b16 %v2875
    %v3928 = vunpack.c.h.b16 %v2875
    %v3929 = vunpack.c.l.b16 %v2876
    %v3930 = vunpack.c.h.b16 %v2876
    %v3931 = vunpack.c.l.b16 %v2877
    %v3932 = vunpack.c.h.b16 %v2877
    %v3933 = vunpack.c.l.b16 %v2878
    %v3934 = vunpack.c.h.b16 %v2878
    %v3935 = vunpack.c.l.b16 %v2879
    %v3936 = vunpack.c.h.b16 %v2879
    %v3937 = vunpack.c.l.b16 %v2880
    %v3938 = vunpack.c.h.b16 %v2880
    %v3939 = vunpack.c.l.b16 %v2881
    %v3940 = vunpack.c.h.b16 %v2881
    %v3941 = vunpack.c.l.b16 %v2882
    %v3942 = vunpack.c.h.b16 %v2882
    %v3943 = vunpack.c.l.b16 %v2883
    %v3944 = vunpack.c.h.b16 %v2883
    %v3945 = vunpack.c.l.b16 %v2884
    %v3946 = vunpack.c.h.b16 %v2884
    %v3947 = vunpack.c.l.b16 %v2885
    %v3948 = vunpack.c.h.b16 %v2885
    %v3949 = vunpack.c.l.b16 %v2886
    %v3950 = vunpack.c.h.b16 %v2886
    %v3951 = vunpack.c.l.b16 %v2887
    %v3952 = vunpack.c.h.b16 %v2887
    %v3953 = vunpack.c.l.b16 %v2888
    %v3954 = vunpack.c.h.b16 %v2888
    %v3955 = vunpack.c.l.b16 %v2889
    %v3956 = vunpack.c.h.b16 %v2889
    %v3957 = vunpack.c.l.b16 %v2890
    %v3958 = vunpack.c.h.b16 %v2890
    %v3959 = vunpack.c.l.b16 %v2891
    %v3960 = vunpack.c.h.b16 %v2891
    %v3961 = vunpack.c.l.b16 %v2892
    %v3962 = vunpack.c.h.b16 %v2892
    %v3963 = vunpack.c.l.b16 %v2893
    %v3964 = vunpack.c.h.b16 %v2893
    %v3965 = vunpack.c.l.b16 %v2894
    %v3966 = vunpack.c.h.b16 %v2894
    %v3967 = vunpack.c.l.b16 %v2895
    %v3968 = vunpack.c.h.b16 %v2895
    %v3969 = vunpack.c.l.b16 %v2896
    %v3970 = vunpack.c.h.b16 %v2896
    %v3971 = vunpack.c.l.b16 %v2897
    %v3972 = vunpack.c.h.b16 %v2897
    %v3973 = vunpack.c.l.b16 %v2898
    %v3974 = vunpack.c.h.b16 %v2898
    %v3975 = vunpack.c.l.b16 %v2899
    %v3976 = vunpack.c.h.b16 %v2899
    %v3977 = vunpack.c.l.b16 %v2900
    %v3978 = vunpack.c.h.b16 %v2900
    %v3979 = vunpack.c.l.b16 %v2901
    %v3980 = vunpack.c.h.b16 %v2901
    %v3981 = vunpack.c.l.b16 %v2902
    %v3982 = vunpack.c.h.b16 %v2902
    %v3983 = vunpack.c.l.b16 %v2903
    %v3984 = vunpack.c.h.b16 %v2903
    %v3985 = vunpack.c.l.b16 %v2904
    %v3986 = vunpack.c.h.b16 %v2904
    %v3987 = vunpack.c.l.b16 %v2905
    %v3988 = vunpack.c.h.b16 %v2905
    %v3989 = vunpack.c.l.b16 %v2906
    %v3990 = vunpack.c.h.b16 %v2906
    %v3991 = vunpack.c.l.b16 %v2907
    %v3992 = vunpack.c.h.b16 %v2907
    %v3993 = vunpack.c.l.b16 %v2908
    %v3994 = vunpack.c.h.b16 %v2908
    %v3995 = vunpack.c.l.b16 %v2909
    %v3996 = vunpack.c.h.b16 %v2909
    %v3997 = vunpack.c.l.b16 %v2910
    %v3998 = vunpack.c.h.b16 %v2910
    %v3999 = vunpack.c.l.b16 %v2911
    %v4000 = vunpack.c.h.b16 %v2911
    %v4001 = vunpack.c.l.b16 %v2912
    %v4002 = vunpack.c.h.b16 %v2912
    %v4003 = vunpack.c.l.b16 %v2913
    %v4004 = vunpack.c.h.b16 %v2913
    %v4005 = vunpack.c.l.b16 %v2914
    %v4006 = vunpack.c.h.b16 %v2914
    %v4007 = vunpack.c.l.b16 %v2915
    %v4008 = vunpack.c.h.b16 %v2915
    %v4009 = vunpack.c.l.b16 %v2916
    %v4010 = vunpack.c.h.b16 %v2916
    %v4011 = vunpack.c.l.b16 %v2917
    %v4012 = vunpack.c.h.b16 %v2917
    %v4013 = vunpack.c.l.b16 %v2918
    %v4014 = vunpack.c.h.b16 %v2918
    %v4015 = vunpack.c.l.b16 %v2919
    %v4016 = vunpack.c.h.b16 %v2919
    %v4017 = vunpack.c.l.b16 %v2920
    %v4018 = vunpack.c.h.b16 %v2920
    %v4019 = vunpack.c.l.b16 %v2921
    %v4020 = vunpack.c.h.b16 %v2921
    %v4021 = vunpack.c.l.b16 %v2922
    %v4022 = vunpack.c.h.b16 %v2922
    %v4023 = vunpack.c.l.b16 %v2923
    %v4024 = vunpack.c.h.b16 %v2923
    %v4025 = vunpack.c.l.b16 %v2924
    %v4026 = vunpack.c.h.b16 %v2924
    %v4027 = vunpack.c.l.b16 %v2925
    %v4028 = vunpack.c.h.b16 %v2925
    %v4029 = vunpack.c.l.b16 %v2926
    %v4030 = vunpack.c.h.b16 %v2926
    %v4031 = vunpack.c.l.b16 %v2927
    %v4032 = vunpack.c.h.b16 %v2927
    %v4033 = vunpack.c.l.b16 %v2928
    %v4034 = vunpack.c.h.b16 %v2928
    %v4035 = vunpack.c.l.b16 %v2929
    %v4036 = vunpack.c.h.b16 %v2929
    %v4037 = vunpack.c.l.b16 %v2930
    %v4038 = vunpack.c.h.b16 %v2930
    %v4039 = vunpack.c.l.b16 %v2931
    %v4040 = vunpack.c.h.b16 %v2931
    %v4041 = vunpack.c.l.b16 %v2932
    %v4042 = vunpack.c.h.b16 %v2932
    %v4043 = vunpack.c.l.b16 %v2933
    %v4044 = vunpack.c.h.b16 %v2933
    %v4045 = vunpack.c.l.b16 %v2934
    %v4046 = vunpack.c.h.b16 %v2934
    %v4047 = vunpack.c.l.b16 %v2935
    %v4048 = vunpack.c.h.b16 %v2935
    %v4049 = vunpack.c.l.b16 %v2936
    %v4050 = vunpack.c.h.b16 %v2936
    %v4051 = vunpack.c.l.b16 %v2937
    %v4052 = vunpack.c.h.b16 %v2937
    %v4053 = vunpack.c.l.b16 %v2938
    %v4054 = vunpack.c.h.b16 %v2938
    %v4055 = vunpack.c.l.b16 %v2939
    %v4056 = vunpack.c.h.b16 %v2939
    %v4057 = vunpack.c.l.b16 %v2940
    %v4058 = vunpack.c.h.b16 %v2940
    %v4059 = vunpack.c.l.b16 %v2941
    %v4060 = vunpack.c.h.b16 %v2941
    %v4061 = vunpack.c.l.b16 %v2942
    %v4062 = vunpack.c.h.b16 %v2942
    %v4063 = vunpack.c.l.b16 %v2943
    %v4064 = vunpack.c.h.b16 %v2943
    %v4065 = vunpack.c.l.b16 %v2944
    %v4066 = vunpack.c.h.b16 %v2944
    %v4067 = vunpack.c.l.b16 %v2945
    %v4068 = vunpack.c.h.b16 %v2945
    %v4069 = vunpack.c.l.b16 %v2946
    %v4070 = vunpack.c.h.b16 %v2946
    %v4071 = vunpack.c.l.b16 %v2947
    %v4072 = vunpack.c.h.b16 %v2947
    %v4073 = vunpack.c.l.b16 %v2948
    %v4074 = vunpack.c.h.b16 %v2948
    %v4075 = vunpack.c.l.b16 %v2949
    %v4076 = vunpack.c.h.b16 %v2949
    %v4077 = vunpack.c.l.b16 %v2950
    %v4078 = vunpack.c.h.b16 %v2950
    %v4079 = vunpack.c.l.b16 %v2951
    %v4080 = vunpack.c.h.b16 %v2951
    %v4081 = vunpack.c.l.b16 %v2952
    %v4082 = vunpack.c.h.b16 %v2952
    %v4083 = vunpack.c.l.b16 %v2953
    %v4084 = vunpack.c.h.b16 %v2953
    %v4085 = vunpack.c.l.b16 %v2954
    %v4086 = vunpack.c.h.b16 %v2954
    %v4087 = vunpack.c.l.b16 %v2955
    %v4088 = vunpack.c.h.b16 %v2955
    %v4089 = vunpack.c.l.b16 %v2956
    %v4090 = vunpack.c.h.b16 %v2956
    %v4091 = vunpack.c.l.b16 %v2957
    %v4092 = vunpack.c.h.b16 %v2957
    %v4093 = vunpack.c.l.b16 %v2958
    %v4094 = vunpack.c.h.b16 %v2958
    %v4095 = vunpack.c.l.b16 %v2959
    %v4096 = vunpack.c.h.b16 %v2959
    %v4097 = vunpack.c.l.b16 %v2960
    %v4098 = vunpack.c.h.b16 %v2960
    %v4099 = vunpack.c.l.b16 %v2961
    %v4100 = vunpack.c.h.b16 %v2961
    %v4101 = vunpack.c.l.b16 %v2962
    %v4102 = vunpack.c.h.b16 %v2962
    %v4103 = vunpack.c.l.b16 %v2963
    %v4104 = vunpack.c.h.b16 %v2963
    %v4105 = vunpack.c.l.b16 %v2964
    %v4106 = vunpack.c.h.b16 %v2964
    %v4107 = vunpack.c.l.b16 %v2965
    %v4108 = vunpack.c.h.b16 %v2965
    %v4109 = vunpack.c.l.b16 %v2966
    %v4110 = vunpack.c.h.b16 %v2966
    %v4111 = vunpack.c.l.b16 %v2967
    %v4112 = vunpack.c.h.b16 %v2967
    %v4113 = vunpack.c.l.b16 %v2968
    %v4114 = vunpack.c.h.b16 %v2968
    %v4115 = vunpack.c.l.b16 %v2969
    %v4116 = vunpack.c.h.b16 %v2969
    %v4117 = vunpack.c.l.b16 %v2970
    %v4118 = vunpack.c.h.b16 %v2970
    %v4119 = vunpack.c.l.b16 %v2971
    %v4120 = vunpack.c.h.b16 %v2971
    %v4121 = vunpack.c.l.b16 %v2972
    %v4122 = vunpack.c.h.b16 %v2972
    %v4123 = vunpack.c.l.b16 %v2973
    %v4124 = vunpack.c.h.b16 %v2973
    %v4125 = vunpack.c.l.b16 %v2974
    %v4126 = vunpack.c.h.b16 %v2974
    %v4127 = vunpack.c.l.b16 %v2975
    %v4128 = vunpack.c.h.b16 %v2975
    %v4129 = vunpack.c.l.b16 %v2976
    %v4130 = vunpack.c.h.b16 %v2976
    %v4131 = vunpack.c.l.b16 %v2977
    %v4132 = vunpack.c.h.b16 %v2977
    %v4133 = vunpack.c.l.b16 %v2978
    %v4134 = vunpack.c.h.b16 %v2978
    %v4135 = vunpack.c.l.b16 %v2979
    %v4136 = vunpack.c.h.b16 %v2979
    %v4137 = vunpack.c.l.b16 %v2980
    %v4138 = vunpack.c.h.b16 %v2980
    %v4139 = vunpack.c.l.b16 %v2981
    %v4140 = vunpack.c.h.b16 %v2981
    %v4141 = vunpack.c.l.b16 %v2982
    %v4142 = vunpack.c.h.b16 %v2982
    %v4143 = vunpack.c.l.b16 %v2983
    %v4144 = vunpack.c.h.b16 %v2983
    %v4145 = vunpack.c.l.b16 %v2984
    %v4146 = vunpack.c.h.b16 %v2984
    %v4147 = vunpack.c.l.b16 %v2985
    %v4148 = vunpack.c.h.b16 %v2985
    %v4149 = vunpack.c.l.b16 %v2986
    %v4150 = vunpack.c.h.b16 %v2986
    %v4151 = vunpack.c.l.b16 %v2987
    %v4152 = vunpack.c.h.b16 %v2987
    %v4153 = vunpack.c.l.b16 %v2988
    %v4154 = vunpack.c.h.b16 %v2988
    %v4155 = vunpack.c.l.b16 %v2989
    %v4156 = vunpack.c.h.b16 %v2989
    %v4157 = vunpack.c.l.b16 %v2990
    %v4158 = vunpack.c.h.b16 %v2990
    %v4159 = vunpack.c.l.b16 %v2991
    %v4160 = vunpack.c.h.b16 %v2991
    %v4161 = vunpack.c.l.b16 %v2992
    %v4162 = vunpack.c.h.b16 %v2992
    %v4163 = vunpack.c.l.b16 %v2993
    %v4164 = vunpack.c.h.b16 %v2993
    %v4165 = vunpack.c.l.b16 %v2994
    %v4166 = vunpack.c.h.b16 %v2994
    %v4167 = vunpack.c.l.b16 %v2995
    %v4168 = vunpack.c.h.b16 %v2995
    %v4169 = vunpack.c.l.b16 %v2996
    %v4170 = vunpack.c.h.b16 %v2996
    %v4171 = vunpack.c.l.b16 %v2997
    %v4172 = vunpack.c.h.b16 %v2997
    %v4173 = vunpack.c.l.b16 %v2998
    %v4174 = vunpack.c.h.b16 %v2998
    %v4175 = vunpack.c.l.b16 %v2999
    %v4176 = vunpack.c.h.b16 %v2999
    %v4177 = vunpack.c.l.b16 %v3000
    %v4178 = vunpack.c.h.b16 %v3000
    %v4179 = vunpack.c.l.b16 %v3001
    %v4180 = vunpack.c.h.b16 %v3001
    %v4181 = vunpack.c.l.b16 %v3002
    %v4182 = vunpack.c.h.b16 %v3002
    %v4183 = vunpack.c.l.b16 %v3003
    %v4184 = vunpack.c.h.b16 %v3003
    %v4185 = vunpack.c.l.b16 %v3004
    %v4186 = vunpack.c.h.b16 %v3004
    %v4187 = vunpack.c.l.b16 %v3005
    %v4188 = vunpack.c.h.b16 %v3005
    %v4189 = vunpack.c.l.b16 %v3006
    %v4190 = vunpack.c.h.b16 %v3006
    %v4191 = vunpack.c.l.b16 %v3007
    %v4192 = vunpack.c.h.b16 %v3007
    %v4193 = vunpack.c.l.b16 %v3008
    %v4194 = vunpack.c.h.b16 %v3008
    %v4195 = vunpack.c.l.b16 %v3009
    %v4196 = vunpack.c.h.b16 %v3009
    %v4197 = vunpack.c.l.b16 %v3010
    %v4198 = vunpack.c.h.b16 %v3010
    %v4199 = vunpack.c.l.b16 %v3011
    %v4200 = vunpack.c.h.b16 %v3011
    %v4201 = vunpack.c.l.b16 %v3012
    %v4202 = vunpack.c.h.b16 %v3012
    %v4203 = vunpack.c.l.b16 %v3013
    %v4204 = vunpack.c.h.b16 %v3013
    %v4205 = vunpack.c.l.b16 %v3014
    %v4206 = vunpack.c.h.b16 %v3014
    %v4207 = vunpack.c.l.b16 %v3015
    %v4208 = vunpack.c.h.b16 %v3015
    %v4209 = vunpack.c.l.b16 %v3016
    %v4210 = vunpack.c.h.b16 %v3016
    %v4211 = vunpack.c.l.b16 %v3017
    %v4212 = vunpack.c.h.b16 %v3017
    %v4213 = vunpack.c.l.b16 %v3018
    %v4214 = vunpack.c.h.b16 %v3018
    %v4215 = vunpack.c.l.b16 %v3019
    %v4216 = vunpack.c.h.b16 %v3019
    %v4217 = vunpack.c.l.b16 %v3020
    %v4218 = vunpack.c.h.b16 %v3020
    %v4219 = vunpack.c.l.b16 %v3021
    %v4220 = vunpack.c.h.b16 %v3021
    %v4221 = vunpack.c.l.b16 %v3022
    %v4222 = vunpack.c.h.b16 %v3022
    %v4223 = vunpack.c.l.b16 %v3023
    %v4224 = vunpack.c.h.b16 %v3023
    %v4225 = vunpack.c.l.b16 %v3024
    %v4226 = vunpack.c.h.b16 %v3024
    %v4227 = vunpack.c.l.b16 %v3025
    %v4228 = vunpack.c.h.b16 %v3025
    %v4229 = vunpack.c.l.b16 %v3026
    %v4230 = vunpack.c.h.b16 %v3026
    %v4231 = vunpack.c.l.b16 %v3027
    %v4232 = vunpack.c.h.b16 %v3027
    %v4233 = vunpack.c.l.b16 %v3028
    %v4234 = vunpack.c.h.b16 %v3028
    %v4235 = vunpack.c.l.b16 %v3029
    %v4236 = vunpack.c.h.b16 %v3029
    %v4237 = vunpack.c.l.b16 %v3030
    %v4238 = vunpack.c.h.b16 %v3030
    %v4239 = vunpack.c.l.b16 %v3031
    %v4240 = vunpack.c.h.b16 %v3031
    %v4241 = vunpack.c.l.b16 %v3032
    %v4242 = vunpack.c.h.b16 %v3032
    %v4243 = vunpack.c.l.b16 %v3033
    %v4244 = vunpack.c.h.b16 %v3033
    %v4245 = vunpack.c.l.b16 %v3034
    %v4246 = vunpack.c.h.b16 %v3034
    %v4247 = vunpack.c.l.b16 %v3035
    %v4248 = vunpack.c.h.b16 %v3035
    %v4249 = vunpack.c.l.b16 %v3036
    %v4250 = vunpack.c.h.b16 %v3036
    %v4251 = vunpack.c.l.b16 %v3037
    %v4252 = vunpack.c.h.b16 %v3037
    %v4253 = vunpack.c.l.b16 %v3038
    %v4254 = vunpack.c.h.b16 %v3038
    %v4255 = vunpack.c.l.b16 %v3039
    %v4256 = vunpack.c.h.b16 %v3039
    %v4257 = vunpack.c.l.b16 %v3040
    %v4258 = vunpack.c.h.b16 %v3040
    %v4259 = vunpack.c.l.b16 %v3041
    %v4260 = vunpack.c.h.b16 %v3041
    %v4261 = vunpack.c.l.b16 %v3042
    %v4262 = vunpack.c.h.b16 %v3042
    %v4263 = vunpack.c.l.b16 %v3043
    %v4264 = vunpack.c.h.b16 %v3043
    %v4265 = vunpack.c.l.b16 %v3044
    %v4266 = vunpack.c.h.b16 %v3044
    %v4267 = vunpack.c.l.b16 %v3045
    %v4268 = vunpack.c.h.b16 %v3045
    %v4269 = vunpack.c.l.b16 %v3046
    %v4270 = vunpack.c.h.b16 %v3046
    %v4271 = vunpack.c.l.b16 %v3047
    %v4272 = vunpack.c.h.b16 %v3047
    %v4273 = vunpack.c.l.b16 %v3048
    %v4274 = vunpack.c.h.b16 %v3048
    %v4275 = vunpack.c.l.b16 %v3049
    %v4276 = vunpack.c.h.b16 %v3049
    %v4277 = vunpack.c.l.b16 %v3050
    %v4278 = vunpack.c.h.b16 %v3050
    %v4279 = vunpack.c.l.b16 %v3051
    %v4280 = vunpack.c.h.b16 %v3051
    %v4281 = vunpack.c.l.b16 %v3052
    %v4282 = vunpack.c.h.b16 %v3052
    %v4283 = vunpack.c.l.b16 %v3053
    %v4284 = vunpack.c.h.b16 %v3053
    %v4285 = vunpack.c.l.b16 %v3054
    %v4286 = vunpack.c.h.b16 %v3054
    %v4287 = vunpack.c.l.b16 %v3055
    %v4288 = vunpack.c.h.b16 %v3055
    %v4289 = vunpack.c.l.b16 %v3056
    %v4290 = vunpack.c.h.b16 %v3056
    %v4291 = vunpack.c.l.b16 %v3057
    %v4292 = vunpack.c.h.b16 %v3057
    %v4293 = vunpack.c.l.b16 %v3058
    %v4294 = vunpack.c.h.b16 %v3058
    %v4295 = vunpack.c.l.b16 %v3059
    %v4296 = vunpack.c.h.b16 %v3059
    %v4297 = vunpack.c.l.b16 %v3060
    %v4298 = vunpack.c.h.b16 %v3060
    %v4299 = vunpack.c.l.b16 %v3061
    %v4300 = vunpack.c.h.b16 %v3061
    %v4301 = vunpack.c.l.b16 %v3062
    %v4302 = vunpack.c.h.b16 %v3062
    %v4303 = vunpack.c.l.b16 %v3063
    %v4304 = vunpack.c.h.b16 %v3063
    %v4305 = vunpack.c.l.b16 %v3064
    %v4306 = vunpack.c.h.b16 %v3064
    %v4307 = vunpack.c.l.b16 %v3065
    %v4308 = vunpack.c.h.b16 %v3065
    %v4309 = vunpack.c.l.b16 %v3066
    %v4310 = vunpack.c.h.b16 %v3066
    %v4311 = vunpack.c.l.b16 %v3067
    %v4312 = vunpack.c.h.b16 %v3067
    %v4313 = vunpack.c.l.b16 %v3068
    %v4314 = vunpack.c.h.b16 %v3068
    %v4315 = vunpack.c.l.b16 %v3069
    %v4316 = vunpack.c.h.b16 %v3069
    %v4317 = vunpack.c.l.b16 %v3070
    %v4318 = vunpack.c.h.b16 %v3070
    %v4319 = vunpack.c.l.b16 %v3071
    %v4320 = vunpack.c.h.b16 %v3071
    %v4321 = vunpack.c.l.b16 %v3072
    %v4322 = vunpack.c.h.b16 %v3072
    %v4323 = vunpack.c.l.b16 %v3073
    %v4324 = vunpack.c.h.b16 %v3073
    %v4325 = vunpack.c.l.b16 %v3074
    %v4326 = vunpack.c.h.b16 %v3074
    %v4327 = vunpack.c.l.b16 %v3075
    %v4328 = vunpack.c.h.b16 %v3075
    %v4329 = vunpack.c.l.b16 %v3076
    %v4330 = vunpack.c.h.b16 %v3076
    %v4331 = vunpack.c.l.b16 %v3077
    %v4332 = vunpack.c.h.b16 %v3077
    %v4333 = vunpack.c.l.b16 %v3078
    %v4334 = vunpack.c.h.b16 %v3078
    %v4335 = vunpack.c.l.b16 %v3079
    %v4336 = vunpack.c.h.b16 %v3079
    %v4337 = vunpack.c.l.b16 %v3080
    %v4338 = vunpack.c.h.b16 %v3080
    %v4339 = vunpack.c.l.b16 %v3081
    %v4340 = vunpack.c.h.b16 %v3081
    %v4341 = vunpack.c.l.b16 %v3082
    %v4342 = vunpack.c.h.b16 %v3082
    %v4343 = vunpack.c.l.b16 %v3083
    %v4344 = vunpack.c.h.b16 %v3083
    %v4345 = vunpack.c.l.b16 %v3084
    %v4346 = vunpack.c.h.b16 %v3084
    %v4347 = vunpack.c.l.b16 %v3085
    %v4348 = vunpack.c.h.b16 %v3085
    %v4349 = vunpack.c.l.b16 %v3086
    %v4350 = vunpack.c.h.b16 %v3086
    %v4351 = vunpack.c.l.b16 %v3087
    %v4352 = vunpack.c.h.b16 %v3087
    %v4353 = vunpack.c.l.b16 %v3088
    %v4354 = vunpack.c.h.b16 %v3088
    %v4355 = vunpack.c.l.b16 %v3089
    %v4356 = vunpack.c.h.b16 %v3089
    %v4357 = vunpack.c.l.b16 %v3090
    %v4358 = vunpack.c.h.b16 %v3090
    %v4359 = vunpack.c.l.b16 %v3091
    %v4360 = vunpack.c.h.b16 %v3091
    %v4361 = vunpack.c.l.b16 %v3092
    %v4362 = vunpack.c.h.b16 %v3092
    %v4363 = vunpack.c.l.b16 %v3093
    %v4364 = vunpack.c.h.b16 %v3093
    %v4365 = vunpack.c.l.b16 %v3094
    %v4366 = vunpack.c.h.b16 %v3094
    %v4367 = vunpack.c.l.b16 %v3095
    %v4368 = vunpack.c.h.b16 %v3095
    %v4369 = vunpack.c.l.b16 %v3096
    %v4370 = vunpack.c.h.b16 %v3096
    %v4371 = vunpack.c.l.b16 %v3097
    %v4372 = vunpack.c.h.b16 %v3097
    %v4373 = vunpack.c.l.b16 %v3098
    %v4374 = vunpack.c.h.b16 %v3098
    %v4375 = vunpack.c.l.b16 %v3099
    %v4376 = vunpack.c.h.b16 %v3099
    %v4377 = vunpack.c.l.b16 %v3100
    %v4378 = vunpack.c.h.b16 %v3100
    %v4379 = vunpack.c.l.b16 %v3101
    %v4380 = vunpack.c.h.b16 %v3101
    %v4381 = vunpack.c.l.b16 %v3102
    %v4382 = vunpack.c.h.b16 %v3102
    %v4383 = vunpack.c.l.b16 %v3103
    %v4384 = vunpack.c.h.b16 %v3103
    %v4385 = vunpack.c.l.b16 %v3104
    %v4386 = vunpack.c.h.b16 %v3104
    %v4387 = vunpack.c.l.b16 %v3105
    %v4388 = vunpack.c.h.b16 %v3105
    %v4389 = vunpack.c.l.b16 %v3106
    %v4390 = vunpack.c.h.b16 %v3106
    %v4391 = vunpack.c.l.b16 %v3107
    %v4392 = vunpack.c.h.b16 %v3107
    %v4393 = vunpack.c.l.b16 %v3108
    %v4394 = vunpack.c.h.b16 %v3108
    %v4395 = vunpack.c.l.b16 %v3109
    %v4396 = vunpack.c.h.b16 %v3109
    %v4397 = vunpack.c.l.b16 %v3110
    %v4398 = vunpack.c.h.b16 %v3110
    %v4399 = vunpack.c.l.b16 %v3111
    %v4400 = vunpack.c.h.b16 %v3111
    %v4401 = vunpack.c.l.b16 %v3112
    %v4402 = vunpack.c.h.b16 %v3112
    %v4403 = vunpack.c.l.b16 %v3113
    %v4404 = vunpack.c.h.b16 %v3113
    %v4405 = vunpack.c.l.b16 %v3114
    %v4406 = vunpack.c.h.b16 %v3114
    %v4407 = vunpack.c.l.b16 %v3115
    %v4408 = vunpack.c.h.b16 %v3115
    %v4409 = vunpack.c.l.b16 %v3116
    %v4410 = vunpack.c.h.b16 %v3116
    %v4411 = vunpack.c.l.b16 %v3117
    %v4412 = vunpack.c.h.b16 %v3117
    %v4413 = vunpack.c.l.b16 %v3118
    %v4414 = vunpack.c.h.b16 %v3118
    %v4415 = vunpack.c.l.b16 %v3119
    %v4416 = vunpack.c.h.b16 %v3119
    %v4417 = vunpack.c.l.b16 %v3120
    %v4418 = vunpack.c.h.b16 %v3120
    %v4419 = vunpack.c.l.b16 %v3121
    %v4420 = vunpack.c.h.b16 %v3121
    %v4421 = vunpack.c.l.b16 %v3122
    %v4422 = vunpack.c.h.b16 %v3122
    %v4423 = vunpack.c.l.b16 %v3123
    %v4424 = vunpack.c.h.b16 %v3123
    %v4425 = vunpack.c.l.b16 %v3124
    %v4426 = vunpack.c.h.b16 %v3124
    %v4427 = vunpack.c.l.b16 %v3125
    %v4428 = vunpack.c.h.b16 %v3125
    %v4429 = vunpack.c.l.b16 %v3126
    %v4430 = vunpack.c.h.b16 %v3126
    %v4431 = vunpack.c.l.b16 %v3127
    %v4432 = vunpack.c.h.b16 %v3127
    %v4433 = vunpack.c.l.b16 %v3128
    %v4434 = vunpack.c.h.b16 %v3128
    %v4435 = vunpack.c.l.b16 %v3129
    %v4436 = vunpack.c.h.b16 %v3129
    %v4437 = vunpack.c.l.b16 %v3130
    %v4438 = vunpack.c.h.b16 %v3130
    %v4439 = vunpack.c.l.b16 %v3131
    %v4440 = vunpack.c.h.b16 %v3131
    %v4441 = vunpack.c.l.b16 %v3132
    %v4442 = vunpack.c.h.b16 %v3132
    %v4443 = vunpack.c.l.b16 %v3133
    %v4444 = vunpack.c.h.b16 %v3133
    %v4445 = vunpack.c.l.b16 %v3134
    %v4446 = vunpack.c.h.b16 %v3134
    %v4447 = vunpack.c.l.b16 %v3135
    %v4448 = vunpack.c.h.b16 %v3135
    %v4449 = vunpack.c.l.b16 %v3136
    %v4450 = vunpack.c.h.b16 %v3136
    %v4451 = vunpack.c.l.b16 %v3137
    %v4452 = vunpack.c.h.b16 %v3137
    %v4453 = vunpack.c.l.b16 %v3138
    %v4454 = vunpack.c.h.b16 %v3138
    %v4455 = vunpack.c.l.b16 %v3139
    %v4456 = vunpack.c.h.b16 %v3139
    %v4457 = vunpack.c.l.b16 %v3140
    %v4458 = vunpack.c.h.b16 %v3140
    %v4459 = vunpack.c.l.b16 %v3141
    %v4460 = vunpack.c.h.b16 %v3141
    %v4461 = vunpack.c.l.b16 %v3142
    %v4462 = vunpack.c.h.b16 %v3142
    %v4463 = vunpack.c.l.b16 %v3143
    %v4464 = vunpack.c.h.b16 %v3143
    %v4465 = vunpack.c.l.b16 %v3144
    %v4466 = vunpack.c.h.b16 %v3144
    %v4467 = vunpack.c.l.b16 %v3145
    %v4468 = vunpack.c.h.b16 %v3145
    %v4469 = vunpack.c.l.b16 %v3146
    %v4470 = vunpack.c.h.b16 %v3146
    %v4471 = vunpack.c.l.b16 %v3147
    %v4472 = vunpack.c.h.b16 %v3147
    %v4473 = vunpack.c.l.b16 %v3148
    %v4474 = vunpack.c.h.b16 %v3148
    %v4475 = vunpack.c.l.b16 %v3149
    %v4476 = vunpack.c.h.b16 %v3149
    %v4477 = vunpack.c.l.b16 %v3150
    %v4478 = vunpack.c.h.b16 %v3150
    %v4479 = vunpack.c.l.b16 %v3151
    %v4480 = vunpack.c.h.b16 %v3151
    %v4481 = vunpack.c.l.b16 %v3152
    %v4482 = vunpack.c.h.b16 %v3152
    %v4483 = vunpack.c.l.b16 %v3153
    %v4484 = vunpack.c.h.b16 %v3153
    %v4485 = vunpack.c.l.b16 %v3154
    %v4486 = vunpack.c.h.b16 %v3154
    %v4487 = vunpack.c.l.b16 %v3155
    %v4488 = vunpack.c.h.b16 %v3155
    %v4489 = vunpack.c.l.b16 %v3156
    %v4490 = vunpack.c.h.b16 %v3156
    %v4491 = vunpack.c.l.b16 %v3157
    %v4492 = vunpack.c.h.b16 %v3157
    %v4493 = vunpack.c.l.b16 %v3158
    %v4494 = vunpack.c.h.b16 %v3158
    %v4495 = vunpack.c.l.b16 %v3159
    %v4496 = vunpack.c.h.b16 %v3159
    %v4497 = vunpack.c.l.b16 %v3160
    %v4498 = vunpack.c.h.b16 %v3160
    %v4499 = vpack.c.b16 %v3643, %v3635
    %v4500 = vpack.c.b16 %v3644, %v3636
    %v4501 = vpack.c.b16 %v3645, %v3637
    %v4502 = vpack.c.b16 %v3646, %v3638
    %v4503 = vpack.c.b16 %v3647, %v3639
    %v4504 = vpack.c.b16 %v3648, %v3640
    %v4505 = vpack.c.b16 %v3649, %v3641
    %v4506 = vpack.c.b16 %v3650, %v3642
    %v4507 = vpack.c.b16 %v3659, %v3651
    %v4508 = vpack.c.b16 %v3660, %v3652
    %v4509 = vpack.c.b16 %v3661, %v3653
    %v4510 = vpack.c.b16 %v3662, %v3654
    %v4511 = vpack.c.b16 %v3663, %v3655
    %v4512 = vpack.c.b16 %v3664, %v3656
    %v4513 = vpack.c.b16 %v3665, %v3657
    %v4514 = vpack.c.b16 %v3666, %v3658
    %v4515 = vpack.c.b16 %v3675, %v3667
    %v4516 = vpack.c.b16 %v3676, %v3668
    %v4517 = vpack.c.b16 %v3677, %v3669
    %v4518 = vpack.c.b16 %v3678, %v3670
    %v4519 = vpack.c.b16 %v3679, %v3671
    %v4520 = vpack.c.b16 %v3680, %v3672
    %v4521 = vpack.c.b16 %v3681, %v3673
    %v4522 = vpack.c.b16 %v3682, %v3674
    %v4523 = vpack.c.b16 %v3691, %v3683
    %v4524 = vpack.c.b16 %v3692, %v3684
    %v4525 = vpack.c.b16 %v3693, %v3685
    %v4526 = vpack.c.b16 %v3694, %v3686
    %v4527 = vpack.c.b16 %v3695, %v3687
    %v4528 = vpack.c.b16 %v3696, %v3688
    %v4529 = vpack.c.b16 %v3697, %v3689
    %v4530 = vpack.c.b16 %v3698, %v3690
    %v4531 = vpack.c.b16 %v3707, %v3699
    %v4532 = vpack.c.b16 %v3708, %v3700
    %v4533 = vpack.c.b16 %v3709, %v3701
    %v4534 = vpack.c.b16 %v3710, %v3702
    %v4535 = vpack.c.b16 %v3711, %v3703
    %v4536 = vpack.c.b16 %v3712, %v3704
    %v4537 = vpack.c.b16 %v3713, %v3705
    %v4538 = vpack.c.b16 %v3714, %v3706
    %v4539 = vpack.c.b16 %v3723, %v3715
    %v4540 = vpack.c.b16 %v3724, %v3716
    %v4541 = vpack.c.b16 %v3725, %v3717
    %v4542 = vpack.c.b16 %v3726, %v3718
    %v4543 = vpack.c.b16 %v3727, %v3719
    %v4544 = vpack.c.b16 %v3728, %v3720
    %v4545 = vpack.c.b16 %v3729, %v3721
    %v4546 = vpack.c.b16 %v3730, %v3722
    %v4547 = vpack.c.b16 %v3739, %v3731
    %v4548 = vpack.c.b16 %v3740, %v3732
    %v4549 = vpack.c.b16 %v3741, %v3733
    %v4550 = vpack.c.b16 %v3742, %v3734
    %v4551 = vpack.c.b16 %v3743, %v3735
    %v4552 = vpack.c.b16 %v3744, %v3736
    %v4553 = vpack.c.b16 %v3745, %v3737
    %v4554 = vpack.c.b16 %v3746, %v3738
    %v4555 = vpack.c.b16 %v3755, %v3747
    %v4556 = vpack.c.b16 %v3756, %v3748
    %v4557 = vpack.c.b16 %v3757, %v3749
    %v4558 = vpack.c.b16 %v3758, %v3750
    %v4559 = vpack.c.b16 %v3759, %v3751
    %v4560 = vpack.c.b16 %v3760, %v3752
    %v4561 = vpack.c.b16 %v3761, %v3753
    %v4562 = vpack.c.b16 %v3762, %v3754
    %v4563 = vpack.c.b16 %v3771, %v3763
    %v4564 = vpack.c.b16 %v3772, %v3764
    %v4565 = vpack.c.b16 %v3773, %v3765
    %v4566 = vpack.c.b16 %v3774, %v3766
    %v4567 = vpack.c.b16 %v3775, %v3767
    %v4568 = vpack.c.b16 %v3776, %v3768
    %v4569 = vpack.c.b16 %v3777, %v3769
    %v4570 = vpack.c.b16 %v3778, %v3770
    %v4571 = vpack.c.b16 %v3787, %v3779
    %v4572 = vpack.c.b16 %v3788, %v3780
    %v4573 = vpack.c.b16 %v3789, %v3781
    %v4574 = vpack.c.b16 %v3790, %v3782
    %v4575 = vpack.c.b16 %v3791, %v3783
    %v4576 = vpack.c.b16 %v3792, %v3784
    %v4577 = vpack.c.b16 %v3793, %v3785
    %v4578 = vpack.c.b16 %v3794, %v3786
    %v4579 = vpack.c.b16 %v3803, %v3795
    %v4580 = vpack.c.b16 %v3804, %v3796
    %v4581 = vpack.c.b16 %v3805, %v3797
    %v4582 = vpack.c.b16 %v3806, %v3798
    %v4583 = vpack.c.b16 %v3807, %v3799
    %v4584 = vpack.c.b16 %v3808, %v3800
    %v4585 = vpack.c.b16 %v3809, %v3801
    %v4586 = vpack.c.b16 %v3810, %v3802
    %v4587 = vpack.c.b16 %v3819, %v3811
    %v4588 = vpack.c.b16 %v3820, %v3812
    %v4589 = vpack.c.b16 %v3821, %v3813
    %v4590 = vpack.c.b16 %v3822, %v3814
    %v4591 = vpack.c.b16 %v3823, %v3815
    %v4592 = vpack.c.b16 %v3824, %v3816
    %v4593 = vpack.c.b16 %v3825, %v3817
    %v4594 = vpack.c.b16 %v3826, %v3818
    %v4595 = vpack.c.b16 %v3835, %v3827
    %v4596 = vpack.c.b16 %v3836, %v3828
    %v4597 = vpack.c.b16 %v3837, %v3829
    %v4598 = vpack.c.b16 %v3838, %v3830
    %v4599 = vpack.c.b16 %v3839, %v3831
    %v4600 = vpack.c.b16 %v3840, %v3832
    %v4601 = vpack.c.b16 %v3841, %v3833
    %v4602 = vpack.c.b16 %v3842, %v3834
    %v4603 = vpack.c.b16 %v3851, %v3843
    %v4604 = vpack.c.b16 %v3852, %v3844
    %v4605 = vpack.c.b16 %v3853, %v3845
    %v4606 = vpack.c.b16 %v3854, %v3846
    %v4607 = vpack.c.b16 %v3855, %v3847
    %v4608 = vpack.c.b16 %v3856, %v3848
    %v4609 = vpack.c.b16 %v3857, %v3849
    %v4610 = vpack.c.b16 %v3858, %v3850
    %v4611 = vpack.c.b16 %v3867, %v3859
    %v4612 = vpack.c.b16 %v3868, %v3860
    %v4613 = vpack.c.b16 %v3869, %v3861
    %v4614 = vpack.c.b16 %v3870, %v3862
    %v4615 = vpack.c.b16 %v3871, %v3863
    %v4616 = vpack.c.b16 %v3872, %v3864
    %v4617 = vpack.c.b16 %v3873, %v3865
    %v4618 = vpack.c.b16 %v3874, %v3866
    %v4619 = vpack.c.b16 %v3883, %v3875
    %v4620 = vpack.c.b16 %v3884, %v3876
    %v4621 = vpack.c.b16 %v3885, %v3877
    %v4622 = vpack.c.b16 %v3886, %v3878
    %v4623 = vpack.c.b16 %v3887, %v3879
    %v4624 = vpack.c.b16 %v3888, %v3880
    %v4625 = vpack.c.b16 %v3889, %v3881
    %v4626 = vpack.c.b16 %v3890, %v3882
    %v4627 = vpack.c.b16 %v3899, %v3891
    %v4628 = vpack.c.b16 %v3900, %v3892
    %v4629 = vpack.c.b16 %v3901, %v3893
    %v4630 = vpack.c.b16 %v3902, %v3894
    %v4631 = vpack.c.b16 %v3903, %v3895
    %v4632 = vpack.c.b16 %v3904, %v3896
    %v4633 = vpack.c.b16 %v3905, %v3897
    %v4634 = vpack.c.b16 %v3906, %v3898
    %v4635 = vpack.c.b16 %v3915, %v3907
    %v4636 = vpack.c.b16 %v3916, %v3908
    %v4637 = vpack.c.b16 %v3917, %v3909
    %v4638 = vpack.c.b16 %v3918, %v3910
    %v4639 = vpack.c.b16 %v3919, %v3911
    %v4640 = vpack.c.b16 %v3920, %v3912
    %v4641 = vpack.c.b16 %v3921, %v3913
    %v4642 = vpack.c.b16 %v3922, %v3914
    %v4643 = vpack.c.b16 %v3931, %v3923
    %v4644 = vpack.c.b16 %v3932, %v3924
    %v4645 = vpack.c.b16 %v3933, %v3925
    %v4646 = vpack.c.b16 %v3934, %v3926
    %v4647 = vpack.c.b16 %v3935, %v3927
    %v4648 = vpack.c.b16 %v3936, %v3928
    %v4649 = vpack.c.b16 %v3937, %v3929
    %v4650 = vpack.c.b16 %v3938, %v3930
    %v4651 = vpack.c.b16 %v3947, %v3939
    %v4652 = vpack.c.b16 %v3948, %v3940
    %v4653 = vpack.c.b16 %v3949, %v3941
    %v4654 = vpack.c.b16 %v3950, %v3942
    %v4655 = vpack.c.b16 %v3951, %v3943
    %v4656 = vpack.c.b16 %v3952, %v3944
    %v4657 = vpack.c.b16 %v3953, %v3945
    %v4658 = vpack.c.b16 %v3954, %v3946
    %v4659 = vpack.c.b16 %v3963, %v3955
    %v4660 = vpack.c.b16 %v3964, %v3956
    %v4661 = vpack.c.b16 %v3965, %v3957
    %v4662 = vpack.c.b16 %v3966, %v3958
    %v4663 = vpack.c.b16 %v3967, %v3959
    %v4664 = vpack.c.b16 %v3968, %v3960
    %v4665 = vpack.c.b16 %v3969, %v3961
    %v4666 = vpack.c.b16 %v3970, %v3962
    %v4667 = vpack.c.b16 %v3979, %v3971
    %v4668 = vpack.c.b16 %v3980, %v3972
    %v4669 = vpack.c.b16 %v3981, %v3973
    %v4670 = vpack.c.b16 %v3982, %v3974
    %v4671 = vpack.c.b16 %v3983, %v3975
    %v4672 = vpack.c.b16 %v3984, %v3976
    %v4673 = vpack.c.b16 %v3985, %v3977
    %v4674 = vpack.c.b16 %v3986, %v3978
    %v4675 = vpack.c.b16 %v3995, %v3987
    %v4676 = vpack.c.b16 %v3996, %v3988
    %v4677 = vpack.c.b16 %v3997, %v3989
    %v4678 = vpack.c.b16 %v3998, %v3990
    %v4679 = vpack.c.b16 %v3999, %v3991
    %v4680 = vpack.c.b16 %v4000, %v3992
    %v4681 = vpack.c.b16 %v4001, %v3993
    %v4682 = vpack.c.b16 %v4002, %v3994
    %v4683 = vpack.c.b16 %v4011, %v4003
    %v4684 = vpack.c.b16 %v4012, %v4004
    %v4685 = vpack.c.b16 %v4013, %v4005
    %v4686 = vpack.c.b16 %v4014, %v4006
    %v4687 = vpack.c.b16 %v4015, %v4007
    %v4688 = vpack.c.b16 %v4016, %v4008
    %v4689 = vpack.c.b16 %v4017, %v4009
    %v4690 = vpack.c.b16 %v4018, %v4010
    %v4691 = vpack.c.b16 %v4027, %v4019
    %v4692 = vpack.c.b16 %v4028, %v4020
    %v4693 = vpack.c.b16 %v4029, %v4021
    %v4694 = vpack.c.b16 %v4030, %v4022
    %v4695 = vpack.c.b16 %v4031, %v4023
    %v4696 = vpack.c.b16 %v4032, %v4024
    %v4697 = vpack.c.b16 %v4033, %v4025
    %v4698 = vpack.c.b16 %v4034, %v4026
    %v4699 = vpack.c.b16 %v4043, %v4035
    %v4700 = vpack.c.b16 %v4044, %v4036
    %v4701 = vpack.c.b16 %v4045, %v4037
    %v4702 = vpack.c.b16 %v4046, %v4038
    %v4703 = vpack.c.b16 %v4047, %v4039
    %v4704 = vpack.c.b16 %v4048, %v4040
    %v4705 = vpack.c.b16 %v4049, %v4041
    %v4706 = vpack.c.b16 %v4050, %v4042
    %v4707 = vpack.c.b16 %v4059, %v4051
    %v4708 = vpack.c.b16 %v4060, %v4052
    %v4709 = vpack.c.b16 %v4061, %v4053
    %v4710 = vpack.c.b16 %v4062, %v4054
    %v4711 = vpack.c.b16 %v4063, %v4055
    %v4712 = vpack.c.b16 %v4064, %v4056
    %v4713 = vpack.c.b16 %v4065, %v4057
    %v4714 = vpack.c.b16 %v4066, %v4058
    %v4715 = vpack.c.b16 %v4075, %v4067
    %v4716 = vpack.c.b16 %v4076, %v4068
    %v4717 = vpack.c.b16 %v4077, %v4069
    %v4718 = vpack.c.b16 %v4078, %v4070
    %v4719 = vpack.c.b16 %v4079, %v4071
    %v4720 = vpack.c.b16 %v4080, %v4072
    %v4721 = vpack.c.b16 %v4081, %v4073
    %v4722 = vpack.c.b16 %v4082, %v4074
    %v4723 = vpack.c.b16 %v4091, %v4083
    %v4724 = vpack.c.b16 %v4092, %v4084
    %v4725 = vpack.c.b16 %v4093, %v4085
    %v4726 = vpack.c.b16 %v4094, %v4086
    %v4727 = vpack.c.b16 %v4095, %v4087
    %v4728 = vpack.c.b16 %v4096, %v4088
    %v4729 = vpack.c.b16 %v4097, %v4089
    %v4730 = vpack.c.b16 %v4098, %v4090
    %v4731 = vpack.c.b16 %v4107, %v4099
    %v4732 = vpack.c.b16 %v4108, %v4100
    %v4733 = vpack.c.b16 %v4109, %v4101
    %v4734 = vpack.c.b16 %v4110, %v4102
    %v4735 = vpack.c.b16 %v4111, %v4103
    %v4736 = vpack.c.b16 %v4112, %v4104
    %v4737 = vpack.c.b16 %v4113, %v4105
    %v4738 = vpack.c.b16 %v4114, %v4106
    %v4739 = vpack.c.b16 %v4123, %v4115
    %v4740 = vpack.c.b16 %v4124, %v4116
    %v4741 = vpack.c.b16 %v4125, %v4117
    %v4742 = vpack.c.b16 %v4126, %v4118
    %v4743 = vpack.c.b16 %v4127, %v4119
    %v4744 = vpack.c.b16 %v4128, %v4120
    %v4745 = vpack.c.b16 %v4129, %v4121
    %v4746 = vpack.c.b16 %v4130, %v4122
    %v4747 = vpack.c.b16 %v4139, %v4131
    %v4748 = vpack.c.b16 %v4140, %v4132
    %v4749 = vpack.c.b16 %v4141, %v4133
    %v4750 = vpack.c.b16 %v4142, %v4134
    %v4751 = vpack.c.b16 %v4143, %v4135
    %v4752 = vpack.c.b16 %v4144, %v4136
    %v4753 = vpack.c.b16 %v4145, %v4137
    %v4754 = vpack.c.b16 %v4146, %v4138
    %v4755 = vpack.c.b16 %v4155, %v4147
    %v4756 = vpack.c.b16 %v4156, %v4148
    %v4757 = vpack.c.b16 %v4157, %v4149
    %v4758 = vpack.c.b16 %v4158, %v4150
    %v4759 = vpack.c.b16 %v4159, %v4151
    %v4760 = vpack.c.b16 %v4160, %v4152
    %v4761 = vpack.c.b16 %v4161, %v4153
    %v4762 = vpack.c.b16 %v4162, %v4154
    %v4763 = vpack.c.b16 %v4171, %v4163
    %v4764 = vpack.c.b16 %v4172, %v4164
    %v4765 = vpack.c.b16 %v4173, %v4165
    %v4766 = vpack.c.b16 %v4174, %v4166
    %v4767 = vpack.c.b16 %v4175, %v4167
    %v4768 = vpack.c.b16 %v4176, %v4168
    %v4769 = vpack.c.b16 %v4177, %v4169
    %v4770 = vpack.c.b16 %v4178, %v4170
    %v4771 = vpack.c.b16 %v4187, %v4179
    %v4772 = vpack.c.b16 %v4188, %v4180
    %v4773 = vpack.c.b16 %v4189, %v4181
    %v4774 = vpack.c.b16 %v4190, %v4182
    %v4775 = vpack.c.b16 %v4191, %v4183
    %v4776 = vpack.c.b16 %v4192, %v4184
    %v4777 = vpack.c.b16 %v4193, %v4185
    %v4778 = vpack.c.b16 %v4194, %v4186
    %v4779 = vpack.c.b16 %v4203, %v4195
    %v4780 = vpack.c.b16 %v4204, %v4196
    %v4781 = vpack.c.b16 %v4205, %v4197
    %v4782 = vpack.c.b16 %v4206, %v4198
    %v4783 = vpack.c.b16 %v4207, %v4199
    %v4784 = vpack.c.b16 %v4208, %v4200
    %v4785 = vpack.c.b16 %v4209, %v4201
    %v4786 = vpack.c.b16 %v4210, %v4202
    %v4787 = vpack.c.b16 %v4219, %v4211
    %v4788 = vpack.c.b16 %v4220, %v4212
    %v4789 = vpack.c.b16 %v4221, %v4213
    %v4790 = vpack.c.b16 %v4222, %v4214
    %v4791 = vpack.c.b16 %v4223, %v4215
    %v4792 = vpack.c.b16 %v4224, %v4216
    %v4793 = vpack.c.b16 %v4225, %v4217
    %v4794 = vpack.c.b16 %v4226, %v4218
    %v4795 = vpack.c.b16 %v4235, %v4227
    %v4796 = vpack.c.b16 %v4236, %v4228
    %v4797 = vpack.c.b16 %v4237, %v4229
    %v4798 = vpack.c.b16 %v4238, %v4230
    %v4799 = vpack.c.b16 %v4239, %v4231
    %v4800 = vpack.c.b16 %v4240, %v4232
    %v4801 = vpack.c.b16 %v4241, %v4233
    %v4802 = vpack.c.b16 %v4242, %v4234
    %v4803 = vpack.c.b16 %v4251, %v4243
    %v4804 = vpack.c.b16 %v4252, %v4244
    %v4805 = vpack.c.b16 %v4253, %v4245
    %v4806 = vpack.c.b16 %v4254, %v4246
    %v4807 = vpack.c.b16 %v4255, %v4247
    %v4808 = vpack.c.b16 %v4256, %v4248
    %v4809 = vpack.c.b16 %v4257, %v4249
    %v4810 = vpack.c.b16 %v4258, %v4250
    %v4811 = vpack.c.b16 %v4267, %v4259
    %v4812 = vpack.c.b16 %v4268, %v4260
    %v4813 = vpack.c.b16 %v4269, %v4261
    %v4814 = vpack.c.b16 %v4270, %v4262
    %v4815 = vpack.c.b16 %v4271, %v4263
    %v4816 = vpack.c.b16 %v4272, %v4264
    %v4817 = vpack.c.b16 %v4273, %v4265
    %v4818 = vpack.c.b16 %v4274, %v4266
    %v4819 = vpack.c.b16 %v4283, %v4275
    %v4820 = vpack.c.b16 %v4284, %v4276
    %v4821 = vpack.c.b16 %v4285, %v4277
    %v4822 = vpack.c.b16 %v4286, %v4278
    %v4823 = vpack.c.b16 %v4287, %v4279
    %v4824 = vpack.c.b16 %v4288, %v4280
    %v4825 = vpack.c.b16 %v4289, %v4281
    %v4826 = vpack.c.b16 %v4290, %v4282
    %v4827 = vpack.c.b16 %v4299, %v4291
    %v4828 = vpack.c.b16 %v4300, %v4292
    %v4829 = vpack.c.b16 %v4301, %v4293
    %v4830 = vpack.c.b16 %v4302, %v4294
    %v4831 = vpack.c.b16 %v4303, %v4295
    %v4832 = vpack.c.b16 %v4304, %v4296
    %v4833 = vpack.c.b16 %v4305, %v4297
    %v4834 = vpack.c.b16 %v4306, %v4298
    %v4835 = vpack.c.b16 %v4315, %v4307
    %v4836 = vpack.c.b16 %v4316, %v4308
    %v4837 = vpack.c.b16 %v4317, %v4309
    %v4838 = vpack.c.b16 %v4318, %v4310
    %v4839 = vpack.c.b16 %v4319, %v4311
    %v4840 = vpack.c.b16 %v4320, %v4312
    %v4841 = vpack.c.b16 %v4321, %v4313
    %v4842 = vpack.c.b16 %v4322, %v4314
    %v4843 = vpack.c.b16 %v4331, %v4323
    %v4844 = vpack.c.b16 %v4332, %v4324
    %v4845 = vpack.c.b16 %v4333, %v4325
    %v4846 = vpack.c.b16 %v4334, %v4326
    %v4847 = vpack.c.b16 %v4335, %v4327
    %v4848 = vpack.c.b16 %v4336, %v4328
    %v4849 = vpack.c.b16 %v4337, %v4329
    %v4850 = vpack.c.b16 %v4338, %v4330
    %v4851 = vpack.c.b16 %v4347, %v4339
    %v4852 = vpack.c.b16 %v4348, %v4340
    %v4853 = vpack.c.b16 %v4349, %v4341
    %v4854 = vpack.c.b16 %v4350, %v4342
    %v4855 = vpack.c.b16 %v4351, %v4343
    %v4856 = vpack.c.b16 %v4352, %v4344
    %v4857 = vpack.c.b16 %v4353, %v4345
    %v4858 = vpack.c.b16 %v4354, %v4346
    %v4859 = vpack.c.b16 %v4363, %v4355
    %v4860 = vpack.c.b16 %v4364, %v4356
    %v4861 = vpack.c.b16 %v4365, %v4357
    %v4862 = vpack.c.b16 %v4366, %v4358
    %v4863 = vpack.c.b16 %v4367, %v4359
    %v4864 = vpack.c.b16 %v4368, %v4360
    %v4865 = vpack.c.b16 %v4369, %v4361
    %v4866 = vpack.c.b16 %v4370, %v4362
    %v4867 = vpack.c.b16 %v4379, %v4371
    %v4868 = vpack.c.b16 %v4380, %v4372
    %v4869 = vpack.c.b16 %v4381, %v4373
    %v4870 = vpack.c.b16 %v4382, %v4374
    %v4871 = vpack.c.b16 %v4383, %v4375
    %v4872 = vpack.c.b16 %v4384, %v4376
    %v4873 = vpack.c.b16 %v4385, %v4377
    %v4874 = vpack.c.b16 %v4386, %v4378
    %v4875 = vpack.c.b16 %v4395, %v4387
    %v4876 = vpack.c.b16 %v4396, %v4388
    %v4877 = vpack.c.b16 %v4397, %v4389
    %v4878 = vpack.c.b16 %v4398, %v4390
    %v4879 = vpack.c.b16 %v4399, %v4391
    %v4880 = vpack.c.b16 %v4400, %v4392
    %v4881 = vpack.c.b16 %v4401, %v4393
    %v4882 = vpack.c.b16 %v4402, %v4394
    %v4883 = vpack.c.b16 %v4411, %v4403
    %v4884 = vpack.c.b16 %v4412, %v4404
    %v4885 = vpack.c.b16 %v4413, %v4405
    %v4886 = vpack.c.b16 %v4414, %v4406
    %v4887 = vpack.c.b16 %v4415, %v4407
    %v4888 = vpack.c.b16 %v4416, %v4408
    %v4889 = vpack.c.b16 %v4417, %v4409
    %v4890 = vpack.c.b16 %v4418, %v4410
    %v4891 = vpack.c.b16 %v4427, %v4419
    %v4892 = vpack.c.b16 %v4428, %v4420
    %v4893 = vpack.c.b16 %v4429, %v4421
    %v4894 = vpack.c.b16 %v4430, %v4422
    %v4895 = vpack.c.b16 %v4431, %v4423
    %v4896 = vpack.c.b16 %v4432, %v4424
    %v4897 = vpack.c.b16 %v4433, %v4425
    %v4898 = vpack.c.b16 %v4434, %v4426
    %v4899 = vpack.c.b16 %v4443, %v4435
    %v4900 = vpack.c.b16 %v4444, %v4436
    %v4901 = vpack.c.b16 %v4445, %v4437
    %v4902 = vpack.c.b16 %v4446, %v4438
    %v4903 = vpack.c.b16 %v4447, %v4439
    %v4904 = vpack.c.b16 %v4448, %v4440
    %v4905 = vpack.c.b16 %v4449, %v4441
    %v4906 = vpack.c.b16 %v4450, %v4442
    %v4907 = vpack.c.b16 %v4459, %v4451
    %v4908 = vpack.c.b16 %v4460, %v4452
    %v4909 = vpack.c.b16 %v4461, %v4453
    %v4910 = vpack.c.b16 %v4462, %v4454
    %v4911 = vpack.c.b16 %v4463, %v4455
    %v4912 = vpack.c.b16 %v4464, %v4456
    %v4913 = vpack.c.b16 %v4465, %v4457
    %v4914 = vpack.c.b16 %v4466, %v4458
    %v4915 = vpack.c.b16 %v4475, %v4467
    %v4916 = vpack.c.b16 %v4476, %v4468
    %v4917 = vpack.c.b16 %v4477, %v4469
    %v4918 = vpack.c.b16 %v4478, %v4470
    %v4919 = vpack.c.b16 %v4479, %v4471
    %v4920 = vpack.c.b16 %v4480, %v4472
    %v4921 = vpack.c.b16 %v4481, %v4473
    %v4922 = vpack.c.b16 %v4482, %v4474
    %v4923 = vpack.c.b16 %v4491, %v4483
    %v4924 = vpack.c.b16 %v4492, %v4484
    %v4925 = vpack.c.b16 %v4493, %v4485
    %v4926 = vpack.c.b16 %v4494, %v4486
    %v4927 = vpack.c.b16 %v4495, %v4487
    %v4928 = vpack.c.b16 %v4496, %v4488
    %v4929 = vpack.c.b16 %v4497, %v4489
    %v4930 = vpack.c.b16 %v4498, %v4490
    %vm5363 = vcmask 785408
    %v5365 = vsel %vm5363, %v2728, 0
    %5367 = vmatprep.subr.bf16.mxu0 %v4556
    %5368 = vmatpush1.bf16.msra.mxu0 %v4555
    %5369 = vmatprep.subr.bf16.mxu0 %v4548
    %5370 = vmatpush1.bf16.msra.mxu0 %v4547
    %5371 = vmatprep.subr.bf16.mxu0 %v4540
    %5372 = vmatpush1.bf16.msra.mxu0 %v4539
    %5373 = vmatprep.subr.bf16.mxu0 %v4532
    %5374 = vmatpush1.bf16.msra.mxu0 %v4531
    %5375 = vmatprep.subr.bf16.mxu0 %v4524
    %5376 = vmatpush1.bf16.msra.mxu0 %v4523
    %5377 = vmatprep.subr.bf16.mxu0 %v4516
    %5378 = vmatpush1.bf16.msra.mxu0 %v4515
    %5379 = vmatprep.subr.bf16.mxu0 %v4508
    %5380 = vmatpush1.bf16.msra.mxu0 %v4507
    %5381 = vmatprep.subr.bf16.mxu0 %v4500
    %5382 = vmatpush1.bf16.msra.mxu0 %v4499
    %5383 = vmatprep.subr.bf16.mxu0 %v4620
    %5384 = vmatpush2.bf16.msra.mxu0 %v4619
    %5385 = vmatprep.subr.bf16.mxu0 %v4612
    %5386 = vmatpush2.bf16.msra.mxu0 %v4611
    %5387 = vmatprep.subr.bf16.mxu0 %v4604
    %5388 = vmatpush2.bf16.msra.mxu0 %v4603
    %5389 = vmatprep.subr.bf16.mxu0 %v4596
    %5390 = vmatpush2.bf16.msra.mxu0 %v4595
    %5391 = vmatprep.subr.bf16.mxu0 %v4588
    %5392 = vmatpush2.bf16.msra.mxu0 %v4587
    %5393 = vmatprep.subr.bf16.mxu0 %v4580
    %5394 = vmatpush2.bf16.msra.mxu0 %v4579
    %5395 = vmatprep.subr.bf16.mxu0 %v4572
    %5396 = vmatpush2.bf16.msra.mxu0 %v4571
    %5397 = vmatprep.subr.bf16.mxu0 %v4564
    %5398 = vmatpush2.bf16.msra.mxu0 %v4563
    %5399 = vmatprep.mubr.bf16.mxu0 %v2723
    %5400 = vmatmul.mubr.bf16.gmra.mxu0 %v2722
    %v5401 = vpop.f32.mrf.mxu0
    %v5402 = vadd.f32 %v3166, %v5401
    %v5403 = vpop.f32.mrf.mxu0
    %v5404 = vadd.f32 %v3170, %v5403
    %v5405 = vpop.f32.mrf.mxu0
    %v5406 = vpop.f32.mrf.mxu0
    %5407 = vdwg.mxu0
    %5408 = vmatprep.subr.bf16.mxu0 %v4684
    %5409 = vmatpush1.bf16.msra.mxu0 %v4683
    %5410 = vmatprep.subr.bf16.mxu0 %v4676
    %5411 = vmatpush1.bf16.msra.mxu0 %v4675
    %5412 = vmatprep.subr.bf16.mxu0 %v4668
    %5413 = vmatpush1.bf16.msra.mxu0 %v4667
    %5414 = vmatprep.subr.bf16.mxu0 %v4660
    %5415 = vmatpush1.bf16.msra.mxu0 %v4659
    %5416 = vmatprep.subr.bf16.mxu0 %v4652
    %5417 = vmatpush1.bf16.msra.mxu0 %v4651
    %5418 = vmatprep.subr.bf16.mxu0 %v4644
    %5419 = vmatpush1.bf16.msra.mxu0 %v4643
    %5420 = vmatprep.subr.bf16.mxu0 %v4636
    %5421 = vmatpush1.bf16.msra.mxu0 %v4635
    %5422 = vmatprep.subr.bf16.mxu0 %v4628
    %5423 = vmatpush1.bf16.msra.mxu0 %v4627
    %5424 = vmatprep.subr.bf16.mxu0 %v4748
    %5425 = vmatpush2.bf16.msra.mxu0 %v4747
    %5426 = vmatprep.subr.bf16.mxu0 %v4740
    %5427 = vmatpush2.bf16.msra.mxu0 %v4739
    %5428 = vmatprep.subr.bf16.mxu0 %v4732
    %5429 = vmatpush2.bf16.msra.mxu0 %v4731
    %5430 = vmatprep.subr.bf16.mxu0 %v4724
    %5431 = vmatpush2.bf16.msra.mxu0 %v4723
    %5432 = vmatprep.subr.bf16.mxu0 %v4716
    %5433 = vmatpush2.bf16.msra.mxu0 %v4715
    %5434 = vmatprep.subr.bf16.mxu0 %v4708
    %5435 = vmatpush2.bf16.msra.mxu0 %v4707
    %5436 = vmatprep.subr.bf16.mxu0 %v4700
    %5437 = vmatpush2.bf16.msra.mxu0 %v4699
    %5438 = vmatprep.subr.bf16.mxu0 %v4692
    %5439 = vmatpush2.bf16.msra.mxu0 %v4691
    %5440 = vmatprep.mubr.bf16.mxu0 %v2725
    %5441 = vmatmul.mubr.bf16.gmra.mxu0 %v2724
    %v5442 = vpop.f32.mrf.mxu0
    %v5443 = vadd.f32 %v5402, %v5442
    %v5444 = vpop.f32.mrf.mxu0
    %v5445 = vadd.f32 %v5404, %v5444
    %v5446 = vpop.f32.mrf.mxu0
    %v5447 = vpop.f32.mrf.mxu0
    %5448 = vdwg.mxu0
    %5449 = vmatprep.subr.bf16.mxu0 %v4812
    %5450 = vmatpush1.bf16.msra.mxu0 %v4811
    %5451 = vmatprep.subr.bf16.mxu0 %v4804
    %5452 = vmatpush1.bf16.msra.mxu0 %v4803
    %5453 = vmatprep.subr.bf16.mxu0 %v4796
    %5454 = vmatpush1.bf16.msra.mxu0 %v4795
    %5455 = vmatprep.subr.bf16.mxu0 %v4788
    %5456 = vmatpush1.bf16.msra.mxu0 %v4787
    %5457 = vmatprep.subr.bf16.mxu0 %v4780
    %5458 = vmatpush1.bf16.msra.mxu0 %v4779
    %5459 = vmatprep.subr.bf16.mxu0 %v4772
    %5460 = vmatpush1.bf16.msra.mxu0 %v4771
    %5461 = vmatprep.subr.bf16.mxu0 %v4764
    %5462 = vmatpush1.bf16.msra.mxu0 %v4763
    %5463 = vmatprep.subr.bf16.mxu0 %v4756
    %5464 = vmatpush1.bf16.msra.mxu0 %v4755
    %5465 = vmatprep.subr.bf16.mxu0 %v4876
    %5466 = vmatpush2.bf16.msra.mxu0 %v4875
    %5467 = vmatprep.subr.bf16.mxu0 %v4868
    %5468 = vmatpush2.bf16.msra.mxu0 %v4867
    %5469 = vmatprep.subr.bf16.mxu0 %v4860
    %5470 = vmatpush2.bf16.msra.mxu0 %v4859
    %5471 = vmatprep.subr.bf16.mxu0 %v4852
    %5472 = vmatpush2.bf16.msra.mxu0 %v4851
    %5473 = vmatprep.subr.bf16.mxu0 %v4844
    %5474 = vmatpush2.bf16.msra.mxu0 %v4843
    %5475 = vmatprep.subr.bf16.mxu0 %v4836
    %5476 = vmatpush2.bf16.msra.mxu0 %v4835
    %5477 = vmatprep.subr.bf16.mxu0 %v4828
    %5478 = vmatpush2.bf16.msra.mxu0 %v4827
    %5479 = vmatprep.subr.bf16.mxu0 %v4820
    %5480 = vmatpush2.bf16.msra.mxu0 %v4819
    %5481 = vmatprep.mubr.bf16.mxu0 %v2727
    %5482 = vmatmul.mubr.bf16.gmra.mxu0 %v2726
    %v5483 = vpop.f32.mrf.mxu0
    %v5484 = vadd.f32 %v5443, %v5483
    %v5485 = vpop.f32.mrf.mxu0
    %v5486 = vadd.f32 %v5445, %v5485
    %v5487 = vpop.f32.mrf.mxu0
    %v5488 = vpop.f32.mrf.mxu0
    %5489 = vdwg.mxu0
    %5490 = vmatprep.subr.bf16.mxu0 0
    %5491 = vmatpush1.bf16.msra.mxu0 0
    %5492 = vmatprep.subr.bf16.mxu0 0
    %5493 = vmatpush1.bf16.msra.mxu0 0
    %5494 = vmatprep.subr.bf16.mxu0 %v4924
    %5495 = vmatpush1.bf16.msra.mxu0 %v4923
    %5496 = vmatprep.subr.bf16.mxu0 %v4916
    %5497 = vmatpush1.bf16.msra.mxu0 %v4915
    %5498 = vmatprep.subr.bf16.mxu0 %v4908
    %5499 = vmatpush1.bf16.msra.mxu0 %v4907
    %5500 = vmatprep.subr.bf16.mxu0 %v4900
    %5501 = vmatpush1.bf16.msra.mxu0 %v4899
    %5502 = vmatprep.subr.bf16.mxu0 %v4892
    %5503 = vmatpush1.bf16.msra.mxu0 %v4891
    %5504 = vmatprep.subr.bf16.mxu0 %v4884
    %5505 = vmatpush1.bf16.msra.mxu0 %v4883
    %5506 = vmatprep.subr.bf16.mxu0 0
    %5507 = vmatpush2.bf16.msra.mxu0 0
    %5508 = vmatprep.subr.bf16.mxu0 0
    %5509 = vmatpush2.bf16.msra.mxu0 0
    %5510 = vmatprep.subr.bf16.mxu0 0
    %5511 = vmatpush2.bf16.msra.mxu0 0
    %5512 = vmatprep.subr.bf16.mxu0 0
    %5513 = vmatpush2.bf16.msra.mxu0 0
    %5514 = vmatprep.subr.bf16.mxu0 0
    %5515 = vmatpush2.bf16.msra.mxu0 0
    %5516 = vmatprep.subr.bf16.mxu0 0
    %5517 = vmatpush2.bf16.msra.mxu0 0
    %5518 = vmatprep.subr.bf16.mxu0 0
    %5519 = vmatpush2.bf16.msra.mxu0 0
    %5520 = vmatprep.subr.bf16.mxu0 0
    %5521 = vmatpush2.bf16.msra.mxu0 0
    %5522 = vmatprep.mubr.bf16.mxu0 0
    %5523 = vmatmul.mubr.bf16.gmra.mxu0 %v5365
    %v5524 = vpop.f32.mrf.mxu0
    %v5525 = vadd.f32 %v5484, %v5524
    %v5526 = vpop.f32.mrf.mxu0
    %v5527 = vadd.f32 %v5486, %v5526
    %v5528 = vpop.f32.mrf.mxu0
    %v5529 = vpop.f32.mrf.mxu0
    %5530 = vdwg.mxu0
    %5531 = vmatprep.subr.bf16.mxu0 %v4558
    %5532 = vmatpush1.bf16.msra.mxu0 %v4557
    %5533 = vmatprep.subr.bf16.mxu0 %v4550
    %5534 = vmatpush1.bf16.msra.mxu0 %v4549
    %5535 = vmatprep.subr.bf16.mxu0 %v4542
    %5536 = vmatpush1.bf16.msra.mxu0 %v4541
    %5537 = vmatprep.subr.bf16.mxu0 %v4534
    %5538 = vmatpush1.bf16.msra.mxu0 %v4533
    %5539 = vmatprep.subr.bf16.mxu0 %v4526
    %5540 = vmatpush1.bf16.msra.mxu0 %v4525
    %5541 = vmatprep.subr.bf16.mxu0 %v4518
    %5542 = vmatpush1.bf16.msra.mxu0 %v4517
    %5543 = vmatprep.subr.bf16.mxu0 %v4510
    %5544 = vmatpush1.bf16.msra.mxu0 %v4509
    %5545 = vmatprep.subr.bf16.mxu0 %v4502
    %5546 = vmatpush1.bf16.msra.mxu0 %v4501
    %5547 = vmatprep.subr.bf16.mxu0 %v4622
    %5548 = vmatpush2.bf16.msra.mxu0 %v4621
    %5549 = vmatprep.subr.bf16.mxu0 %v4614
    %5550 = vmatpush2.bf16.msra.mxu0 %v4613
    %5551 = vmatprep.subr.bf16.mxu0 %v4606
    %5552 = vmatpush2.bf16.msra.mxu0 %v4605
    %5553 = vmatprep.subr.bf16.mxu0 %v4598
    %5554 = vmatpush2.bf16.msra.mxu0 %v4597
    %5555 = vmatprep.subr.bf16.mxu0 %v4590
    %5556 = vmatpush2.bf16.msra.mxu0 %v4589
    %5557 = vmatprep.subr.bf16.mxu0 %v4582
    %5558 = vmatpush2.bf16.msra.mxu0 %v4581
    %5559 = vmatprep.subr.bf16.mxu0 %v4574
    %5560 = vmatpush2.bf16.msra.mxu0 %v4573
    %5561 = vmatprep.subr.bf16.mxu0 %v4566
    %5562 = vmatpush2.bf16.msra.mxu0 %v4565
    %5563 = vmatprep.mubr.bf16.mxu0 %v2723
    %5564 = vmatmul.mubr.bf16.gmra.mxu0 %v2722
    %v5565 = vpop.f32.mrf.mxu0
    %v5566 = vadd.f32 %v3174, %v5565
    %v5567 = vpop.f32.mrf.mxu0
    %v5568 = vadd.f32 %v3178, %v5567
    %v5569 = vpop.f32.mrf.mxu0
    %v5570 = vpop.f32.mrf.mxu0
    %5571 = vdwg.mxu0
    %5572 = vmatprep.subr.bf16.mxu0 %v4686
    %5573 = vmatpush1.bf16.msra.mxu0 %v4685
    %5574 = vmatprep.subr.bf16.mxu0 %v4678
    %5575 = vmatpush1.bf16.msra.mxu0 %v4677
    %5576 = vmatprep.subr.bf16.mxu0 %v4670
    %5577 = vmatpush1.bf16.msra.mxu0 %v4669
    %5578 = vmatprep.subr.bf16.mxu0 %v4662
    %5579 = vmatpush1.bf16.msra.mxu0 %v4661
    %5580 = vmatprep.subr.bf16.mxu0 %v4654
    %5581 = vmatpush1.bf16.msra.mxu0 %v4653
    %5582 = vmatprep.subr.bf16.mxu0 %v4646
    %5583 = vmatpush1.bf16.msra.mxu0 %v4645
    %5584 = vmatprep.subr.bf16.mxu0 %v4638
    %5585 = vmatpush1.bf16.msra.mxu0 %v4637
    %5586 = vmatprep.subr.bf16.mxu0 %v4630
    %5587 = vmatpush1.bf16.msra.mxu0 %v4629
    %5588 = vmatprep.subr.bf16.mxu0 %v4750
    %5589 = vmatpush2.bf16.msra.mxu0 %v4749
    %5590 = vmatprep.subr.bf16.mxu0 %v4742
    %5591 = vmatpush2.bf16.msra.mxu0 %v4741
    %5592 = vmatprep.subr.bf16.mxu0 %v4734
    %5593 = vmatpush2.bf16.msra.mxu0 %v4733
    %5594 = vmatprep.subr.bf16.mxu0 %v4726
    %5595 = vmatpush2.bf16.msra.mxu0 %v4725
    %5596 = vmatprep.subr.bf16.mxu0 %v4718
    %5597 = vmatpush2.bf16.msra.mxu0 %v4717
    %5598 = vmatprep.subr.bf16.mxu0 %v4710
    %5599 = vmatpush2.bf16.msra.mxu0 %v4709
    %5600 = vmatprep.subr.bf16.mxu0 %v4702
    %5601 = vmatpush2.bf16.msra.mxu0 %v4701
    %5602 = vmatprep.subr.bf16.mxu0 %v4694
    %5603 = vmatpush2.bf16.msra.mxu0 %v4693
    %5604 = vmatprep.mubr.bf16.mxu0 %v2725
    %5605 = vmatmul.mubr.bf16.gmra.mxu0 %v2724
    %v5606 = vpop.f32.mrf.mxu0
    %v5607 = vadd.f32 %v5566, %v5606
    %v5608 = vpop.f32.mrf.mxu0
    %v5609 = vadd.f32 %v5568, %v5608
    %v5610 = vpop.f32.mrf.mxu0
    %v5611 = vpop.f32.mrf.mxu0
    %5612 = vdwg.mxu0
    %5613 = vmatprep.subr.bf16.mxu0 %v4814
    %5614 = vmatpush1.bf16.msra.mxu0 %v4813
    %5615 = vmatprep.subr.bf16.mxu0 %v4806
    %5616 = vmatpush1.bf16.msra.mxu0 %v4805
    %5617 = vmatprep.subr.bf16.mxu0 %v4798
    %5618 = vmatpush1.bf16.msra.mxu0 %v4797
    %5619 = vmatprep.subr.bf16.mxu0 %v4790
    %5620 = vmatpush1.bf16.msra.mxu0 %v4789
    %5621 = vmatprep.subr.bf16.mxu0 %v4782
    %5622 = vmatpush1.bf16.msra.mxu0 %v4781
    %5623 = vmatprep.subr.bf16.mxu0 %v4774
    %5624 = vmatpush1.bf16.msra.mxu0 %v4773
    %5625 = vmatprep.subr.bf16.mxu0 %v4766
    %5626 = vmatpush1.bf16.msra.mxu0 %v4765
    %5627 = vmatprep.subr.bf16.mxu0 %v4758
    %5628 = vmatpush1.bf16.msra.mxu0 %v4757
    %5629 = vmatprep.subr.bf16.mxu0 %v4878
    %5630 = vmatpush2.bf16.msra.mxu0 %v4877
    %5631 = vmatprep.subr.bf16.mxu0 %v4870
    %5632 = vmatpush2.bf16.msra.mxu0 %v4869
    %5633 = vmatprep.subr.bf16.mxu0 %v4862
    %5634 = vmatpush2.bf16.msra.mxu0 %v4861
    %5635 = vmatprep.subr.bf16.mxu0 %v4854
    %5636 = vmatpush2.bf16.msra.mxu0 %v4853
    %5637 = vmatprep.subr.bf16.mxu0 %v4846
    %5638 = vmatpush2.bf16.msra.mxu0 %v4845
    %5639 = vmatprep.subr.bf16.mxu0 %v4838
    %5640 = vmatpush2.bf16.msra.mxu0 %v4837
    %5641 = vmatprep.subr.bf16.mxu0 %v4830
    %5642 = vmatpush2.bf16.msra.mxu0 %v4829
    %5643 = vmatprep.subr.bf16.mxu0 %v4822
    %5644 = vmatpush2.bf16.msra.mxu0 %v4821
    %5645 = vmatprep.mubr.bf16.mxu0 %v2727
    %5646 = vmatmul.mubr.bf16.gmra.mxu0 %v2726
    %v5647 = vpop.f32.mrf.mxu0
    %v5648 = vadd.f32 %v5607, %v5647
    %v5649 = vpop.f32.mrf.mxu0
    %v5650 = vadd.f32 %v5609, %v5649
    %v5651 = vpop.f32.mrf.mxu0
    %v5652 = vpop.f32.mrf.mxu0
    %5653 = vdwg.mxu0
    %5654 = vmatprep.subr.bf16.mxu0 0
    %5655 = vmatpush1.bf16.msra.mxu0 0
    %5656 = vmatprep.subr.bf16.mxu0 0
    %5657 = vmatpush1.bf16.msra.mxu0 0
    %5658 = vmatprep.subr.bf16.mxu0 %v4926
    %5659 = vmatpush1.bf16.msra.mxu0 %v4925
    %5660 = vmatprep.subr.bf16.mxu0 %v4918
    %5661 = vmatpush1.bf16.msra.mxu0 %v4917
    %5662 = vmatprep.subr.bf16.mxu0 %v4910
    %5663 = vmatpush1.bf16.msra.mxu0 %v4909
    %5664 = vmatprep.subr.bf16.mxu0 %v4902
    %5665 = vmatpush1.bf16.msra.mxu0 %v4901
    %5666 = vmatprep.subr.bf16.mxu0 %v4894
    %5667 = vmatpush1.bf16.msra.mxu0 %v4893
    %5668 = vmatprep.subr.bf16.mxu0 %v4886
    %5669 = vmatpush1.bf16.msra.mxu0 %v4885
    %5670 = vmatprep.subr.bf16.mxu0 0
    %5671 = vmatpush2.bf16.msra.mxu0 0
    %5672 = vmatprep.subr.bf16.mxu0 0
    %5673 = vmatpush2.bf16.msra.mxu0 0
    %5674 = vmatprep.subr.bf16.mxu0 0
    %5675 = vmatpush2.bf16.msra.mxu0 0
    %5676 = vmatprep.subr.bf16.mxu0 0
    %5677 = vmatpush2.bf16.msra.mxu0 0
    %5678 = vmatprep.subr.bf16.mxu0 0
    %5679 = vmatpush2.bf16.msra.mxu0 0
    %5680 = vmatprep.subr.bf16.mxu0 0
    %5681 = vmatpush2.bf16.msra.mxu0 0
    %5682 = vmatprep.subr.bf16.mxu0 0
    %5683 = vmatpush2.bf16.msra.mxu0 0
    %5684 = vmatprep.subr.bf16.mxu0 0
    %5685 = vmatpush2.bf16.msra.mxu0 0
    %5686 = vmatprep.mubr.bf16.mxu0 0
    %5687 = vmatmul.mubr.bf16.gmra.mxu0 %v5365
    %v5688 = vpop.f32.mrf.mxu0
    %v5689 = vadd.f32 %v5648, %v5688
    %v5690 = vpop.f32.mrf.mxu0
    %v5691 = vadd.f32 %v5650, %v5690
    %v5692 = vpop.f32.mrf.mxu0
    %v5693 = vpop.f32.mrf.mxu0
    %5694 = vdwg.mxu0
    %5695 = vmatprep.subr.bf16.mxu0 %v4560
    %5696 = vmatpush1.bf16.msra.mxu0 %v4559
    %5697 = vmatprep.subr.bf16.mxu0 %v4552
    %5698 = vmatpush1.bf16.msra.mxu0 %v4551
    %5699 = vmatprep.subr.bf16.mxu0 %v4544
    %5700 = vmatpush1.bf16.msra.mxu0 %v4543
    %5701 = vmatprep.subr.bf16.mxu0 %v4536
    %5702 = vmatpush1.bf16.msra.mxu0 %v4535
    %5703 = vmatprep.subr.bf16.mxu0 %v4528
    %5704 = vmatpush1.bf16.msra.mxu0 %v4527
    %5705 = vmatprep.subr.bf16.mxu0 %v4520
    %5706 = vmatpush1.bf16.msra.mxu0 %v4519
    %5707 = vmatprep.subr.bf16.mxu0 %v4512
    %5708 = vmatpush1.bf16.msra.mxu0 %v4511
    %5709 = vmatprep.subr.bf16.mxu0 %v4504
    %5710 = vmatpush1.bf16.msra.mxu0 %v4503
    %5711 = vmatprep.subr.bf16.mxu0 %v4624
    %5712 = vmatpush2.bf16.msra.mxu0 %v4623
    %5713 = vmatprep.subr.bf16.mxu0 %v4616
    %5714 = vmatpush2.bf16.msra.mxu0 %v4615
    %5715 = vmatprep.subr.bf16.mxu0 %v4608
    %5716 = vmatpush2.bf16.msra.mxu0 %v4607
    %5717 = vmatprep.subr.bf16.mxu0 %v4600
    %5718 = vmatpush2.bf16.msra.mxu0 %v4599
    %5719 = vmatprep.subr.bf16.mxu0 %v4592
    %5720 = vmatpush2.bf16.msra.mxu0 %v4591
    %5721 = vmatprep.subr.bf16.mxu0 %v4584
    %5722 = vmatpush2.bf16.msra.mxu0 %v4583
    %5723 = vmatprep.subr.bf16.mxu0 %v4576
    %5724 = vmatpush2.bf16.msra.mxu0 %v4575
    %5725 = vmatprep.subr.bf16.mxu0 %v4568
    %5726 = vmatpush2.bf16.msra.mxu0 %v4567
    %5727 = vmatprep.mubr.bf16.mxu0 %v2723
    %5728 = vmatmul.mubr.bf16.gmra.mxu0 %v2722
    %v5729 = vpop.f32.mrf.mxu0
    %v5730 = vadd.f32 %v3182, %v5729
    %v5731 = vpop.f32.mrf.mxu0
    %v5732 = vadd.f32 %v3186, %v5731
    %v5733 = vpop.f32.mrf.mxu0
    %v5734 = vpop.f32.mrf.mxu0
    %5735 = vdwg.mxu0
    %5736 = vmatprep.subr.bf16.mxu0 %v4688
    %5737 = vmatpush1.bf16.msra.mxu0 %v4687
    %5738 = vmatprep.subr.bf16.mxu0 %v4680
    %5739 = vmatpush1.bf16.msra.mxu0 %v4679
    %5740 = vmatprep.subr.bf16.mxu0 %v4672
    %5741 = vmatpush1.bf16.msra.mxu0 %v4671
    %5742 = vmatprep.subr.bf16.mxu0 %v4664
    %5743 = vmatpush1.bf16.msra.mxu0 %v4663
    %5744 = vmatprep.subr.bf16.mxu0 %v4656
    %5745 = vmatpush1.bf16.msra.mxu0 %v4655
    %5746 = vmatprep.subr.bf16.mxu0 %v4648
    %5747 = vmatpush1.bf16.msra.mxu0 %v4647
    %5748 = vmatprep.subr.bf16.mxu0 %v4640
    %5749 = vmatpush1.bf16.msra.mxu0 %v4639
    %5750 = vmatprep.subr.bf16.mxu0 %v4632
    %5751 = vmatpush1.bf16.msra.mxu0 %v4631
    %5752 = vmatprep.subr.bf16.mxu0 %v4752
    %5753 = vmatpush2.bf16.msra.mxu0 %v4751
    %5754 = vmatprep.subr.bf16.mxu0 %v4744
    %5755 = vmatpush2.bf16.msra.mxu0 %v4743
    %5756 = vmatprep.subr.bf16.mxu0 %v4736
    %5757 = vmatpush2.bf16.msra.mxu0 %v4735
    %5758 = vmatprep.subr.bf16.mxu0 %v4728
    %5759 = vmatpush2.bf16.msra.mxu0 %v4727
    %5760 = vmatprep.subr.bf16.mxu0 %v4720
    %5761 = vmatpush2.bf16.msra.mxu0 %v4719
    %5762 = vmatprep.subr.bf16.mxu0 %v4712
    %5763 = vmatpush2.bf16.msra.mxu0 %v4711
    %5764 = vmatprep.subr.bf16.mxu0 %v4704
    %5765 = vmatpush2.bf16.msra.mxu0 %v4703
    %5766 = vmatprep.subr.bf16.mxu0 %v4696
    %5767 = vmatpush2.bf16.msra.mxu0 %v4695
    %5768 = vmatprep.mubr.bf16.mxu0 %v2725
    %5769 = vmatmul.mubr.bf16.gmra.mxu0 %v2724
    %v5770 = vpop.f32.mrf.mxu0
    %v5771 = vadd.f32 %v5730, %v5770
    %v5772 = vpop.f32.mrf.mxu0
    %v5773 = vadd.f32 %v5732, %v5772
    %v5774 = vpop.f32.mrf.mxu0
    %v5775 = vpop.f32.mrf.mxu0
    %5776 = vdwg.mxu0
    %5777 = vmatprep.subr.bf16.mxu0 %v4816
    %5778 = vmatpush1.bf16.msra.mxu0 %v4815
    %5779 = vmatprep.subr.bf16.mxu0 %v4808
    %5780 = vmatpush1.bf16.msra.mxu0 %v4807
    %5781 = vmatprep.subr.bf16.mxu0 %v4800
    %5782 = vmatpush1.bf16.msra.mxu0 %v4799
    %5783 = vmatprep.subr.bf16.mxu0 %v4792
    %5784 = vmatpush1.bf16.msra.mxu0 %v4791
    %5785 = vmatprep.subr.bf16.mxu0 %v4784
    %5786 = vmatpush1.bf16.msra.mxu0 %v4783
    %5787 = vmatprep.subr.bf16.mxu0 %v4776
    %5788 = vmatpush1.bf16.msra.mxu0 %v4775
    %5789 = vmatprep.subr.bf16.mxu0 %v4768
    %5790 = vmatpush1.bf16.msra.mxu0 %v4767
    %5791 = vmatprep.subr.bf16.mxu0 %v4760
    %5792 = vmatpush1.bf16.msra.mxu0 %v4759
    %5793 = vmatprep.subr.bf16.mxu0 %v4880
    %5794 = vmatpush2.bf16.msra.mxu0 %v4879
    %5795 = vmatprep.subr.bf16.mxu0 %v4872
    %5796 = vmatpush2.bf16.msra.mxu0 %v4871
    %5797 = vmatprep.subr.bf16.mxu0 %v4864
    %5798 = vmatpush2.bf16.msra.mxu0 %v4863
    %5799 = vmatprep.subr.bf16.mxu0 %v4856
    %5800 = vmatpush2.bf16.msra.mxu0 %v4855
    %5801 = vmatprep.subr.bf16.mxu0 %v4848
    %5802 = vmatpush2.bf16.msra.mxu0 %v4847
    %5803 = vmatprep.subr.bf16.mxu0 %v4840
    %5804 = vmatpush2.bf16.msra.mxu0 %v4839
    %5805 = vmatprep.subr.bf16.mxu0 %v4832
    %5806 = vmatpush2.bf16.msra.mxu0 %v4831
    %5807 = vmatprep.subr.bf16.mxu0 %v4824
    %5808 = vmatpush2.bf16.msra.mxu0 %v4823
    %5809 = vmatprep.mubr.bf16.mxu0 %v2727
    %5810 = vmatmul.mubr.bf16.gmra.mxu0 %v2726
    %v5811 = vpop.f32.mrf.mxu0
    %v5812 = vadd.f32 %v5771, %v5811
    %v5813 = vpop.f32.mrf.mxu0
    %v5814 = vadd.f32 %v5773, %v5813
    %v5815 = vpop.f32.mrf.mxu0
    %v5816 = vpop.f32.mrf.mxu0
    %5817 = vdwg.mxu0
    %5818 = vmatprep.subr.bf16.mxu0 0
    %5819 = vmatpush1.bf16.msra.mxu0 0
    %5820 = vmatprep.subr.bf16.mxu0 0
    %5821 = vmatpush1.bf16.msra.mxu0 0
    %5822 = vmatprep.subr.bf16.mxu0 %v4928
    %5823 = vmatpush1.bf16.msra.mxu0 %v4927
    %5824 = vmatprep.subr.bf16.mxu0 %v4920
    %5825 = vmatpush1.bf16.msra.mxu0 %v4919
    %5826 = vmatprep.subr.bf16.mxu0 %v4912
    %5827 = vmatpush1.bf16.msra.mxu0 %v4911
    %5828 = vmatprep.subr.bf16.mxu0 %v4904
    %5829 = vmatpush1.bf16.msra.mxu0 %v4903
    %5830 = vmatprep.subr.bf16.mxu0 %v4896
    %5831 = vmatpush1.bf16.msra.mxu0 %v4895
    %5832 = vmatprep.subr.bf16.mxu0 %v4888
    %5833 = vmatpush1.bf16.msra.mxu0 %v4887
    %5834 = vmatprep.subr.bf16.mxu0 0
    %5835 = vmatpush2.bf16.msra.mxu0 0
    %5836 = vmatprep.subr.bf16.mxu0 0
    %5837 = vmatpush2.bf16.msra.mxu0 0
    %5838 = vmatprep.subr.bf16.mxu0 0
    %5839 = vmatpush2.bf16.msra.mxu0 0
    %5840 = vmatprep.subr.bf16.mxu0 0
    %5841 = vmatpush2.bf16.msra.mxu0 0
    %5842 = vmatprep.subr.bf16.mxu0 0
    %5843 = vmatpush2.bf16.msra.mxu0 0
    %5844 = vmatprep.subr.bf16.mxu0 0
    %5845 = vmatpush2.bf16.msra.mxu0 0
    %5846 = vmatprep.subr.bf16.mxu0 0
    %5847 = vmatpush2.bf16.msra.mxu0 0
    %5848 = vmatprep.subr.bf16.mxu0 0
    %5849 = vmatpush2.bf16.msra.mxu0 0
    %5850 = vmatprep.mubr.bf16.mxu0 0
    %5851 = vmatmul.mubr.bf16.gmra.mxu0 %v5365
    %v5852 = vpop.f32.mrf.mxu0
    %v5853 = vadd.f32 %v5812, %v5852
    %v5854 = vpop.f32.mrf.mxu0
    %v5855 = vadd.f32 %v5814, %v5854
    %v5856 = vpop.f32.mrf.mxu0
    %v5857 = vpop.f32.mrf.mxu0
    %5858 = vdwg.mxu0
    %5859 = vmatprep.subr.bf16.mxu0 %v4562
    %5860 = vmatpush1.bf16.msra.mxu0 %v4561
    %5861 = vmatprep.subr.bf16.mxu0 %v4554
    %5862 = vmatpush1.bf16.msra.mxu0 %v4553
    %5863 = vmatprep.subr.bf16.mxu0 %v4546
    %5864 = vmatpush1.bf16.msra.mxu0 %v4545
    %5865 = vmatprep.subr.bf16.mxu0 %v4538
    %5866 = vmatpush1.bf16.msra.mxu0 %v4537
    %5867 = vmatprep.subr.bf16.mxu0 %v4530
    %5868 = vmatpush1.bf16.msra.mxu0 %v4529
    %5869 = vmatprep.subr.bf16.mxu0 %v4522
    %5870 = vmatpush1.bf16.msra.mxu0 %v4521
    %5871 = vmatprep.subr.bf16.mxu0 %v4514
    %5872 = vmatpush1.bf16.msra.mxu0 %v4513
    %5873 = vmatprep.subr.bf16.mxu0 %v4506
    %5874 = vmatpush1.bf16.msra.mxu0 %v4505
    %5875 = vmatprep.subr.bf16.mxu0 %v4626
    %5876 = vmatpush2.bf16.msra.mxu0 %v4625
    %5877 = vmatprep.subr.bf16.mxu0 %v4618
    %5878 = vmatpush2.bf16.msra.mxu0 %v4617
    %5879 = vmatprep.subr.bf16.mxu0 %v4610
    %5880 = vmatpush2.bf16.msra.mxu0 %v4609
    %5881 = vmatprep.subr.bf16.mxu0 %v4602
    %5882 = vmatpush2.bf16.msra.mxu0 %v4601
    %5883 = vmatprep.subr.bf16.mxu0 %v4594
    %5884 = vmatpush2.bf16.msra.mxu0 %v4593
    %5885 = vmatprep.subr.bf16.mxu0 %v4586
    %5886 = vmatpush2.bf16.msra.mxu0 %v4585
    %5887 = vmatprep.subr.bf16.mxu0 %v4578
    %5888 = vmatpush2.bf16.msra.mxu0 %v4577
    %5889 = vmatprep.subr.bf16.mxu0 %v4570
    %5890 = vmatpush2.bf16.msra.mxu0 %v4569
    %5891 = vmatprep.mubr.bf16.mxu0 %v2723
    %5892 = vmatmul.mubr.bf16.gmra.mxu0 %v2722
    %v5893 = vpop.f32.mrf.mxu0
    %v5894 = vadd.f32 %v3190, %v5893
    %v5895 = vpop.f32.mrf.mxu0
    %v5896 = vadd.f32 %v3194, %v5895
    %v5897 = vpop.f32.mrf.mxu0
    %v5898 = vpop.f32.mrf.mxu0
    %5899 = vdwg.mxu0
    %5900 = vmatprep.subr.bf16.mxu0 %v4690
    %5901 = vmatpush1.bf16.msra.mxu0 %v4689
    %5902 = vmatprep.subr.bf16.mxu0 %v4682
    %5903 = vmatpush1.bf16.msra.mxu0 %v4681
    %5904 = vmatprep.subr.bf16.mxu0 %v4674
    %5905 = vmatpush1.bf16.msra.mxu0 %v4673
    %5906 = vmatprep.subr.bf16.mxu0 %v4666
    %5907 = vmatpush1.bf16.msra.mxu0 %v4665
    %5908 = vmatprep.subr.bf16.mxu0 %v4658
    %5909 = vmatpush1.bf16.msra.mxu0 %v4657
    %5910 = vmatprep.subr.bf16.mxu0 %v4650
    %5911 = vmatpush1.bf16.msra.mxu0 %v4649
    %5912 = vmatprep.subr.bf16.mxu0 %v4642
    %5913 = vmatpush1.bf16.msra.mxu0 %v4641
    %5914 = vmatprep.subr.bf16.mxu0 %v4634
    %5915 = vmatpush1.bf16.msra.mxu0 %v4633
    %5916 = vmatprep.subr.bf16.mxu0 %v4754
    %5917 = vmatpush2.bf16.msra.mxu0 %v4753
    %5918 = vmatprep.subr.bf16.mxu0 %v4746
    %5919 = vmatpush2.bf16.msra.mxu0 %v4745
    %5920 = vmatprep.subr.bf16.mxu0 %v4738
    %5921 = vmatpush2.bf16.msra.mxu0 %v4737
    %5922 = vmatprep.subr.bf16.mxu0 %v4730
    %5923 = vmatpush2.bf16.msra.mxu0 %v4729
    %5924 = vmatprep.subr.bf16.mxu0 %v4722
    %5925 = vmatpush2.bf16.msra.mxu0 %v4721
    %5926 = vmatprep.subr.bf16.mxu0 %v4714
    %5927 = vmatpush2.bf16.msra.mxu0 %v4713
    %5928 = vmatprep.subr.bf16.mxu0 %v4706
    %5929 = vmatpush2.bf16.msra.mxu0 %v4705
    %5930 = vmatprep.subr.bf16.mxu0 %v4698
    %5931 = vmatpush2.bf16.msra.mxu0 %v4697
    %5932 = vmatprep.mubr.bf16.mxu0 %v2725
    %5933 = vmatmul.mubr.bf16.gmra.mxu0 %v2724
    %v5934 = vpop.f32.mrf.mxu0
    %v5935 = vadd.f32 %v5894, %v5934
    %v5936 = vpop.f32.mrf.mxu0
    %v5937 = vadd.f32 %v5896, %v5936
    %v5938 = vpop.f32.mrf.mxu0
    %v5939 = vpop.f32.mrf.mxu0
    %5940 = vdwg.mxu0
    %5941 = vmatprep.subr.bf16.mxu0 %v4818
    %5942 = vmatpush1.bf16.msra.mxu0 %v4817
    %5943 = vmatprep.subr.bf16.mxu0 %v4810
    %5944 = vmatpush1.bf16.msra.mxu0 %v4809
    %5945 = vmatprep.subr.bf16.mxu0 %v4802
    %5946 = vmatpush1.bf16.msra.mxu0 %v4801
    %5947 = vmatprep.subr.bf16.mxu0 %v4794
    %5948 = vmatpush1.bf16.msra.mxu0 %v4793
    %5949 = vmatprep.subr.bf16.mxu0 %v4786
    %5950 = vmatpush1.bf16.msra.mxu0 %v4785
    %5951 = vmatprep.subr.bf16.mxu0 %v4778
    %5952 = vmatpush1.bf16.msra.mxu0 %v4777
    %5953 = vmatprep.subr.bf16.mxu0 %v4770
    %5954 = vmatpush1.bf16.msra.mxu0 %v4769
    %5955 = vmatprep.subr.bf16.mxu0 %v4762
    %5956 = vmatpush1.bf16.msra.mxu0 %v4761
    %5957 = vmatprep.subr.bf16.mxu0 %v4882
    %5958 = vmatpush2.bf16.msra.mxu0 %v4881
    %5959 = vmatprep.subr.bf16.mxu0 %v4874
    %5960 = vmatpush2.bf16.msra.mxu0 %v4873
    %5961 = vmatprep.subr.bf16.mxu0 %v4866
    %5962 = vmatpush2.bf16.msra.mxu0 %v4865
    %5963 = vmatprep.subr.bf16.mxu0 %v4858
    %5964 = vmatpush2.bf16.msra.mxu0 %v4857
    %5965 = vmatprep.subr.bf16.mxu0 %v4850
    %5966 = vmatpush2.bf16.msra.mxu0 %v4849
    %5967 = vmatprep.subr.bf16.mxu0 %v4842
    %5968 = vmatpush2.bf16.msra.mxu0 %v4841
    %5969 = vmatprep.subr.bf16.mxu0 %v4834
    %5970 = vmatpush2.bf16.msra.mxu0 %v4833
    %5971 = vmatprep.subr.bf16.mxu0 %v4826
    %5972 = vmatpush2.bf16.msra.mxu0 %v4825
    %5973 = vmatprep.mubr.bf16.mxu0 %v2727
    %5974 = vmatmul.mubr.bf16.gmra.mxu0 %v2726
    %v5975 = vpop.f32.mrf.mxu0
    %v5976 = vadd.f32 %v5935, %v5975
    %v5977 = vpop.f32.mrf.mxu0
    %v5978 = vadd.f32 %v5937, %v5977
    %v5979 = vpop.f32.mrf.mxu0
    %v5980 = vpop.f32.mrf.mxu0
    %5981 = vdwg.mxu0
    %5982 = vmatprep.subr.bf16.mxu0 0
    %5983 = vmatpush1.bf16.msra.mxu0 0
    %5984 = vmatprep.subr.bf16.mxu0 0
    %5985 = vmatpush1.bf16.msra.mxu0 0
    %5986 = vmatprep.subr.bf16.mxu0 %v4930
    %5987 = vmatpush1.bf16.msra.mxu0 %v4929
    %5988 = vmatprep.subr.bf16.mxu0 %v4922
    %5989 = vmatpush1.bf16.msra.mxu0 %v4921
    %5990 = vmatprep.subr.bf16.mxu0 %v4914
    %5991 = vmatpush1.bf16.msra.mxu0 %v4913
    %5992 = vmatprep.subr.bf16.mxu0 %v4906
    %5993 = vmatpush1.bf16.msra.mxu0 %v4905
    %5994 = vmatprep.subr.bf16.mxu0 %v4898
    %5995 = vmatpush1.bf16.msra.mxu0 %v4897
    %5996 = vmatprep.subr.bf16.mxu0 %v4890
    %5997 = vmatpush1.bf16.msra.mxu0 %v4889
    %5998 = vmatprep.subr.bf16.mxu0 0
    %5999 = vmatpush2.bf16.msra.mxu0 0
    %6000 = vmatprep.subr.bf16.mxu0 0
    %6001 = vmatpush2.bf16.msra.mxu0 0
    %6002 = vmatprep.subr.bf16.mxu0 0
    %6003 = vmatpush2.bf16.msra.mxu0 0
    %6004 = vmatprep.subr.bf16.mxu0 0
    %6005 = vmatpush2.bf16.msra.mxu0 0
    %6006 = vmatprep.subr.bf16.mxu0 0
    %6007 = vmatpush2.bf16.msra.mxu0 0
    %6008 = vmatprep.subr.bf16.mxu0 0
    %6009 = vmatpush2.bf16.msra.mxu0 0
    %6010 = vmatprep.subr.bf16.mxu0 0
    %6011 = vmatpush2.bf16.msra.mxu0 0
    %6012 = vmatprep.subr.bf16.mxu0 0
    %6013 = vmatpush2.bf16.msra.mxu0 0
    %6014 = vmatprep.mubr.bf16.mxu0 0
    %6015 = vmatmul.mubr.bf16.gmra.mxu0 %v5365
    %v6016 = vpop.f32.mrf.mxu0
    %v6017 = vadd.f32 %v5976, %v6016
    %v6018 = vpop.f32.mrf.mxu0
    %v6019 = vadd.f32 %v5978, %v6018
    %v6020 = vpop.f32.mrf.mxu0
    %v6021 = vpop.f32.mrf.mxu0
    %6022 = vdwg.mxu0
    %v6023 = vmax.f32 %v5525, 0.0
    %v6024 = vmax.f32 %v5527, 0.0
    %v6025 = vmax.f32 %v5689, 0.0
    %v6026 = vmax.f32 %v5691, 0.0
    %v6027 = vmax.f32 %v5853, 0.0
    %v6028 = vmax.f32 %v5855, 0.0
    %v6029 = vmax.f32 %v6017, 0.0
    %v6030 = vmax.f32 %v6019, 0.0
    %v6031 = vpack.c.bf16 %v6023, %v6023
    %v6032 = vpack.c.bf16 %v6024, %v6024
    %v6033 = vpack.c.bf16 %v6025, %v6025
    %v6034 = vpack.c.bf16 %v6026, %v6026
    %v6035 = vpack.c.bf16 %v6027, %v6027
    %v6036 = vpack.c.bf16 %v6028, %v6028
    %v6037 = vpack.c.bf16 %v6029, %v6029
    %v6038 = vpack.c.bf16 %v6030, %v6030
    %v6047 = vcombine.low %v6031, %v6032
    %v6048 = vcombine.low %v6033, %v6034
    %v6049 = vcombine.low %v6035, %v6036
    %v6050 = vcombine.low %v6037, %v6038
    %v6052 = vunpack.c.l.s4 1966171168
    %v6053 = vunpack.c.0.s8 %v6052
    %v6054 = vlaneseq
    %v6055 = vshrl.u32 %v6054, 7
    %v6056 = vsub.s32 %v6053, %v6055
    %v6057 = vrot.slane %v6047, %v6056
    %v6059 = vunpack.c.l.s4 1966171168
    %v6060 = vunpack.c.0.s8 %v6059
    %v6061 = vlaneseq
    %v6062 = vshrl.u32 %v6061, 7
    %v6063 = vsub.s32 %v6060, %v6062
    %v6064 = vrot.slane %v6048, %v6063
    %v6066 = vunpack.c.l.s4 1966171168
    %v6067 = vunpack.c.0.s8 %v6066
    %v6068 = vlaneseq
    %v6069 = vshrl.u32 %v6068, 7
    %v6070 = vsub.s32 %v6067, %v6069
    %v6071 = vrot.slane %v6049, %v6070
    %v6073 = vunpack.c.l.s4 1966171168
    %v6074 = vunpack.c.0.s8 %v6073
    %v6075 = vlaneseq
    %v6076 = vshrl.u32 %v6075, 7
    %v6077 = vsub.s32 %v6074, %v6076
    %v6078 = vrot.slane %v6050, %v6077
    %v6079 = vcombine.low %v6057, %v6064
    %v6080 = vcombine.low %v6071, %v6078
    %v6082 = vunpack.c.l.s4 1966171168
    %v6083 = vunpack.c.0.s8 %v6082
    %v6084 = vlaneseq
    %v6085 = vshrl.u32 %v6084, 7
    %v6086 = vsub.s32 %v6083, %v6085
    %v6087 = vrot.slane %v6079, %v6086
    %v6089 = vunpack.c.l.s4 1966171168
    %v6090 = vunpack.c.0.s8 %v6089
    %v6091 = vlaneseq
    %v6092 = vshrl.u32 %v6091, 7
    %v6093 = vsub.s32 %v6090, %v6092
    %v6094 = vrot.slane %v6080, %v6093
    %v6095 = vcombine.low %v6087, %v6094
    %6097 = vst [vmem:[#allocation2] sm:$0xff] %v6095
    // Predicated region
    $region22: #{tpu_custom_call.1} parent=1 // pred_check
      _
    $region23: #{tpu_custom_call.1} parent=1 // pred_check_branch
      %6099 = sbr.rel (0) target = $region25
    $region24: #{tpu_custom_call.1} parent=1 // pred_region
      %s6101 = ssub.s32 128, 128
      %6102 = vsyncadd [#allocation3], %s6101
      %s6104 = sshll.u32 [#allocation2], 4
      %s6105 = int_to_ptr.vmem [resolvable:$true] %s6104
      %6107 = dma.vmem_to_hbm [thread:$0]  %s6105, 128, %s5, [#allocation3]
    $region25: #{tpu_custom_call.1} parent=1 // pred_fallthru
      _
    // Predicated region
    $region26: #{tpu_custom_call.1} parent=1 // pred_check
      _
    $region27: #{tpu_custom_call.1} parent=1 // pred_check_branch
      %6109 = sbr.rel (0) target = $region29
    $region28: #{tpu_custom_call.1} parent=1 // pred_region
      %6110 = dma.done [#allocation3], 128
    $region29: #{tpu_custom_call.1} parent=1 // pred_fallthru
      _
    %6111 = vsyncpa [#allocation3], 1

</llo_original>
